<compile_context>
chip_gen: v7x
topology: tpu7x:2x2x1
jax: 0.10.0
libtpu: 0.0.40
codegen_flags: <defaults>
</compile_context>

<pallas_src>
import numpy as np

import jax
import jax.numpy as jnp
from jax import lax
from jax.experimental import pallas as pl
from jax.experimental.pallas import tpu as pltpu


# ---------------------------------------------------------------------------
# Structural (weight independent) constant matrices, built once with numpy.
# ---------------------------------------------------------------------------
def _structural_constants():
    # A: average-pool-by-4 along one length-256 axis -> length 64.
    A = np.zeros((256, 64), np.float32)
    A[np.arange(256), np.arange(256) // 4] = 0.25

    # S1: conv1 gather along one pooled axis (64 -> 32, k=3, s=2, p=1).
    # Output columns are phase-major: col = k*32 + (ph*8 + i) with ho = 4*i+ph,
    # so the following MaxPool(4,4) reduces contiguous blocks.
    S1 = np.zeros((64, 96), np.float32)
    for k in range(3):
        for t in range(32):
            ph, i = divmod(t, 8)
            h = 2 * (4 * i + ph) + k - 1
            if 0 <= h < 64:
                S1[h, k * 32 + t] = 1.0

    R = (A @ S1).astype(np.float32)          # (256, 96): pool+gather, right mult
    L = np.ascontiguousarray(R.T)            # (96, 256): pool+gather, left mult

    # S2W: conv2 gather along W (8 -> 4, k=3, s=2, p=1); 8-lane blocks per kw.
    S2W = np.zeros((8, 24), np.float32)
    for k in range(3):
        for q in range(4):
            j = 2 * q + k - 1
            if 0 <= j < 8:
                S2W[j, k * 8 + q] = 1.0

    # S2H: conv2 gather along H for every (kh, channel): rows = kh*32 + c*4 + p.
    S2H = np.zeros((96, 64), np.float32)
    for k in range(3):
        for c in range(8):
            for p in range(4):
                i = 2 * p + k - 1
                if 0 <= i < 8:
                    S2H[k * 32 + c * 4 + p, c * 8 + i] = 1.0

    return R, L, S2W, S2H


_R, _L, _S2W, _S2H = _structural_constants()


def _gelu(x):
    # tanh-approximate GELU (same formula as jax.nn.gelu(approximate=True)).
    c = 0.7978845608028654  # sqrt(2/pi)
    return 0.5 * x * (1.0 + jnp.tanh(c * (x + 0.044715 * x * x * x)))


# ---------------------------------------------------------------------------
# The fused kernel: one grid step == one batch element.
# ---------------------------------------------------------------------------
def _tinycnn_kernel(x_ref, r_ref, l_ref, m1_ref, b1_ref, s2w_ref, s2h_ref,
                    w2_ref, b2_ref, f1w_ref, f1b_ref, f2w_ref, f2b_ref,
                    f3w_ref, f3b_ref, out_ref):
    f32 = jnp.float32
    Rm = r_ref[...]                                   # (256, 96)
    Lm = l_ref[...]                                   # (96, 256)

    # --- AvgPool2d(4,4) + conv1 im2col gather, folded into R / L matmuls ----
    # G[c][kh*32 + s, kw*32 + t] = pooled[c, 2*ho+kh-1, 2*wo+kw-1]  (0-padded)
    G = []
    for c in range(3):
        xc = x_ref[c]                                                   # (256, 256)
        xr = jnp.dot(xc, Rm, preferred_element_type=f32)                # (256, 96)
        G.append(jnp.dot(Lm, xr, preferred_element_type=f32))           # (96, 96)

    # --- conv1 channel/tap contraction (block-expanded weights) + bias + GELU
    acc = jnp.zeros((256, 32), f32)
    for kw in range(3):
        gkw = jnp.concatenate(
            [G[c][:, kw * 32:(kw + 1) * 32] for c in range(3)], axis=0)  # (288, 32)
        acc = acc + jnp.dot(m1_ref[kw], gkw, preferred_element_type=f32)
    y1 = _gelu(acc + b1_ref[...])        # (256, 32): rows=(ph,o,i), cols=(qph,j)

    # --- MaxPool2d(4,4): phase blocks are contiguous in rows and lanes -------
    m = jnp.maximum(jnp.maximum(y1[0:64], y1[64:128]),
                    jnp.maximum(y1[128:192], y1[192:256]))               # (64, 32)
    p2 = jnp.maximum(jnp.maximum(m[:, 0:8], m[:, 8:16]),
                     jnp.maximum(m[:, 16:24], m[:, 24:32]))              # (64, 8)

    # --- conv2 (8->8, 3x3, s2, p1) via selection matmuls + block weights -----
    v2 = jnp.dot(p2, s2w_ref[...], preferred_element_type=f32)           # (64, 24)
    g2 = jnp.dot(s2h_ref[...], v2, preferred_element_type=f32)           # (96, 24)
    acc2 = jnp.zeros((32, 4), f32)
    for kw in range(3):
        acc2 = acc2 + jnp.dot(w2_ref[kw], g2[:, kw * 8:kw * 8 + 4],
                              preferred_element_type=f32)
    y2 = _gelu(acc2 + b2_ref[...])       # (32, 4): rows=(o,p), cols=q

    # --- flatten (implicit, handled by the fc1 weight split) + fc1 + GELU ----
    h1 = jnp.zeros((16, 1), f32)
    for q in range(4):
        h1 = h1 + jnp.dot(f1w_ref[q], y2[:, q:q + 1],
                          preferred_element_type=f32)
    a1 = _gelu(h1 + f1b_ref[...])                                        # (16, 1)

    # --- x = x + gelu(fc2(x)) -------------------------------------------------
    h2 = jnp.dot(f2w_ref[...], a1, preferred_element_type=f32) + f2b_ref[...]
    a2 = a1 + _gelu(h2)                                                  # (16, 1)

    # --- fc3 + tanh ------------------------------------------------------------
    o = jnp.tanh(jnp.dot(f3w_ref[...], a2, preferred_element_type=f32)
                 + f3b_ref[...])                                         # (2, 1)
    out_ref[...] = o


# ---------------------------------------------------------------------------
# Wrapper: pre-expands weights into block matrices and launches the kernel.
# ---------------------------------------------------------------------------
def tinycnn_forward(x, params):
    """x: (N, 3, 256, 256) float32 NCHW (PyTorch-style). Returns (N, 2)."""
    N = x.shape[0]
    w1, b1 = params["conv1_w"], params["conv1_b"]      # (8,3,3,3) OIHW, (8,)
    w2, b2 = params["conv2_w"], params["conv2_b"]      # (8,8,3,3), (8,)
    fw1, fb1 = params["fc1_w"], params["fc1_b"]        # (16,128), (16,)
    fw2, fb2 = params["fc2_w"], params["fc2_b"]        # (16,16), (16,)
    fw3, fb3 = params["fc3_w"], params["fc3_b"]        # (2,16), (2,)

    # conv1 weights as block matrices: rows=(ph,o,i), cols=(c,kh,s).
    e32 = jnp.eye(32, dtype=jnp.float32).reshape(4, 8, 32)
    m1 = jnp.einsum("ockw,pis->wpoicks", w1, e32).reshape(3, 256, 288)
    b1e = jnp.broadcast_to(b1[None, :, None], (4, 8, 8)).reshape(256, 1)

    # conv2 weights as block matrices: rows=(o,p), cols=(kh,c,p').
    e4 = jnp.eye(4, dtype=jnp.float32)
    w2b = jnp.einsum("ockw,pq->wopkcq", w2, e4).reshape(3, 32, 96)
    b2e = jnp.broadcast_to(b2[:, None], (8, 4)).reshape(32, 1)

    # fc1 weight split by the q (width) coordinate of the (c,h,w) flatten.
    f1w = jnp.transpose(fw1.reshape(16, 8, 4, 4), (3, 0, 1, 2)).reshape(4, 16, 32)

    operands = [
        x.astype(jnp.float32),
        jnp.asarray(_R), jnp.asarray(_L), m1, b1e,
        jnp.asarray(_S2W), jnp.asarray(_S2H), w2b, b2e,
        f1w, fb1[:, None], fw2, fb2[:, None], fw3, fb3[:, None],
    ]

    def const_spec(a):
        nd = a.ndim
        return pl.BlockSpec(a.shape, lambda n, _nd=nd: (0,) * _nd)

    in_specs = [pl.BlockSpec((None, 3, 256, 256), lambda n: (n, 0, 0, 0))]
    in_specs += [const_spec(a) for a in operands[1:]]

    grid_spec = pltpu.PrefetchScalarGridSpec(
        num_scalar_prefetch=0,
        grid=(N,),
        in_specs=in_specs,
        out_specs=pl.BlockSpec((None, 2, 1), lambda n: (n, 0, 0)),
    )

    out = pl.pallas_call(
        _tinycnn_kernel,
        out_shape=jax.ShapeDtypeStruct((N, 2, 1), jnp.float32),
        grid_spec=grid_spec,
        compiler_params=pltpu.CompilerParams(
            dimension_semantics=("parallel",),
            vmem_limit_bytes=32 * 1024 * 1024,
        ),
        cost_estimate=pl.CostEstimate(
            flops=int(N) * 75_000_000,
            transcendentals=int(N) * 8_500,
            bytes_accessed=int(N) * 786_432 + 2_400_000,
        ),
    )(*operands)
    return out[:, :, 0]


# ---------------------------------------------------------------------------
# Pure-JAX reference (mirrors TinyCNN.forward exactly, with tanh-approx GELU).
# ---------------------------------------------------------------------------
def tinycnn_reference(x, params):
    w1, b1 = params["conv1_w"], params["conv1_b"]
    w2, b2 = params["conv2_w"], params["conv2_b"]
    fw1, fb1 = params["fc1_w"], params["fc1_b"]
    fw2, fb2 = params["fc2_w"], params["fc2_b"]
    fw3, fb3 = params["fc3_w"], params["fc3_b"]
    N = x.shape[0]
    dn = ("NCHW", "OIHW", "NCHW")

    x = x.reshape(N, 3, 64, 4, 64, 4).mean(axis=(3, 5))                  # AvgPool 4x4
    x = lax.conv_general_dilated(x, w1, (2, 2), [(1, 1), (1, 1)],
                                 dimension_numbers=dn)
    x = _gelu(x + b1[None, :, None, None])                               # conv1+GELU
    x = x.reshape(N, 8, 8, 4, 8, 4).max(axis=(3, 5))                     # MaxPool 4x4
    x = lax.conv_general_dilated(x, w2, (2, 2), [(1, 1), (1, 1)],
                                 dimension_numbers=dn)
    x = _gelu(x + b2[None, :, None, None])                               # conv2+GELU
    x = x.reshape(N, -1)                                                 # (N, 128)
    x = _gelu(x @ fw1.T + fb1)
    x = x + _gelu(x @ fw2.T + fb2)
    x = jnp.tanh(x @ fw3.T + fb3)
    return x


# ---------------------------------------------------------------------------
if __name__ == "__main__":
    key = jax.random.PRNGKey(0)
    kx, *kp = jax.random.split(key, 11)

    def init(k, shape, fan_in):
        return (1.0 / float(fan_in) ** 0.5) * jax.random.normal(k, shape, jnp.float32)

    params = {
        "conv1_w": init(kp[0], (8, 3, 3, 3), 27), "conv1_b": init(kp[1], (8,), 27),
        "conv2_w": init(kp[2], (8, 8, 3, 3), 72), "conv2_b": init(kp[3], (8,), 72),
        "fc1_w": init(kp[4], (16, 128), 128),     "fc1_b": init(kp[5], (16,), 128),
        "fc2_w": init(kp[6], (16, 16), 16),       "fc2_b": init(kp[7], (16,), 16),
        "fc3_w": init(kp[8], (2, 16), 16),        "fc3_b": init(kp[9], (2,), 16),
    }
    # fc1 expects 8*4*4 features -> input spatial must be 256x256 (NCHW, 3 ch).
    x = jax.random.normal(kx, (2, 3, 256, 256), jnp.float32)

    out = jax.jit(tinycnn_forward)(x, params)
    out = jax.block_until_ready(out)

    ref = tinycnn_reference(x, params)
    assert out.shape == (2, 2), out.shape
    assert jnp.allclose(out, ref, atol=2e-3, rtol=2e-3), (out, ref)
    print("KERNEL_OK")
</pallas_src>

<mosaic_0001>
module attributes {stable_mosaic.version = 11 : i64} {
  func.func @_tinycnn_kernel(%arg0: i32, %arg1: memref<1x3x256x256xf32, #tpu.memory_space<vmem>>, %arg2: memref<256x96xf32, #tpu.memory_space<vmem>>, %arg3: memref<96x256xf32, #tpu.memory_space<vmem>>, %arg4: memref<3x256x288xf32, #tpu.memory_space<vmem>>, %arg5: memref<256x1xf32, #tpu.memory_space<vmem>>, %arg6: memref<8x24xf32, #tpu.memory_space<vmem>>, %arg7: memref<96x64xf32, #tpu.memory_space<vmem>>, %arg8: memref<3x32x96xf32, #tpu.memory_space<vmem>>, %arg9: memref<32x1xf32, #tpu.memory_space<vmem>>, %arg10: memref<4x16x32xf32, #tpu.memory_space<vmem>>, %arg11: memref<16x1xf32, #tpu.memory_space<vmem>>, %arg12: memref<16x16xf32, #tpu.memory_space<vmem>>, %arg13: memref<16x1xf32, #tpu.memory_space<vmem>>, %arg14: memref<2x16xf32, #tpu.memory_space<vmem>>, %arg15: memref<2x1xf32, #tpu.memory_space<vmem>>, %arg16: memref<1x2x1xf32, #tpu.memory_space<vmem>>) attributes {dimension_semantics = [#tpu.dimension_semantics<parallel>], iteration_bounds = array<i64: 2>, scalar_prefetch = 0 : i64, scratch_operands = 0 : i64, tpu.core_type = #tpu.core_type<tc>, window_params = [{transform_indices = @transform_0, window_bounds = array<i64: 1, 3, 256, 256>}, {pipeline_mode = #tpu.pipeline_mode<synchronous>, transform_indices = @transform_1, window_bounds = array<i64: 256, 96>}, {pipeline_mode = #tpu.pipeline_mode<synchronous>, transform_indices = @transform_2, window_bounds = array<i64: 96, 256>}, {pipeline_mode = #tpu.pipeline_mode<synchronous>, transform_indices = @transform_3, window_bounds = array<i64: 3, 256, 288>}, {pipeline_mode = #tpu.pipeline_mode<synchronous>, transform_indices = @transform_4, window_bounds = array<i64: 256, 1>}, {pipeline_mode = #tpu.pipeline_mode<synchronous>, transform_indices = @transform_5, window_bounds = array<i64: 8, 24>}, {pipeline_mode = #tpu.pipeline_mode<synchronous>, transform_indices = @transform_6, window_bounds = array<i64: 96, 64>}, {pipeline_mode = #tpu.pipeline_mode<synchronous>, transform_indices = @transform_7, window_bounds = array<i64: 3, 32, 96>}, {pipeline_mode = #tpu.pipeline_mode<synchronous>, transform_indices = @transform_8, window_bounds = array<i64: 32, 1>}, {pipeline_mode = #tpu.pipeline_mode<synchronous>, transform_indices = @transform_9, window_bounds = array<i64: 4, 16, 32>}, {pipeline_mode = #tpu.pipeline_mode<synchronous>, transform_indices = @transform_10, window_bounds = array<i64: 16, 1>}, {pipeline_mode = #tpu.pipeline_mode<synchronous>, transform_indices = @transform_11, window_bounds = array<i64: 16, 16>}, {pipeline_mode = #tpu.pipeline_mode<synchronous>, transform_indices = @transform_12, window_bounds = array<i64: 16, 1>}, {pipeline_mode = #tpu.pipeline_mode<synchronous>, transform_indices = @transform_13, window_bounds = array<i64: 2, 16>}, {pipeline_mode = #tpu.pipeline_mode<synchronous>, transform_indices = @transform_14, window_bounds = array<i64: 2, 1>}, {transform_indices = @transform_15, window_bounds = array<i64: 1, 2, 1>}]} {
    %c0 = arith.constant 0 : index
    %c0_0 = arith.constant 0 : index
    %0 = vector.load %arg2[%c0, %c0_0] : memref<256x96xf32, #tpu.memory_space<vmem>>, vector<256x96xf32>
    %c0_1 = arith.constant 0 : index
    %c0_2 = arith.constant 0 : index
    %1 = vector.load %arg3[%c0_1, %c0_2] : memref<96x256xf32, #tpu.memory_space<vmem>>, vector<96x256xf32>
    %c0_3 = arith.constant 0 : index
    %c0_4 = arith.constant 0 : index
    %c0_5 = arith.constant 0 : index
    %c0_6 = arith.constant 0 : index
    %2 = vector.load %arg1[%c0_3, %c0_4, %c0_5, %c0_6] : memref<1x3x256x256xf32, #tpu.memory_space<vmem>>, vector<1x1x256x256xf32>
    %3 = vector.shape_cast %2 : vector<1x1x256x256xf32> to vector<256x256xf32>
    %cst = arith.constant dense<0.000000e+00> : vector<256x96xf32>
    %4 = tpu.matmul %3, %0, %cst {dimension_numbers = #tpu.dot_dimension_numbers<[1], [0], [0], [1], [0, 0, 1, 1], [], []>} : vector<256x256xf32>, vector<256x96xf32>, vector<256x96xf32> -> vector<256x96xf32>
    %cst_7 = arith.constant dense<0.000000e+00> : vector<96x96xf32>
    %5 = tpu.matmul %1, %4, %cst_7 {dimension_numbers = #tpu.dot_dimension_numbers<[1], [0], [0], [1], [0, 0, 1, 1], [], []>} : vector<96x256xf32>, vector<256x96xf32>, vector<96x96xf32> -> vector<96x96xf32>
    %c0_8 = arith.constant 0 : index
    %c1 = arith.constant 1 : index
    %c0_9 = arith.constant 0 : index
    %c0_10 = arith.constant 0 : index
    %6 = vector.load %arg1[%c0_8, %c1, %c0_9, %c0_10] : memref<1x3x256x256xf32, #tpu.memory_space<vmem>>, vector<1x1x256x256xf32>
    %7 = vector.shape_cast %6 : vector<1x1x256x256xf32> to vector<256x256xf32>
    %cst_11 = arith.constant dense<0.000000e+00> : vector<256x96xf32>
    %8 = tpu.matmul %7, %0, %cst_11 {dimension_numbers = #tpu.dot_dimension_numbers<[1], [0], [0], [1], [0, 0, 1, 1], [], []>} : vector<256x256xf32>, vector<256x96xf32>, vector<256x96xf32> -> vector<256x96xf32>
    %cst_12 = arith.constant dense<0.000000e+00> : vector<96x96xf32>
    %9 = tpu.matmul %1, %8, %cst_12 {dimension_numbers = #tpu.dot_dimension_numbers<[1], [0], [0], [1], [0, 0, 1, 1], [], []>} : vector<96x256xf32>, vector<256x96xf32>, vector<96x96xf32> -> vector<96x96xf32>
    %c0_13 = arith.constant 0 : index
    %c2 = arith.constant 2 : index
    %c0_14 = arith.constant 0 : index
    %c0_15 = arith.constant 0 : index
    %10 = vector.load %arg1[%c0_13, %c2, %c0_14, %c0_15] : memref<1x3x256x256xf32, #tpu.memory_space<vmem>>, vector<1x1x256x256xf32>
    %11 = vector.shape_cast %10 : vector<1x1x256x256xf32> to vector<256x256xf32>
    %cst_16 = arith.constant dense<0.000000e+00> : vector<256x96xf32>
    %12 = tpu.matmul %11, %0, %cst_16 {dimension_numbers = #tpu.dot_dimension_numbers<[1], [0], [0], [1], [0, 0, 1, 1], [], []>} : vector<256x256xf32>, vector<256x96xf32>, vector<256x96xf32> -> vector<256x96xf32>
    %cst_17 = arith.constant dense<0.000000e+00> : vector<96x96xf32>
    %13 = tpu.matmul %1, %12, %cst_17 {dimension_numbers = #tpu.dot_dimension_numbers<[1], [0], [0], [1], [0, 0, 1, 1], [], []>} : vector<96x256xf32>, vector<256x96xf32>, vector<96x96xf32> -> vector<96x96xf32>
    %cst_18 = arith.constant 0.000000e+00 : f32
    %14 = vector.broadcast %cst_18 : f32 to vector<256x32xf32>
    %15 = vector.extract_strided_slice %5 {offsets = [0, 0], sizes = [96, 32], strides = [1, 1]} : vector<96x96xf32> to vector<96x32xf32>
    %16 = vector.extract_strided_slice %9 {offsets = [0, 0], sizes = [96, 32], strides = [1, 1]} : vector<96x96xf32> to vector<96x32xf32>
    %17 = vector.extract_strided_slice %13 {offsets = [0, 0], sizes = [96, 32], strides = [1, 1]} : vector<96x96xf32> to vector<96x32xf32>
    %18 = tpu.concatenate %15, %16, %17 in 0 : vector<96x32xf32>, vector<96x32xf32>, vector<96x32xf32> -> vector<288x32xf32>
    %c0_19 = arith.constant 0 : index
    %c0_20 = arith.constant 0 : index
    %c0_21 = arith.constant 0 : index
    %19 = vector.load %arg4[%c0_19, %c0_20, %c0_21] : memref<3x256x288xf32, #tpu.memory_space<vmem>>, vector<1x256x288xf32>
    %20 = vector.shape_cast %19 : vector<1x256x288xf32> to vector<256x288xf32>
    %cst_22 = arith.constant dense<0.000000e+00> : vector<256x32xf32>
    %21 = tpu.matmul %20, %18, %cst_22 {dimension_numbers = #tpu.dot_dimension_numbers<[1], [0], [0], [1], [0, 0, 1, 1], [], []>} : vector<256x288xf32>, vector<288x32xf32>, vector<256x32xf32> -> vector<256x32xf32>
    %22 = arith.addf %14, %21 : vector<256x32xf32>
    %23 = vector.extract_strided_slice %5 {offsets = [0, 32], sizes = [96, 32], strides = [1, 1]} : vector<96x96xf32> to vector<96x32xf32>
    %24 = vector.extract_strided_slice %9 {offsets = [0, 32], sizes = [96, 32], strides = [1, 1]} : vector<96x96xf32> to vector<96x32xf32>
    %25 = vector.extract_strided_slice %13 {offsets = [0, 32], sizes = [96, 32], strides = [1, 1]} : vector<96x96xf32> to vector<96x32xf32>
    %26 = tpu.concatenate %23, %24, %25 in 0 : vector<96x32xf32>, vector<96x32xf32>, vector<96x32xf32> -> vector<288x32xf32>
    %c1_23 = arith.constant 1 : index
    %c0_24 = arith.constant 0 : index
    %c0_25 = arith.constant 0 : index
    %27 = vector.load %arg4[%c1_23, %c0_24, %c0_25] : memref<3x256x288xf32, #tpu.memory_space<vmem>>, vector<1x256x288xf32>
    %28 = vector.shape_cast %27 : vector<1x256x288xf32> to vector<256x288xf32>
    %cst_26 = arith.constant dense<0.000000e+00> : vector<256x32xf32>
    %29 = tpu.matmul %28, %26, %cst_26 {dimension_numbers = #tpu.dot_dimension_numbers<[1], [0], [0], [1], [0, 0, 1, 1], [], []>} : vector<256x288xf32>, vector<288x32xf32>, vector<256x32xf32> -> vector<256x32xf32>
    %30 = arith.addf %22, %29 : vector<256x32xf32>
    %31 = vector.extract_strided_slice %5 {offsets = [0, 64], sizes = [96, 32], strides = [1, 1]} : vector<96x96xf32> to vector<96x32xf32>
    %32 = vector.extract_strided_slice %9 {offsets = [0, 64], sizes = [96, 32], strides = [1, 1]} : vector<96x96xf32> to vector<96x32xf32>
    %33 = vector.extract_strided_slice %13 {offsets = [0, 64], sizes = [96, 32], strides = [1, 1]} : vector<96x96xf32> to vector<96x32xf32>
    %34 = tpu.concatenate %31, %32, %33 in 0 : vector<96x32xf32>, vector<96x32xf32>, vector<96x32xf32> -> vector<288x32xf32>
    %c2_27 = arith.constant 2 : index
    %c0_28 = arith.constant 0 : index
    %c0_29 = arith.constant 0 : index
    %35 = vector.load %arg4[%c2_27, %c0_28, %c0_29] : memref<3x256x288xf32, #tpu.memory_space<vmem>>, vector<1x256x288xf32>
    %36 = vector.shape_cast %35 : vector<1x256x288xf32> to vector<256x288xf32>
    %cst_30 = arith.constant dense<0.000000e+00> : vector<256x32xf32>
    %37 = tpu.matmul %36, %34, %cst_30 {dimension_numbers = #tpu.dot_dimension_numbers<[1], [0], [0], [1], [0, 0, 1, 1], [], []>} : vector<256x288xf32>, vector<288x32xf32>, vector<256x32xf32> -> vector<256x32xf32>
    %38 = arith.addf %30, %37 : vector<256x32xf32>
    %c0_31 = arith.constant 0 : index
    %c0_32 = arith.constant 0 : index
    %39 = vector.load %arg5[%c0_31, %c0_32] : memref<256x1xf32, #tpu.memory_space<vmem>>, vector<256x1xf32>
    %40 = vector.broadcast %39 : vector<256x1xf32> to vector<256x32xf32>
    %41 = arith.addf %38, %40 : vector<256x32xf32>
    %cst_33 = arith.constant 5.000000e-01 : f32
    %42 = vector.broadcast %cst_33 : f32 to vector<256x32xf32>
    %43 = arith.mulf %42, %41 : vector<256x32xf32>
    %cst_34 = arith.constant 4.471500e-02 : f32
    %44 = vector.broadcast %cst_34 : f32 to vector<256x32xf32>
    %45 = arith.mulf %44, %41 : vector<256x32xf32>
    %46 = arith.mulf %45, %41 : vector<256x32xf32>
    %47 = arith.mulf %46, %41 : vector<256x32xf32>
    %48 = arith.addf %41, %47 : vector<256x32xf32>
    %cst_35 = arith.constant 0.797884583 : f32
    %49 = vector.broadcast %cst_35 : f32 to vector<256x32xf32>
    %50 = arith.mulf %49, %48 : vector<256x32xf32>
    %51 = math.tanh %50 : vector<256x32xf32>
    %cst_36 = arith.constant 1.000000e+00 : f32
    %52 = vector.broadcast %cst_36 : f32 to vector<256x32xf32>
    %53 = arith.addf %52, %51 : vector<256x32xf32>
    %54 = arith.mulf %43, %53 : vector<256x32xf32>
    %55 = vector.extract_strided_slice %54 {offsets = [0, 0], sizes = [64, 32], strides = [1, 1]} : vector<256x32xf32> to vector<64x32xf32>
    %56 = vector.extract_strided_slice %54 {offsets = [64, 0], sizes = [64, 32], strides = [1, 1]} : vector<256x32xf32> to vector<64x32xf32>
    %57 = arith.maximumf %55, %56 : vector<64x32xf32>
    %58 = vector.extract_strided_slice %54 {offsets = [128, 0], sizes = [64, 32], strides = [1, 1]} : vector<256x32xf32> to vector<64x32xf32>
    %59 = vector.extract_strided_slice %54 {offsets = [192, 0], sizes = [64, 32], strides = [1, 1]} : vector<256x32xf32> to vector<64x32xf32>
    %60 = arith.maximumf %58, %59 : vector<64x32xf32>
    %61 = arith.maximumf %57, %60 : vector<64x32xf32>
    %62 = vector.extract_strided_slice %61 {offsets = [0, 0], sizes = [64, 8], strides = [1, 1]} : vector<64x32xf32> to vector<64x8xf32>
    %63 = vector.extract_strided_slice %61 {offsets = [0, 8], sizes = [64, 8], strides = [1, 1]} : vector<64x32xf32> to vector<64x8xf32>
    %64 = arith.maximumf %62, %63 : vector<64x8xf32>
    %65 = vector.extract_strided_slice %61 {offsets = [0, 16], sizes = [64, 8], strides = [1, 1]} : vector<64x32xf32> to vector<64x8xf32>
    %66 = vector.extract_strided_slice %61 {offsets = [0, 24], sizes = [64, 8], strides = [1, 1]} : vector<64x32xf32> to vector<64x8xf32>
    %67 = arith.maximumf %65, %66 : vector<64x8xf32>
    %68 = arith.maximumf %64, %67 : vector<64x8xf32>
    %c0_37 = arith.constant 0 : index
    %c0_38 = arith.constant 0 : index
    %69 = vector.load %arg6[%c0_37, %c0_38] : memref<8x24xf32, #tpu.memory_space<vmem>>, vector<8x24xf32>
    %cst_39 = arith.constant dense<0.000000e+00> : vector<64x24xf32>
    %70 = tpu.matmul %68, %69, %cst_39 {dimension_numbers = #tpu.dot_dimension_numbers<[1], [0], [0], [1], [0, 0, 1, 1], [], []>} : vector<64x8xf32>, vector<8x24xf32>, vector<64x24xf32> -> vector<64x24xf32>
    %c0_40 = arith.constant 0 : index
    %c0_41 = arith.constant 0 : index
    %71 = vector.load %arg7[%c0_40, %c0_41] : memref<96x64xf32, #tpu.memory_space<vmem>>, vector<96x64xf32>
    %cst_42 = arith.constant dense<0.000000e+00> : vector<96x24xf32>
    %72 = tpu.matmul %71, %70, %cst_42 {dimension_numbers = #tpu.dot_dimension_numbers<[1], [0], [0], [1], [0, 0, 1, 1], [], []>} : vector<96x64xf32>, vector<64x24xf32>, vector<96x24xf32> -> vector<96x24xf32>
    %cst_43 = arith.constant 0.000000e+00 : f32
    %73 = vector.broadcast %cst_43 : f32 to vector<32x4xf32>
    %c0_44 = arith.constant 0 : index
    %c0_45 = arith.constant 0 : index
    %c0_46 = arith.constant 0 : index
    %74 = vector.load %arg8[%c0_44, %c0_45, %c0_46] : memref<3x32x96xf32, #tpu.memory_space<vmem>>, vector<1x32x96xf32>
    %75 = vector.shape_cast %74 : vector<1x32x96xf32> to vector<32x96xf32>
    %76 = vector.extract_strided_slice %72 {offsets = [0, 0], sizes = [96, 4], strides = [1, 1]} : vector<96x24xf32> to vector<96x4xf32>
    %cst_47 = arith.constant dense<0.000000e+00> : vector<32x4xf32>
    %77 = tpu.matmul %75, %76, %cst_47 {dimension_numbers = #tpu.dot_dimension_numbers<[1], [0], [0], [1], [0, 0, 1, 1], [], []>} : vector<32x96xf32>, vector<96x4xf32>, vector<32x4xf32> -> vector<32x4xf32>
    %78 = arith.addf %73, %77 : vector<32x4xf32>
    %c1_48 = arith.constant 1 : index
    %c0_49 = arith.constant 0 : index
    %c0_50 = arith.constant 0 : index
    %79 = vector.load %arg8[%c1_48, %c0_49, %c0_50] : memref<3x32x96xf32, #tpu.memory_space<vmem>>, vector<1x32x96xf32>
    %80 = vector.shape_cast %79 : vector<1x32x96xf32> to vector<32x96xf32>
    %81 = vector.extract_strided_slice %72 {offsets = [0, 8], sizes = [96, 4], strides = [1, 1]} : vector<96x24xf32> to vector<96x4xf32>
    %cst_51 = arith.constant dense<0.000000e+00> : vector<32x4xf32>
    %82 = tpu.matmul %80, %81, %cst_51 {dimension_numbers = #tpu.dot_dimension_numbers<[1], [0], [0], [1], [0, 0, 1, 1], [], []>} : vector<32x96xf32>, vector<96x4xf32>, vector<32x4xf32> -> vector<32x4xf32>
    %83 = arith.addf %78, %82 : vector<32x4xf32>
    %c2_52 = arith.constant 2 : index
    %c0_53 = arith.constant 0 : index
    %c0_54 = arith.constant 0 : index
    %84 = vector.load %arg8[%c2_52, %c0_53, %c0_54] : memref<3x32x96xf32, #tpu.memory_space<vmem>>, vector<1x32x96xf32>
    %85 = vector.shape_cast %84 : vector<1x32x96xf32> to vector<32x96xf32>
    %86 = vector.extract_strided_slice %72 {offsets = [0, 16], sizes = [96, 4], strides = [1, 1]} : vector<96x24xf32> to vector<96x4xf32>
    %cst_55 = arith.constant dense<0.000000e+00> : vector<32x4xf32>
    %87 = tpu.matmul %85, %86, %cst_55 {dimension_numbers = #tpu.dot_dimension_numbers<[1], [0], [0], [1], [0, 0, 1, 1], [], []>} : vector<32x96xf32>, vector<96x4xf32>, vector<32x4xf32> -> vector<32x4xf32>
    %88 = arith.addf %83, %87 : vector<32x4xf32>
    %c0_56 = arith.constant 0 : index
    %c0_57 = arith.constant 0 : index
    %89 = vector.load %arg9[%c0_56, %c0_57] : memref<32x1xf32, #tpu.memory_space<vmem>>, vector<32x1xf32>
    %90 = vector.broadcast %89 : vector<32x1xf32> to vector<32x4xf32>
    %91 = arith.addf %88, %90 : vector<32x4xf32>
    %cst_58 = arith.constant 5.000000e-01 : f32
    %92 = vector.broadcast %cst_58 : f32 to vector<32x4xf32>
    %93 = arith.mulf %92, %91 : vector<32x4xf32>
    %cst_59 = arith.constant 4.471500e-02 : f32
    %94 = vector.broadcast %cst_59 : f32 to vector<32x4xf32>
    %95 = arith.mulf %94, %91 : vector<32x4xf32>
    %96 = arith.mulf %95, %91 : vector<32x4xf32>
    %97 = arith.mulf %96, %91 : vector<32x4xf32>
    %98 = arith.addf %91, %97 : vector<32x4xf32>
    %cst_60 = arith.constant 0.797884583 : f32
    %99 = vector.broadcast %cst_60 : f32 to vector<32x4xf32>
    %100 = arith.mulf %99, %98 : vector<32x4xf32>
    %101 = math.tanh %100 : vector<32x4xf32>
    %cst_61 = arith.constant 1.000000e+00 : f32
    %102 = vector.broadcast %cst_61 : f32 to vector<32x4xf32>
    %103 = arith.addf %102, %101 : vector<32x4xf32>
    %104 = arith.mulf %93, %103 : vector<32x4xf32>
    %cst_62 = arith.constant 0.000000e+00 : f32
    %105 = vector.broadcast %cst_62 : f32 to vector<16x1xf32>
    %c0_63 = arith.constant 0 : index
    %c0_64 = arith.constant 0 : index
    %c0_65 = arith.constant 0 : index
    %106 = vector.load %arg10[%c0_63, %c0_64, %c0_65] : memref<4x16x32xf32, #tpu.memory_space<vmem>>, vector<1x16x32xf32>
    %107 = vector.shape_cast %106 : vector<1x16x32xf32> to vector<16x32xf32>
    %108 = vector.extract_strided_slice %104 {offsets = [0, 0], sizes = [32, 1], strides = [1, 1]} : vector<32x4xf32> to vector<32x1xf32>
    %cst_66 = arith.constant dense<0.000000e+00> : vector<16x1xf32>
    %109 = tpu.matmul %107, %108, %cst_66 {dimension_numbers = #tpu.dot_dimension_numbers<[1], [0], [0], [1], [0, 0, 1, 1], [], []>} : vector<16x32xf32>, vector<32x1xf32>, vector<16x1xf32> -> vector<16x1xf32>
    %110 = arith.addf %105, %109 : vector<16x1xf32>
    %c1_67 = arith.constant 1 : index
    %c0_68 = arith.constant 0 : index
    %c0_69 = arith.constant 0 : index
    %111 = vector.load %arg10[%c1_67, %c0_68, %c0_69] : memref<4x16x32xf32, #tpu.memory_space<vmem>>, vector<1x16x32xf32>
    %112 = vector.shape_cast %111 : vector<1x16x32xf32> to vector<16x32xf32>
    %113 = vector.extract_strided_slice %104 {offsets = [0, 1], sizes = [32, 1], strides = [1, 1]} : vector<32x4xf32> to vector<32x1xf32>
    %cst_70 = arith.constant dense<0.000000e+00> : vector<16x1xf32>
    %114 = tpu.matmul %112, %113, %cst_70 {dimension_numbers = #tpu.dot_dimension_numbers<[1], [0], [0], [1], [0, 0, 1, 1], [], []>} : vector<16x32xf32>, vector<32x1xf32>, vector<16x1xf32> -> vector<16x1xf32>
    %115 = arith.addf %110, %114 : vector<16x1xf32>
    %c2_71 = arith.constant 2 : index
    %c0_72 = arith.constant 0 : index
    %c0_73 = arith.constant 0 : index
    %116 = vector.load %arg10[%c2_71, %c0_72, %c0_73] : memref<4x16x32xf32, #tpu.memory_space<vmem>>, vector<1x16x32xf32>
    %117 = vector.shape_cast %116 : vector<1x16x32xf32> to vector<16x32xf32>
    %118 = vector.extract_strided_slice %104 {offsets = [0, 2], sizes = [32, 1], strides = [1, 1]} : vector<32x4xf32> to vector<32x1xf32>
    %cst_74 = arith.constant dense<0.000000e+00> : vector<16x1xf32>
    %119 = tpu.matmul %117, %118, %cst_74 {dimension_numbers = #tpu.dot_dimension_numbers<[1], [0], [0], [1], [0, 0, 1, 1], [], []>} : vector<16x32xf32>, vector<32x1xf32>, vector<16x1xf32> -> vector<16x1xf32>
    %120 = arith.addf %115, %119 : vector<16x1xf32>
    %c3 = arith.constant 3 : index
    %c0_75 = arith.constant 0 : index
    %c0_76 = arith.constant 0 : index
    %121 = vector.load %arg10[%c3, %c0_75, %c0_76] : memref<4x16x32xf32, #tpu.memory_space<vmem>>, vector<1x16x32xf32>
    %122 = vector.shape_cast %121 : vector<1x16x32xf32> to vector<16x32xf32>
    %123 = vector.extract_strided_slice %104 {offsets = [0, 3], sizes = [32, 1], strides = [1, 1]} : vector<32x4xf32> to vector<32x1xf32>
    %cst_77 = arith.constant dense<0.000000e+00> : vector<16x1xf32>
    %124 = tpu.matmul %122, %123, %cst_77 {dimension_numbers = #tpu.dot_dimension_numbers<[1], [0], [0], [1], [0, 0, 1, 1], [], []>} : vector<16x32xf32>, vector<32x1xf32>, vector<16x1xf32> -> vector<16x1xf32>
    %125 = arith.addf %120, %124 : vector<16x1xf32>
    %c0_78 = arith.constant 0 : index
    %c0_79 = arith.constant 0 : index
    %126 = vector.load %arg11[%c0_78, %c0_79] : memref<16x1xf32, #tpu.memory_space<vmem>>, vector<16x1xf32>
    %127 = arith.addf %125, %126 : vector<16x1xf32>
    %cst_80 = arith.constant 5.000000e-01 : f32
    %128 = vector.broadcast %cst_80 : f32 to vector<16x1xf32>
    %129 = arith.mulf %128, %127 : vector<16x1xf32>
    %cst_81 = arith.constant 4.471500e-02 : f32
    %130 = vector.broadcast %cst_81 : f32 to vector<16x1xf32>
    %131 = arith.mulf %130, %127 : vector<16x1xf32>
    %132 = arith.mulf %131, %127 : vector<16x1xf32>
    %133 = arith.mulf %132, %127 : vector<16x1xf32>
    %134 = arith.addf %127, %133 : vector<16x1xf32>
    %cst_82 = arith.constant 0.797884583 : f32
    %135 = vector.broadcast %cst_82 : f32 to vector<16x1xf32>
    %136 = arith.mulf %135, %134 : vector<16x1xf32>
    %137 = math.tanh %136 : vector<16x1xf32>
    %cst_83 = arith.constant 1.000000e+00 : f32
    %138 = vector.broadcast %cst_83 : f32 to vector<16x1xf32>
    %139 = arith.addf %138, %137 : vector<16x1xf32>
    %140 = arith.mulf %129, %139 : vector<16x1xf32>
    %c0_84 = arith.constant 0 : index
    %c0_85 = arith.constant 0 : index
    %141 = vector.load %arg12[%c0_84, %c0_85] : memref<16x16xf32, #tpu.memory_space<vmem>>, vector<16x16xf32>
    %cst_86 = arith.constant dense<0.000000e+00> : vector<16x1xf32>
    %142 = tpu.matmul %141, %140, %cst_86 {dimension_numbers = #tpu.dot_dimension_numbers<[1], [0], [0], [1], [0, 0, 1, 1], [], []>} : vector<16x16xf32>, vector<16x1xf32>, vector<16x1xf32> -> vector<16x1xf32>
    %c0_87 = arith.constant 0 : index
    %c0_88 = arith.constant 0 : index
    %143 = vector.load %arg13[%c0_87, %c0_88] : memref<16x1xf32, #tpu.memory_space<vmem>>, vector<16x1xf32>
    %144 = arith.addf %142, %143 : vector<16x1xf32>
    %cst_89 = arith.constant 5.000000e-01 : f32
    %145 = vector.broadcast %cst_89 : f32 to vector<16x1xf32>
    %146 = arith.mulf %145, %144 : vector<16x1xf32>
    %cst_90 = arith.constant 4.471500e-02 : f32
    %147 = vector.broadcast %cst_90 : f32 to vector<16x1xf32>
    %148 = arith.mulf %147, %144 : vector<16x1xf32>
    %149 = arith.mulf %148, %144 : vector<16x1xf32>
    %150 = arith.mulf %149, %144 : vector<16x1xf32>
    %151 = arith.addf %144, %150 : vector<16x1xf32>
    %cst_91 = arith.constant 0.797884583 : f32
    %152 = vector.broadcast %cst_91 : f32 to vector<16x1xf32>
    %153 = arith.mulf %152, %151 : vector<16x1xf32>
    %154 = math.tanh %153 : vector<16x1xf32>
    %cst_92 = arith.constant 1.000000e+00 : f32
    %155 = vector.broadcast %cst_92 : f32 to vector<16x1xf32>
    %156 = arith.addf %155, %154 : vector<16x1xf32>
    %157 = arith.mulf %146, %156 : vector<16x1xf32>
    %158 = arith.addf %140, %157 : vector<16x1xf32>
    %c0_93 = arith.constant 0 : index
    %c0_94 = arith.constant 0 : index
    %159 = vector.load %arg14[%c0_93, %c0_94] : memref<2x16xf32, #tpu.memory_space<vmem>>, vector<2x16xf32>
    %cst_95 = arith.constant dense<0.000000e+00> : vector<2x1xf32>
    %160 = tpu.matmul %159, %158, %cst_95 {dimension_numbers = #tpu.dot_dimension_numbers<[1], [0], [0], [1], [0, 0, 1, 1], [], []>} : vector<2x16xf32>, vector<16x1xf32>, vector<2x1xf32> -> vector<2x1xf32>
    %c0_96 = arith.constant 0 : index
    %c0_97 = arith.constant 0 : index
    %161 = vector.load %arg15[%c0_96, %c0_97] : memref<2x1xf32, #tpu.memory_space<vmem>>, vector<2x1xf32>
    %162 = arith.addf %160, %161 : vector<2x1xf32>
    %163 = math.tanh %162 : vector<2x1xf32>
    %c0_98 = arith.constant 0 : index
    %c0_99 = arith.constant 0 : index
    %c0_100 = arith.constant 0 : index
    %164 = vector.load %arg16[%c0_98, %c0_99, %c0_100] : memref<1x2x1xf32, #tpu.memory_space<vmem>>, vector<1x2x1xf32>
    %165 = vector.shape_cast %164 : vector<1x2x1xf32> to vector<2x1xf32>
    %166 = vector.shape_cast %163 : vector<2x1xf32> to vector<1x2x1xf32>
    tpu.vector_store %arg16[%c0_98, %c0_99, %c0_100], %166 {strides = array<i32>} : memref<1x2x1xf32, #tpu.memory_space<vmem>>, vector<1x2x1xf32>,
    return
  }
  func.func @transform_0(%arg0: i32) -> (i32, i32, i32, i32) {
    %c0_i32 = arith.constant 0 : i32
    %c0_i32_0 = arith.constant 0 : i32
    %c0_i32_1 = arith.constant 0 : i32
    %c0_i32_2 = arith.constant 0 : i32
    return %arg0, %c0_i32, %c0_i32_0, %c0_i32_1 : i32, i32, i32, i32
  }
  func.func @transform_1(%arg0: i32) -> (i32, i32) {
    %c0_i32 = arith.constant 0 : i32
    %c0_i32_0 = arith.constant 0 : i32
    %c0_i32_1 = arith.constant 0 : i32
    return %c0_i32, %c0_i32_0 : i32, i32
  }
  func.func @transform_2(%arg0: i32) -> (i32, i32) {
    %c0_i32 = arith.constant 0 : i32
    %c0_i32_0 = arith.constant 0 : i32
    %c0_i32_1 = arith.constant 0 : i32
    return %c0_i32, %c0_i32_0 : i32, i32
  }
  func.func @transform_3(%arg0: i32) -> (i32, i32, i32) {
    %c0_i32 = arith.constant 0 : i32
    %c0_i32_0 = arith.constant 0 : i32
    %c0_i32_1 = arith.constant 0 : i32
    %c0_i32_2 = arith.constant 0 : i32
    return %c0_i32, %c0_i32_0, %c0_i32_1 : i32, i32, i32
  }
  func.func @transform_4(%arg0: i32) -> (i32, i32) {
    %c0_i32 = arith.constant 0 : i32
    %c0_i32_0 = arith.constant 0 : i32
    %c0_i32_1 = arith.constant 0 : i32
    return %c0_i32, %c0_i32_0 : i32, i32
  }
  func.func @transform_5(%arg0: i32) -> (i32, i32) {
    %c0_i32 = arith.constant 0 : i32
    %c0_i32_0 = arith.constant 0 : i32
    %c0_i32_1 = arith.constant 0 : i32
    return %c0_i32, %c0_i32_0 : i32, i32
  }
  func.func @transform_6(%arg0: i32) -> (i32, i32) {
    %c0_i32 = arith.constant 0 : i32
    %c0_i32_0 = arith.constant 0 : i32
    %c0_i32_1 = arith.constant 0 : i32
    return %c0_i32, %c0_i32_0 : i32, i32
  }
  func.func @transform_7(%arg0: i32) -> (i32, i32, i32) {
    %c0_i32 = arith.constant 0 : i32
    %c0_i32_0 = arith.constant 0 : i32
    %c0_i32_1 = arith.constant 0 : i32
    %c0_i32_2 = arith.constant 0 : i32
    return %c0_i32, %c0_i32_0, %c0_i32_1 : i32, i32, i32
  }
  func.func @transform_8(%arg0: i32) -> (i32, i32) {
    %c0_i32 = arith.constant 0 : i32
    %c0_i32_0 = arith.constant 0 : i32
    %c0_i32_1 = arith.constant 0 : i32
    return %c0_i32, %c0_i32_0 : i32, i32
  }
  func.func @transform_9(%arg0: i32) -> (i32, i32, i32) {
    %c0_i32 = arith.constant 0 : i32
    %c0_i32_0 = arith.constant 0 : i32
    %c0_i32_1 = arith.constant 0 : i32
    %c0_i32_2 = arith.constant 0 : i32
    return %c0_i32, %c0_i32_0, %c0_i32_1 : i32, i32, i32
  }
  func.func @transform_10(%arg0: i32) -> (i32, i32) {
    %c0_i32 = arith.constant 0 : i32
    %c0_i32_0 = arith.constant 0 : i32
    %c0_i32_1 = arith.constant 0 : i32
    return %c0_i32, %c0_i32_0 : i32, i32
  }
  func.func @transform_11(%arg0: i32) -> (i32, i32) {
    %c0_i32 = arith.constant 0 : i32
    %c0_i32_0 = arith.constant 0 : i32
    %c0_i32_1 = arith.constant 0 : i32
    return %c0_i32, %c0_i32_0 : i32, i32
  }
  func.func @transform_12(%arg0: i32) -> (i32, i32) {
    %c0_i32 = arith.constant 0 : i32
    %c0_i32_0 = arith.constant 0 : i32
    %c0_i32_1 = arith.constant 0 : i32
    return %c0_i32, %c0_i32_0 : i32, i32
  }
  func.func @transform_13(%arg0: i32) -> (i32, i32) {
    %c0_i32 = arith.constant 0 : i32
    %c0_i32_0 = arith.constant 0 : i32
    %c0_i32_1 = arith.constant 0 : i32
    return %c0_i32, %c0_i32_0 : i32, i32
  }
  func.func @transform_14(%arg0: i32) -> (i32, i32) {
    %c0_i32 = arith.constant 0 : i32
    %c0_i32_0 = arith.constant 0 : i32
    %c0_i32_1 = arith.constant 0 : i32
    return %c0_i32, %c0_i32_0 : i32, i32
  }
  func.func @transform_15(%arg0: i32) -> (i32, i32, i32) {
    %c0_i32 = arith.constant 0 : i32
    %c0_i32_0 = arith.constant 0 : i32
    %c0_i32_1 = arith.constant 0 : i32
    return %arg0, %c0_i32, %c0_i32_0 : i32, i32, i32
  }
}

</mosaic_0001>

<llo_original>
// kernel: tinycnn_forward.1
$region0: #{tinycnn_forward.1}
  #allocation0 [shape = 'u32[]', space=smem, size = 0x4, offset = 0x4, fixed_abs, tag = 'smem constant byte address 0x4 - core index']
  #allocation1 [shape = 'u32[144,128]{1,0:T(1,128)}', space=vmem, size = 0x12000, scoped, tag = 'internal scratch']
  %s0 = inlined_call_operand.vmem [shape: f32[2,3,256,256], index: 0, kind: input, shape index: {}]
  %s1 = inlined_call_operand.vmem [shape: f32[256,96], index: 1, kind: input, shape index: {}]
  %s2 = inlined_call_operand.vmem [shape: f32[96,256], index: 2, kind: input, shape index: {}]
  %s3 = inlined_call_operand.vmem [shape: f32[3,256,288], index: 3, kind: input, shape index: {}]
  %s4 = inlined_call_operand.vmem [shape: f32[256,1], index: 4, kind: input, shape index: {}]
  %s5 = inlined_call_operand.vmem [shape: f32[8,24], index: 5, kind: input, shape index: {}]
  %s6 = inlined_call_operand.vmem [shape: f32[96,64], index: 6, kind: input, shape index: {}]
  %s7 = inlined_call_operand.vmem [shape: f32[3,32,96], index: 7, kind: input, shape index: {}]
  %s8 = inlined_call_operand.vmem [shape: f32[32,1], index: 8, kind: input, shape index: {}]
  %s9 = inlined_call_operand.vmem [shape: f32[4,16,32], index: 9, kind: input, shape index: {}]
  %s10 = inlined_call_operand.vmem [shape: f32[16,1], index: 10, kind: input, shape index: {}]
  %s11 = inlined_call_operand.vmem [shape: f32[16,16], index: 11, kind: input, shape index: {}]
  %s12 = inlined_call_operand.vmem [shape: f32[16,1], index: 12, kind: input, shape index: {}]
  %s13 = inlined_call_operand.vmem [shape: f32[2,16], index: 13, kind: input, shape index: {}]
  %s14 = inlined_call_operand.vmem [shape: f32[2,1], index: 14, kind: input, shape index: {}]
  %s15 = inlined_call_operand.vmem [shape: f32[2,2,1], index: 15, kind: output, shape index: {}]
  %s16 = sld [smem:[#allocation0]]
  $region93: #{tinycnn_forward.1} parent=0
    _
  %s18 = ssub.s32 1, %s16
  %s19 = scalar_select 0, %s18, %s16
  loop: start=0, step=1, limit=4
  $region2: #{tinycnn_forward.1} parent=0 // loop_pre_header
    _
  $region3: #{tinycnn_forward.1} parent=0 // loop_header
    %s21 = sphi 0, %s25
    %p22 = scmp.ge.s32.totalorder %s21, 4
    %s31 = sphi 0, %s33
    %s34 = sphi 0, %s31
    %s35 = sphi 0, %s34
    %s51 = sphi 0, %s35
    %s55 = sphi 0, %s55
    %s57 = sphi 0, %s55
    %s58 = sphi 0, %s57
    %s72 = sphi 0, %s58
    %s76 = sphi 0, %s76
    %s78 = sphi 0, %s76
    %s79 = sphi 0, %s78
    %s93 = sphi 0, %s79
    %s97 = sphi 0, %s97
    %s99 = sphi 0, %s97
    %s100 = sphi 0, %s99
    %s114 = sphi 0, %s100
    %s118 = sphi 0, %s118
    %s120 = sphi 0, %s118
    %s121 = sphi 0, %s120
    %s135 = sphi 0, %s121
    %s139 = sphi 0, %s139
    %s141 = sphi 0, %s139
    %s142 = sphi 0, %s141
    %s156 = sphi 0, %s142
    %s160 = sphi 0, %s160
    %s162 = sphi 0, %s160
    %s163 = sphi 0, %s162
    %s177 = sphi 0, %s163
    %s181 = sphi 0, %s181
    %s183 = sphi 0, %s181
    %s184 = sphi 0, %s183
    %s198 = sphi 0, %s184
    %s202 = sphi 0, %s202
    %s204 = sphi 0, %s202
    %s205 = sphi 0, %s204
    %s219 = sphi 0, %s205
    %s223 = sphi 0, %s223
    %s225 = sphi 0, %s223
    %s226 = sphi 0, %s225
    %s240 = sphi 0, %s226
    %s244 = sphi 0, %s244
    %s246 = sphi 0, %s244
    %s247 = sphi 0, %s246
    %s261 = sphi 0, %s247
    %s265 = sphi 0, %s265
    %s267 = sphi 0, %s265
    %s268 = sphi 0, %s267
    %s282 = sphi 0, %s268
    %s286 = sphi 0, %s286
    %s288 = sphi 0, %s286
    %s289 = sphi 0, %s288
    %s303 = sphi 0, %s289
    %s307 = sphi 0, %s307
    %s309 = sphi 0, %s307
    %s310 = sphi 0, %s309
    %s324 = sphi 0, %s310
    %s328 = sphi 0, %s328
    %s330 = sphi 0, %s328
    %s331 = sphi 0, %s330
    %s345 = sphi 0, %s331
    %s351 = sphi 0, %s353
    %s354 = sphi 0, %s351
    %s355 = sphi 0, %s354
    %s371 = sphi 0, %s355
  $region4: #{tinycnn_forward.1} parent=0 // loop_header_branch
    %24 = sbr.rel (%p22) target = $region8
  $region5: #{tinycnn_forward.1} parent=0 // loop_body
    %s26 = ssub.s32 %s21, 1
    %s27 = ssub.s32 %s21, 2
    %s28 = sadd.s32 %s21, 1
    %s29 = ssub.s32 %s21, %s28
    %p30 = scmp.eq.s32.totalorder %s29, 0
    %s32 = sadd.s32 %s31, 1
    %s33 = scalar_select %p30, %s31, %s32
    %p36 = pneg %p30
    %p37 = scmp.eq.s32.totalorder %s21, 1
    %p38 = por %p36, %p37
    %p39 = scmp.ne.s32.totalorder %s31, %s34
    %p40 = scmp.eq.s32.totalorder %s21, 0
    %p41 = por %p39, %p40
    %p42 = scmp.ne.s32.totalorder %s31, %s34
    %p43 = scmp.eq.s32.totalorder %s26, 1
    %p44 = por %p42, %p43
    %p45 = scmp.ne.s32.totalorder %s34, %s35
    %p46 = scmp.eq.s32.totalorder %s26, 0
    %p47 = por %p45, %p46
    %p48 = scmp.ne.s32.totalorder %s34, %s35
    %p49 = scmp.eq.s32.totalorder %s27, 1
    %p50 = por %p48, %p49
    %p52 = scmp.ne.s32.totalorder %s35, %s51
    %p53 = scmp.eq.s32.totalorder %s27, 0
    %p54 = por %p52, %p53
    %s56 = sadd.s32 %s55, 1
    %p59 = scmp.eq.s32.totalorder %s21, 1
    %p60 = scmp.ne.s32.totalorder %s55, %s57
    %p61 = scmp.eq.s32.totalorder %s21, 0
    %p62 = por %p60, %p61
    %p63 = scmp.ne.s32.totalorder %s55, %s57
    %p64 = scmp.eq.s32.totalorder %s26, 1
    %p65 = por %p63, %p64
    %p66 = scmp.ne.s32.totalorder %s57, %s58
    %p67 = scmp.eq.s32.totalorder %s26, 0
    %p68 = por %p66, %p67
    %p69 = scmp.ne.s32.totalorder %s57, %s58
    %p70 = scmp.eq.s32.totalorder %s27, 1
    %p71 = por %p69, %p70
    %p73 = scmp.ne.s32.totalorder %s58, %s72
    %p74 = scmp.eq.s32.totalorder %s27, 0
    %p75 = por %p73, %p74
    %s77 = sadd.s32 %s76, 1
    %p80 = scmp.eq.s32.totalorder %s21, 1
    %p81 = scmp.ne.s32.totalorder %s76, %s78
    %p82 = scmp.eq.s32.totalorder %s21, 0
    %p83 = por %p81, %p82
    %p84 = scmp.ne.s32.totalorder %s76, %s78
    %p85 = scmp.eq.s32.totalorder %s26, 1
    %p86 = por %p84, %p85
    %p87 = scmp.ne.s32.totalorder %s78, %s79
    %p88 = scmp.eq.s32.totalorder %s26, 0
    %p89 = por %p87, %p88
    %p90 = scmp.ne.s32.totalorder %s78, %s79
    %p91 = scmp.eq.s32.totalorder %s27, 1
    %p92 = por %p90, %p91
    %p94 = scmp.ne.s32.totalorder %s79, %s93
    %p95 = scmp.eq.s32.totalorder %s27, 0
    %p96 = por %p94, %p95
    %s98 = sadd.s32 %s97, 1
    %p101 = scmp.eq.s32.totalorder %s21, 1
    %p102 = scmp.ne.s32.totalorder %s97, %s99
    %p103 = scmp.eq.s32.totalorder %s21, 0
    %p104 = por %p102, %p103
    %p105 = scmp.ne.s32.totalorder %s97, %s99
    %p106 = scmp.eq.s32.totalorder %s26, 1
    %p107 = por %p105, %p106
    %p108 = scmp.ne.s32.totalorder %s99, %s100
    %p109 = scmp.eq.s32.totalorder %s26, 0
    %p110 = por %p108, %p109
    %p111 = scmp.ne.s32.totalorder %s99, %s100
    %p112 = scmp.eq.s32.totalorder %s27, 1
    %p113 = por %p111, %p112
    %p115 = scmp.ne.s32.totalorder %s100, %s114
    %p116 = scmp.eq.s32.totalorder %s27, 0
    %p117 = por %p115, %p116
    %s119 = sadd.s32 %s118, 1
    %p122 = scmp.eq.s32.totalorder %s21, 1
    %p123 = scmp.ne.s32.totalorder %s118, %s120
    %p124 = scmp.eq.s32.totalorder %s21, 0
    %p125 = por %p123, %p124
    %p126 = scmp.ne.s32.totalorder %s118, %s120
    %p127 = scmp.eq.s32.totalorder %s26, 1
    %p128 = por %p126, %p127
    %p129 = scmp.ne.s32.totalorder %s120, %s121
    %p130 = scmp.eq.s32.totalorder %s26, 0
    %p131 = por %p129, %p130
    %p132 = scmp.ne.s32.totalorder %s120, %s121
    %p133 = scmp.eq.s32.totalorder %s27, 1
    %p134 = por %p132, %p133
    %p136 = scmp.ne.s32.totalorder %s121, %s135
    %p137 = scmp.eq.s32.totalorder %s27, 0
    %p138 = por %p136, %p137
    %s140 = sadd.s32 %s139, 1
    %p143 = scmp.eq.s32.totalorder %s21, 1
    %p144 = scmp.ne.s32.totalorder %s139, %s141
    %p145 = scmp.eq.s32.totalorder %s21, 0
    %p146 = por %p144, %p145
    %p147 = scmp.ne.s32.totalorder %s139, %s141
    %p148 = scmp.eq.s32.totalorder %s26, 1
    %p149 = por %p147, %p148
    %p150 = scmp.ne.s32.totalorder %s141, %s142
    %p151 = scmp.eq.s32.totalorder %s26, 0
    %p152 = por %p150, %p151
    %p153 = scmp.ne.s32.totalorder %s141, %s142
    %p154 = scmp.eq.s32.totalorder %s27, 1
    %p155 = por %p153, %p154
    %p157 = scmp.ne.s32.totalorder %s142, %s156
    %p158 = scmp.eq.s32.totalorder %s27, 0
    %p159 = por %p157, %p158
    %s161 = sadd.s32 %s160, 1
    %p164 = scmp.eq.s32.totalorder %s21, 1
    %p165 = scmp.ne.s32.totalorder %s160, %s162
    %p166 = scmp.eq.s32.totalorder %s21, 0
    %p167 = por %p165, %p166
    %p168 = scmp.ne.s32.totalorder %s160, %s162
    %p169 = scmp.eq.s32.totalorder %s26, 1
    %p170 = por %p168, %p169
    %p171 = scmp.ne.s32.totalorder %s162, %s163
    %p172 = scmp.eq.s32.totalorder %s26, 0
    %p173 = por %p171, %p172
    %p174 = scmp.ne.s32.totalorder %s162, %s163
    %p175 = scmp.eq.s32.totalorder %s27, 1
    %p176 = por %p174, %p175
    %p178 = scmp.ne.s32.totalorder %s163, %s177
    %p179 = scmp.eq.s32.totalorder %s27, 0
    %p180 = por %p178, %p179
    %s182 = sadd.s32 %s181, 1
    %p185 = scmp.eq.s32.totalorder %s21, 1
    %p186 = scmp.ne.s32.totalorder %s181, %s183
    %p187 = scmp.eq.s32.totalorder %s21, 0
    %p188 = por %p186, %p187
    %p189 = scmp.ne.s32.totalorder %s181, %s183
    %p190 = scmp.eq.s32.totalorder %s26, 1
    %p191 = por %p189, %p190
    %p192 = scmp.ne.s32.totalorder %s183, %s184
    %p193 = scmp.eq.s32.totalorder %s26, 0
    %p194 = por %p192, %p193
    %p195 = scmp.ne.s32.totalorder %s183, %s184
    %p196 = scmp.eq.s32.totalorder %s27, 1
    %p197 = por %p195, %p196
    %p199 = scmp.ne.s32.totalorder %s184, %s198
    %p200 = scmp.eq.s32.totalorder %s27, 0
    %p201 = por %p199, %p200
    %s203 = sadd.s32 %s202, 1
    %p206 = scmp.eq.s32.totalorder %s21, 1
    %p207 = scmp.ne.s32.totalorder %s202, %s204
    %p208 = scmp.eq.s32.totalorder %s21, 0
    %p209 = por %p207, %p208
    %p210 = scmp.ne.s32.totalorder %s202, %s204
    %p211 = scmp.eq.s32.totalorder %s26, 1
    %p212 = por %p210, %p211
    %p213 = scmp.ne.s32.totalorder %s204, %s205
    %p214 = scmp.eq.s32.totalorder %s26, 0
    %p215 = por %p213, %p214
    %p216 = scmp.ne.s32.totalorder %s204, %s205
    %p217 = scmp.eq.s32.totalorder %s27, 1
    %p218 = por %p216, %p217
    %p220 = scmp.ne.s32.totalorder %s205, %s219
    %p221 = scmp.eq.s32.totalorder %s27, 0
    %p222 = por %p220, %p221
    %s224 = sadd.s32 %s223, 1
    %p227 = scmp.eq.s32.totalorder %s21, 1
    %p228 = scmp.ne.s32.totalorder %s223, %s225
    %p229 = scmp.eq.s32.totalorder %s21, 0
    %p230 = por %p228, %p229
    %p231 = scmp.ne.s32.totalorder %s223, %s225
    %p232 = scmp.eq.s32.totalorder %s26, 1
    %p233 = por %p231, %p232
    %p234 = scmp.ne.s32.totalorder %s225, %s226
    %p235 = scmp.eq.s32.totalorder %s26, 0
    %p236 = por %p234, %p235
    %p237 = scmp.ne.s32.totalorder %s225, %s226
    %p238 = scmp.eq.s32.totalorder %s27, 1
    %p239 = por %p237, %p238
    %p241 = scmp.ne.s32.totalorder %s226, %s240
    %p242 = scmp.eq.s32.totalorder %s27, 0
    %p243 = por %p241, %p242
    %s245 = sadd.s32 %s244, 1
    %p248 = scmp.eq.s32.totalorder %s21, 1
    %p249 = scmp.ne.s32.totalorder %s244, %s246
    %p250 = scmp.eq.s32.totalorder %s21, 0
    %p251 = por %p249, %p250
    %p252 = scmp.ne.s32.totalorder %s244, %s246
    %p253 = scmp.eq.s32.totalorder %s26, 1
    %p254 = por %p252, %p253
    %p255 = scmp.ne.s32.totalorder %s246, %s247
    %p256 = scmp.eq.s32.totalorder %s26, 0
    %p257 = por %p255, %p256
    %p258 = scmp.ne.s32.totalorder %s246, %s247
    %p259 = scmp.eq.s32.totalorder %s27, 1
    %p260 = por %p258, %p259
    %p262 = scmp.ne.s32.totalorder %s247, %s261
    %p263 = scmp.eq.s32.totalorder %s27, 0
    %p264 = por %p262, %p263
    %s266 = sadd.s32 %s265, 1
    %p269 = scmp.eq.s32.totalorder %s21, 1
    %p270 = scmp.ne.s32.totalorder %s265, %s267
    %p271 = scmp.eq.s32.totalorder %s21, 0
    %p272 = por %p270, %p271
    %p273 = scmp.ne.s32.totalorder %s265, %s267
    %p274 = scmp.eq.s32.totalorder %s26, 1
    %p275 = por %p273, %p274
    %p276 = scmp.ne.s32.totalorder %s267, %s268
    %p277 = scmp.eq.s32.totalorder %s26, 0
    %p278 = por %p276, %p277
    %p279 = scmp.ne.s32.totalorder %s267, %s268
    %p280 = scmp.eq.s32.totalorder %s27, 1
    %p281 = por %p279, %p280
    %p283 = scmp.ne.s32.totalorder %s268, %s282
    %p284 = scmp.eq.s32.totalorder %s27, 0
    %p285 = por %p283, %p284
    %s287 = sadd.s32 %s286, 1
    %p290 = scmp.eq.s32.totalorder %s21, 1
    %p291 = scmp.ne.s32.totalorder %s286, %s288
    %p292 = scmp.eq.s32.totalorder %s21, 0
    %p293 = por %p291, %p292
    %p294 = scmp.ne.s32.totalorder %s286, %s288
    %p295 = scmp.eq.s32.totalorder %s26, 1
    %p296 = por %p294, %p295
    %p297 = scmp.ne.s32.totalorder %s288, %s289
    %p298 = scmp.eq.s32.totalorder %s26, 0
    %p299 = por %p297, %p298
    %p300 = scmp.ne.s32.totalorder %s288, %s289
    %p301 = scmp.eq.s32.totalorder %s27, 1
    %p302 = por %p300, %p301
    %p304 = scmp.ne.s32.totalorder %s289, %s303
    %p305 = scmp.eq.s32.totalorder %s27, 0
    %p306 = por %p304, %p305
    %s308 = sadd.s32 %s307, 1
    %p311 = scmp.eq.s32.totalorder %s21, 1
    %p312 = scmp.ne.s32.totalorder %s307, %s309
    %p313 = scmp.eq.s32.totalorder %s21, 0
    %p314 = por %p312, %p313
    %p315 = scmp.ne.s32.totalorder %s307, %s309
    %p316 = scmp.eq.s32.totalorder %s26, 1
    %p317 = por %p315, %p316
    %p318 = scmp.ne.s32.totalorder %s309, %s310
    %p319 = scmp.eq.s32.totalorder %s26, 0
    %p320 = por %p318, %p319
    %p321 = scmp.ne.s32.totalorder %s309, %s310
    %p322 = scmp.eq.s32.totalorder %s27, 1
    %p323 = por %p321, %p322
    %p325 = scmp.ne.s32.totalorder %s310, %s324
    %p326 = scmp.eq.s32.totalorder %s27, 0
    %p327 = por %p325, %p326
    %s329 = sadd.s32 %s328, 1
    %p332 = scmp.eq.s32.totalorder %s21, 1
    %p333 = scmp.ne.s32.totalorder %s328, %s330
    %p334 = scmp.eq.s32.totalorder %s21, 0
    %p335 = por %p333, %p334
    %p336 = scmp.ne.s32.totalorder %s328, %s330
    %p337 = scmp.eq.s32.totalorder %s26, 1
    %p338 = por %p336, %p337
    %p339 = scmp.ne.s32.totalorder %s330, %s331
    %p340 = scmp.eq.s32.totalorder %s26, 0
    %p341 = por %p339, %p340
    %p342 = scmp.ne.s32.totalorder %s330, %s331
    %p343 = scmp.eq.s32.totalorder %s27, 1
    %p344 = por %p342, %p343
    %p346 = scmp.ne.s32.totalorder %s331, %s345
    %p347 = scmp.eq.s32.totalorder %s27, 0
    %p348 = por %p346, %p347
    %s349 = ssub.s32 %s21, %s28
    %p350 = scmp.eq.s32.totalorder %s349, 0
    %s352 = sadd.s32 %s351, 1
    %s353 = scalar_select %p350, %s351, %s352
    %p356 = pneg %p350
    %p357 = scmp.eq.s32.totalorder %s21, 1
    %p358 = por %p356, %p357
    %p359 = scmp.ne.s32.totalorder %s351, %s354
    %p360 = scmp.eq.s32.totalorder %s21, 0
    %p361 = por %p359, %p360
    %p362 = scmp.ne.s32.totalorder %s351, %s354
    %p363 = scmp.eq.s32.totalorder %s26, 1
    %p364 = por %p362, %p363
    %p365 = scmp.ne.s32.totalorder %s354, %s355
    %p366 = scmp.eq.s32.totalorder %s26, 0
    %p367 = por %p365, %p366
    %p368 = scmp.ne.s32.totalorder %s354, %s355
    %p369 = scmp.eq.s32.totalorder %s27, 1
    %p370 = por %p368, %p369
    %p372 = scmp.ne.s32.totalorder %s355, %s371
    %p373 = scmp.eq.s32.totalorder %s27, 0
    %p374 = por %p372, %p373
    %p375 = scmp.le.s32.totalorder 1, %s21
    %p376 = scmp.lt.s32.totalorder %s21, 3
    %p377 = pnand %p375, %p376
    %p378 = pneg %p377
    // Predicated region
    $region9: #{tinycnn_forward.1} parent=5 // pred_check
      _
    $region10: #{tinycnn_forward.1} parent=5 // pred_check_branch
      %380 = sbr.rel (%p377) target = $region12
    $region11: #{tinycnn_forward.1} parent=5 // pred_region
      %s381 = ssub.s32 %s21, 1
      // Predicated region
      $region13: #{tinycnn_forward.1} parent=11 // pred_check
        %p382 = pneg %p68
      $region14: #{tinycnn_forward.1} parent=11 // pred_check_branch
        %384 = sbr.rel (%p382) target = $region16
      $region15: #{tinycnn_forward.1} parent=11 // pred_region
        _
      $region16: #{tinycnn_forward.1} parent=11 // pred_fallthru
        _
      // Predicated region
      $region17: #{tinycnn_forward.1} parent=11 // pred_check
        %p385 = pneg %p89
      $region18: #{tinycnn_forward.1} parent=11 // pred_check_branch
        %387 = sbr.rel (%p385) target = $region20
      $region19: #{tinycnn_forward.1} parent=11 // pred_region
        _
      $region20: #{tinycnn_forward.1} parent=11 // pred_fallthru
        _
      // Predicated region
      $region21: #{tinycnn_forward.1} parent=11 // pred_check
        %p388 = pneg %p110
      $region22: #{tinycnn_forward.1} parent=11 // pred_check_branch
        %390 = sbr.rel (%p388) target = $region24
      $region23: #{tinycnn_forward.1} parent=11 // pred_region
        _
      $region24: #{tinycnn_forward.1} parent=11 // pred_fallthru
        _
      // Predicated region
      $region25: #{tinycnn_forward.1} parent=11 // pred_check
        %p391 = pneg %p131
      $region26: #{tinycnn_forward.1} parent=11 // pred_check_branch
        %393 = sbr.rel (%p391) target = $region28
      $region27: #{tinycnn_forward.1} parent=11 // pred_region
        _
      $region28: #{tinycnn_forward.1} parent=11 // pred_fallthru
        _
      // Predicated region
      $region29: #{tinycnn_forward.1} parent=11 // pred_check
        %p394 = pneg %p152
      $region30: #{tinycnn_forward.1} parent=11 // pred_check_branch
        %396 = sbr.rel (%p394) target = $region32
      $region31: #{tinycnn_forward.1} parent=11 // pred_region
        _
      $region32: #{tinycnn_forward.1} parent=11 // pred_fallthru
        _
      // Predicated region
      $region33: #{tinycnn_forward.1} parent=11 // pred_check
        %p397 = pneg %p173
      $region34: #{tinycnn_forward.1} parent=11 // pred_check_branch
        %399 = sbr.rel (%p397) target = $region36
      $region35: #{tinycnn_forward.1} parent=11 // pred_region
        _
      $region36: #{tinycnn_forward.1} parent=11 // pred_fallthru
        _
      // Predicated region
      $region37: #{tinycnn_forward.1} parent=11 // pred_check
        %p400 = pneg %p194
      $region38: #{tinycnn_forward.1} parent=11 // pred_check_branch
        %402 = sbr.rel (%p400) target = $region40
      $region39: #{tinycnn_forward.1} parent=11 // pred_region
        _
      $region40: #{tinycnn_forward.1} parent=11 // pred_fallthru
        _
      // Predicated region
      $region41: #{tinycnn_forward.1} parent=11 // pred_check
        %p403 = pneg %p215
      $region42: #{tinycnn_forward.1} parent=11 // pred_check_branch
        %405 = sbr.rel (%p403) target = $region44
      $region43: #{tinycnn_forward.1} parent=11 // pred_region
        _
      $region44: #{tinycnn_forward.1} parent=11 // pred_fallthru
        _
      // Predicated region
      $region45: #{tinycnn_forward.1} parent=11 // pred_check
        %p406 = pneg %p236
      $region46: #{tinycnn_forward.1} parent=11 // pred_check_branch
        %408 = sbr.rel (%p406) target = $region48
      $region47: #{tinycnn_forward.1} parent=11 // pred_region
        _
      $region48: #{tinycnn_forward.1} parent=11 // pred_fallthru
        _
      // Predicated region
      $region49: #{tinycnn_forward.1} parent=11 // pred_check
        %p409 = pneg %p257
      $region50: #{tinycnn_forward.1} parent=11 // pred_check_branch
        %411 = sbr.rel (%p409) target = $region52
      $region51: #{tinycnn_forward.1} parent=11 // pred_region
        _
      $region52: #{tinycnn_forward.1} parent=11 // pred_fallthru
        _
      // Predicated region
      $region53: #{tinycnn_forward.1} parent=11 // pred_check
        %p412 = pneg %p278
      $region54: #{tinycnn_forward.1} parent=11 // pred_check_branch
        %414 = sbr.rel (%p412) target = $region56
      $region55: #{tinycnn_forward.1} parent=11 // pred_region
        _
      $region56: #{tinycnn_forward.1} parent=11 // pred_fallthru
        _
      // Predicated region
      $region57: #{tinycnn_forward.1} parent=11 // pred_check
        %p415 = pneg %p299
      $region58: #{tinycnn_forward.1} parent=11 // pred_check_branch
        %417 = sbr.rel (%p415) target = $region60
      $region59: #{tinycnn_forward.1} parent=11 // pred_region
        _
      $region60: #{tinycnn_forward.1} parent=11 // pred_fallthru
        _
      // Predicated region
      $region61: #{tinycnn_forward.1} parent=11 // pred_check
        %p418 = pneg %p320
      $region62: #{tinycnn_forward.1} parent=11 // pred_check_branch
        %420 = sbr.rel (%p418) target = $region64
      $region63: #{tinycnn_forward.1} parent=11 // pred_region
        _
      $region64: #{tinycnn_forward.1} parent=11 // pred_fallthru
        _
      // Predicated region
      $region65: #{tinycnn_forward.1} parent=11 // pred_check
        %p421 = pneg %p341
      $region66: #{tinycnn_forward.1} parent=11 // pred_check_branch
        %423 = sbr.rel (%p421) target = $region68
      $region67: #{tinycnn_forward.1} parent=11 // pred_region
        _
      $region68: #{tinycnn_forward.1} parent=11 // pred_fallthru
        _
    $region12: #{tinycnn_forward.1} parent=5 // pred_fallthru
      _
    %p424 = scmp.lt.s32.totalorder %s21, 2
    // Predicated region
    $region69: #{tinycnn_forward.1} parent=5 // pred_check
      %p425 = pneg %p424
    $region70: #{tinycnn_forward.1} parent=5 // pred_check_branch
      %427 = sbr.rel (%p425) target = $region72
    $region71: #{tinycnn_forward.1} parent=5 // pred_region
      // Predicated region
      $region73: #{tinycnn_forward.1} parent=71 // pred_check
        %p428 = pneg %p41
      $region74: #{tinycnn_forward.1} parent=71 // pred_check_branch
        %430 = sbr.rel (%p428) target = $region76
      $region75: #{tinycnn_forward.1} parent=71 // pred_region
        %p431 = scmp.lt.s32.totalorder %s21, 1
        %s432 = scalar_select %p431, %s21, 1
        %s433 = smul.addr %s432, 192
        %s434 = smul.addr %s433, 8
        %s435 = scalar_lea.vmem %s0, %s434
      $region76: #{tinycnn_forward.1} parent=71 // pred_fallthru
        _
    $region72: #{tinycnn_forward.1} parent=5 // pred_fallthru
      _
    %p436 = scmp.le.s32.totalorder 1, %s21
    %p437 = scmp.lt.s32.totalorder %s21, 3
    %p438 = pnand %p436, %p437
    %p439 = pneg %p438
    // Predicated region
    $region77: #{tinycnn_forward.1} parent=5 // pred_check
      _
    $region78: #{tinycnn_forward.1} parent=5 // pred_check_branch
      %441 = sbr.rel (%p438) target = $region80
    $region79: #{tinycnn_forward.1} parent=5 // pred_region
      %s442 = ssub.s32 %s21, 1
      %p443 = scmp.lt.s32.totalorder %s26, 1
      %s444 = scalar_select %p443, %s26, 1
      %s445 = smul.addr %s444, 192
      %s446 = smul.addr %s445, 8
      %s447 = scalar_lea.vmem %s0, %s446
      %p448 = pneg %p47
      %p449 = pneg %p44
      %p450 = pneg %p68
      %p451 = pneg %p65
      %p452 = pneg %p89
      %p453 = pneg %p86
      %p454 = pneg %p110
      %p455 = pneg %p107
      %p456 = pneg %p131
      %p457 = pneg %p128
      %p458 = pneg %p152
      %p459 = pneg %p149
      %p460 = pneg %p173
      %p461 = pneg %p170
      %p462 = pneg %p194
      %p463 = pneg %p191
      %p464 = pneg %p215
      %p465 = pneg %p212
      %p466 = pneg %p236
      %p467 = pneg %p233
      %p468 = pneg %p257
      %p469 = pneg %p254
      %p470 = pneg %p278
      %p471 = pneg %p275
      %p472 = pneg %p299
      %p473 = pneg %p296
      %p474 = pneg %p320
      %p475 = pneg %p317
      %p476 = pneg %p341
      %p477 = pneg %p338
      %p478 = pneg %p367
      %p479 = pneg %p364
      %p480 = scmp.lt.s32.totalorder %s26, 1
      %s481 = scalar_select %p480, %s26, 1
      %s482 = smul.addr %s481, 2
      %s483 = scalar_lea.vmem %s15, %s482
      %p484 = scmp.lt.s32.totalorder %s26, 1
      %s485 = scalar_select %p484, %s26, 1
      %s486 = smul.addr %s485, 192
      %s487 = smul.addr %s486, 8
      %s488 = scalar_lea.vmem %s0, %s487
      %p489 = scmp.lt.s32.totalorder %s26, 1
      %s490 = scalar_select %p489, %s26, 1
      %s491 = smul.addr %s490, 2
      %s492 = scalar_lea.vmem %s15, %s491
      %v493 = vld [vmem:[%s1] sm:$0xff]
      %v494 = vld [vmem:[%s1 + $0x8] sm:$0xff]
      %v495 = vld [vmem:[%s1 + $0x10] sm:$0xff]
      %v496 = vld [vmem:[%s1 + $0x18] sm:$0xff]
      %v497 = vld [vmem:[%s1 + $0x20] sm:$0xff]
      %v498 = vld [vmem:[%s1 + $0x28] sm:$0xff]
      %v499 = vld [vmem:[%s1 + $0x30] sm:$0xff]
      %v500 = vld [vmem:[%s1 + $0x38] sm:$0xff]
      %v501 = vld [vmem:[%s1 + $0x40] sm:$0xff]
      %v502 = vld [vmem:[%s1 + $0x48] sm:$0xff]
      %v503 = vld [vmem:[%s1 + $0x50] sm:$0xff]
      %v504 = vld [vmem:[%s1 + $0x58] sm:$0xff]
      %v505 = vld [vmem:[%s1 + $0x60] sm:$0xff]
      %v506 = vld [vmem:[%s1 + $0x68] sm:$0xff]
      %v507 = vld [vmem:[%s1 + $0x70] sm:$0xff]
      %v508 = vld [vmem:[%s1 + $0x78] sm:$0xff]
      %v509 = vld [vmem:[%s1 + $0x80] sm:$0xff]
      %v510 = vld [vmem:[%s1 + $0x88] sm:$0xff]
      %v511 = vld [vmem:[%s1 + $0x90] sm:$0xff]
      %v512 = vld [vmem:[%s1 + $0x98] sm:$0xff]
      %v513 = vld [vmem:[%s1 + $0xa0] sm:$0xff]
      %v514 = vld [vmem:[%s1 + $0xa8] sm:$0xff]
      %v515 = vld [vmem:[%s1 + $0xb0] sm:$0xff]
      %v516 = vld [vmem:[%s1 + $0xb8] sm:$0xff]
      %v517 = vld [vmem:[%s1 + $0xc0] sm:$0xff]
      %v518 = vld [vmem:[%s1 + $0xc8] sm:$0xff]
      %v519 = vld [vmem:[%s1 + $0xd0] sm:$0xff]
      %v520 = vld [vmem:[%s1 + $0xd8] sm:$0xff]
      %v521 = vld [vmem:[%s1 + $0xe0] sm:$0xff]
      %v522 = vld [vmem:[%s1 + $0xe8] sm:$0xff]
      %v523 = vld [vmem:[%s1 + $0xf0] sm:$0xff]
      %v524 = vld [vmem:[%s1 + $0xf8] sm:$0xff]
      %v525 = vld [vmem:[%s2] sm:$0xff]
      %v526 = vld [vmem:[%s2 + $0x8] sm:$0xff]
      %v527 = vld [vmem:[%s2 + $0x10] sm:$0xff]
      %v528 = vld [vmem:[%s2 + $0x18] sm:$0xff]
      %v529 = vld [vmem:[%s2 + $0x20] sm:$0xff]
      %v530 = vld [vmem:[%s2 + $0x28] sm:$0xff]
      %v531 = vld [vmem:[%s2 + $0x30] sm:$0xff]
      %v532 = vld [vmem:[%s2 + $0x38] sm:$0xff]
      %v533 = vld [vmem:[%s2 + $0x40] sm:$0xff]
      %v534 = vld [vmem:[%s2 + $0x48] sm:$0xff]
      %v535 = vld [vmem:[%s2 + $0x50] sm:$0xff]
      %v536 = vld [vmem:[%s2 + $0x58] sm:$0xff]
      %v537 = vld [vmem:[%s2 + $0x60] sm:$0xff]
      %v538 = vld [vmem:[%s2 + $0x68] sm:$0xff]
      %v539 = vld [vmem:[%s2 + $0x70] sm:$0xff]
      %v540 = vld [vmem:[%s2 + $0x78] sm:$0xff]
      %v541 = vld [vmem:[%s2 + $0x80] sm:$0xff]
      %v542 = vld [vmem:[%s2 + $0x88] sm:$0xff]
      %v543 = vld [vmem:[%s2 + $0x90] sm:$0xff]
      %v544 = vld [vmem:[%s2 + $0x98] sm:$0xff]
      %v545 = vld [vmem:[%s2 + $0xa0] sm:$0xff]
      %v546 = vld [vmem:[%s2 + $0xa8] sm:$0xff]
      %v547 = vld [vmem:[%s2 + $0xb0] sm:$0xff]
      %v548 = vld [vmem:[%s2 + $0xb8] sm:$0xff]
      %v549 = vld [vmem:[%s488] sm:$0xff]
      %v550 = vld [vmem:[%s488 + $0x8] sm:$0xff]
      %v551 = vld [vmem:[%s488 + $0x10] sm:$0xff]
      %v552 = vld [vmem:[%s488 + $0x18] sm:$0xff]
      %v553 = vld [vmem:[%s488 + $0x20] sm:$0xff]
      %v554 = vld [vmem:[%s488 + $0x28] sm:$0xff]
      %v555 = vld [vmem:[%s488 + $0x30] sm:$0xff]
      %v556 = vld [vmem:[%s488 + $0x38] sm:$0xff]
      %v557 = vld [vmem:[%s488 + $0x40] sm:$0xff]
      %v558 = vld [vmem:[%s488 + $0x48] sm:$0xff]
      %v559 = vld [vmem:[%s488 + $0x50] sm:$0xff]
      %v560 = vld [vmem:[%s488 + $0x58] sm:$0xff]
      %v561 = vld [vmem:[%s488 + $0x60] sm:$0xff]
      %v562 = vld [vmem:[%s488 + $0x68] sm:$0xff]
      %v563 = vld [vmem:[%s488 + $0x70] sm:$0xff]
      %v564 = vld [vmem:[%s488 + $0x78] sm:$0xff]
      %v565 = vld [vmem:[%s488 + $0x80] sm:$0xff]
      %v566 = vld [vmem:[%s488 + $0x88] sm:$0xff]
      %v567 = vld [vmem:[%s488 + $0x90] sm:$0xff]
      %v568 = vld [vmem:[%s488 + $0x98] sm:$0xff]
      %v569 = vld [vmem:[%s488 + $0xa0] sm:$0xff]
      %v570 = vld [vmem:[%s488 + $0xa8] sm:$0xff]
      %v571 = vld [vmem:[%s488 + $0xb0] sm:$0xff]
      %v572 = vld [vmem:[%s488 + $0xb8] sm:$0xff]
      %v573 = vld [vmem:[%s488 + $0xc0] sm:$0xff]
      %v574 = vld [vmem:[%s488 + $0xc8] sm:$0xff]
      %v575 = vld [vmem:[%s488 + $0xd0] sm:$0xff]
      %v576 = vld [vmem:[%s488 + $0xd8] sm:$0xff]
      %v577 = vld [vmem:[%s488 + $0xe0] sm:$0xff]
      %v578 = vld [vmem:[%s488 + $0xe8] sm:$0xff]
      %v579 = vld [vmem:[%s488 + $0xf0] sm:$0xff]
      %v580 = vld [vmem:[%s488 + $0xf8] sm:$0xff]
      %v581 = vld [vmem:[%s488 + $0x100] sm:$0xff]
      %v582 = vld [vmem:[%s488 + $0x108] sm:$0xff]
      %v583 = vld [vmem:[%s488 + $0x110] sm:$0xff]
      %v584 = vld [vmem:[%s488 + $0x118] sm:$0xff]
      %v585 = vld [vmem:[%s488 + $0x120] sm:$0xff]
      %v586 = vld [vmem:[%s488 + $0x128] sm:$0xff]
      %v587 = vld [vmem:[%s488 + $0x130] sm:$0xff]
      %v588 = vld [vmem:[%s488 + $0x138] sm:$0xff]
      %v589 = vld [vmem:[%s488 + $0x140] sm:$0xff]
      %v590 = vld [vmem:[%s488 + $0x148] sm:$0xff]
      %v591 = vld [vmem:[%s488 + $0x150] sm:$0xff]
      %v592 = vld [vmem:[%s488 + $0x158] sm:$0xff]
      %v593 = vld [vmem:[%s488 + $0x160] sm:$0xff]
      %v594 = vld [vmem:[%s488 + $0x168] sm:$0xff]
      %v595 = vld [vmem:[%s488 + $0x170] sm:$0xff]
      %v596 = vld [vmem:[%s488 + $0x178] sm:$0xff]
      %v597 = vld [vmem:[%s488 + $0x180] sm:$0xff]
      %v598 = vld [vmem:[%s488 + $0x188] sm:$0xff]
      %v599 = vld [vmem:[%s488 + $0x190] sm:$0xff]
      %v600 = vld [vmem:[%s488 + $0x198] sm:$0xff]
      %v601 = vld [vmem:[%s488 + $0x1a0] sm:$0xff]
      %v602 = vld [vmem:[%s488 + $0x1a8] sm:$0xff]
      %v603 = vld [vmem:[%s488 + $0x1b0] sm:$0xff]
      %v604 = vld [vmem:[%s488 + $0x1b8] sm:$0xff]
      %v605 = vld [vmem:[%s488 + $0x1c0] sm:$0xff]
      %v606 = vld [vmem:[%s488 + $0x1c8] sm:$0xff]
      %v607 = vld [vmem:[%s488 + $0x1d0] sm:$0xff]
      %v608 = vld [vmem:[%s488 + $0x1d8] sm:$0xff]
      %v609 = vld [vmem:[%s488 + $0x1e0] sm:$0xff]
      %v610 = vld [vmem:[%s488 + $0x1e8] sm:$0xff]
      %v611 = vld [vmem:[%s488 + $0x1f0] sm:$0xff]
      %v612 = vld [vmem:[%s488 + $0x1f8] sm:$0xff]
      %613 = vmatprep.subr.mxu0 0.0
      %614 = vmatpush1.msra.mxu0 %v493
      %615 = vmatprep.subr.mxu0 0.0
      %616 = vmatpush1.msra.mxu0 %v494
      %617 = vmatprep.subr.mxu0 0.0
      %618 = vmatpush1.msra.mxu0 %v495
      %619 = vmatprep.subr.mxu0 0.0
      %620 = vmatpush1.msra.mxu0 %v496
      %621 = vmatprep.subr.mxu0 0.0
      %622 = vmatpush1.msra.mxu0 %v497
      %623 = vmatprep.subr.mxu0 0.0
      %624 = vmatpush1.msra.mxu0 %v498
      %625 = vmatprep.subr.mxu0 0.0
      %626 = vmatpush1.msra.mxu0 %v499
      %627 = vmatprep.subr.mxu0 0.0
      %628 = vmatpush1.msra.mxu0 %v500
      %629 = vmatprep.subr.mxu0 0.0
      %630 = vmatpush1.msra.mxu0 %v501
      %631 = vmatprep.subr.mxu0 0.0
      %632 = vmatpush1.msra.mxu0 %v502
      %633 = vmatprep.subr.mxu0 0.0
      %634 = vmatpush1.msra.mxu0 %v503
      %635 = vmatprep.subr.mxu0 0.0
      %636 = vmatpush1.msra.mxu0 %v504
      %637 = vmatprep.subr.mxu0 0.0
      %638 = vmatpush1.msra.mxu0 %v505
      %639 = vmatprep.subr.mxu0 0.0
      %640 = vmatpush1.msra.mxu0 %v506
      %641 = vmatprep.subr.mxu0 0.0
      %642 = vmatpush1.msra.mxu0 %v507
      %643 = vmatprep.subr.mxu0 0.0
      %644 = vmatpush1.msra.mxu0 %v508
      %645 = vmatprep.subr.mxu0 0.0
      %646 = vmatpush1.msra.mxu0 %v509
      %647 = vmatprep.subr.mxu0 0.0
      %648 = vmatpush1.msra.mxu0 %v510
      %649 = vmatprep.subr.mxu0 0.0
      %650 = vmatpush1.msra.mxu0 %v511
      %651 = vmatprep.subr.mxu0 0.0
      %652 = vmatpush1.msra.mxu0 %v512
      %653 = vmatprep.subr.mxu0 0.0
      %654 = vmatpush1.msra.mxu0 %v513
      %655 = vmatprep.subr.mxu0 0.0
      %656 = vmatpush1.msra.mxu0 %v514
      %657 = vmatprep.subr.mxu0 0.0
      %658 = vmatpush1.msra.mxu0 %v515
      %659 = vmatprep.subr.mxu0 0.0
      %660 = vmatpush1.msra.mxu0 %v516
      %661 = vmatprep.subr.mxu0 0.0
      %662 = vmatpush1.msra.mxu0 %v517
      %663 = vmatprep.subr.mxu0 0.0
      %664 = vmatpush1.msra.mxu0 %v518
      %665 = vmatprep.subr.mxu0 0.0
      %666 = vmatpush1.msra.mxu0 %v519
      %667 = vmatprep.subr.mxu0 0.0
      %668 = vmatpush1.msra.mxu0 %v520
      %669 = vmatprep.subr.mxu0 0.0
      %670 = vmatpush1.msra.mxu0 %v521
      %671 = vmatprep.subr.mxu0 0.0
      %672 = vmatpush1.msra.mxu0 %v522
      %673 = vmatprep.subr.mxu0 0.0
      %674 = vmatpush1.msra.mxu0 %v523
      %675 = vmatprep.subr.mxu0 0.0
      %676 = vmatpush1.msra.mxu0 %v524
      %677 = vmatprep.mubr.f32.mxu0 %v550
      %678 = vmatmul.mubr.f32.gmra.mrb[0].mxu0 %v549
      %v679 = vpop.f32.mrb[0].mxu0
      %v680 = vadd.f32 0.0, %v679
      %v681 = vpop.f32.mrb[0].mxu0
      %682 = vmatprep.mubr.f32.mxu0 %v552
      %683 = vmatmul.mubr.f32.gmra.mrb[0].mxu0 %v551
      %v684 = vpop.f32.mrb[0].mxu0
      %v685 = vadd.f32 0.0, %v684
      %v686 = vpop.f32.mrb[0].mxu0
      %687 = vmatprep.mubr.f32.mxu0 %v554
      %688 = vmatmul.mubr.f32.gmra.mrb[0].mxu0 %v553
      %v689 = vpop.f32.mrb[0].mxu0
      %v690 = vadd.f32 0.0, %v689
      %v691 = vpop.f32.mrb[0].mxu0
      %692 = vmatprep.mubr.f32.mxu0 %v556
      %693 = vmatmul.mubr.f32.gmra.mrb[0].mxu0 %v555
      %v694 = vpop.f32.mrb[0].mxu0
      %v695 = vadd.f32 0.0, %v694
      %v696 = vpop.f32.mrb[0].mxu0
      %697 = vmatprep.mubr.f32.mxu0 %v558
      %698 = vmatmul.mubr.f32.gmra.mrb[0].mxu0 %v557
      %v699 = vpop.f32.mrb[0].mxu0
      %v700 = vadd.f32 0.0, %v699
      %v701 = vpop.f32.mrb[0].mxu0
      %702 = vmatprep.mubr.f32.mxu0 %v560
      %703 = vmatmul.mubr.f32.gmra.mrb[0].mxu0 %v559
      %v704 = vpop.f32.mrb[0].mxu0
      %v705 = vadd.f32 0.0, %v704
      %v706 = vpop.f32.mrb[0].mxu0
      %707 = vmatprep.mubr.f32.mxu0 %v562
      %708 = vmatmul.mubr.f32.gmra.mrb[0].mxu0 %v561
      %v709 = vpop.f32.mrb[0].mxu0
      %v710 = vadd.f32 0.0, %v709
      %v711 = vpop.f32.mrb[0].mxu0
      %712 = vmatprep.mubr.f32.mxu0 %v564
      %713 = vmatmul.mubr.f32.gmra.mrb[0].mxu0 %v563
      %v714 = vpop.f32.mrb[0].mxu0
      %v715 = vadd.f32 0.0, %v714
      %v716 = vpop.f32.mrb[0].mxu0
      %717 = vmatprep.mubr.f32.mxu0 %v566
      %718 = vmatmul.mubr.f32.gmra.mrb[0].mxu0 %v565
      %v719 = vpop.f32.mrb[0].mxu0
      %v720 = vadd.f32 0.0, %v719
      %v721 = vpop.f32.mrb[0].mxu0
      %722 = vmatprep.mubr.f32.mxu0 %v568
      %723 = vmatmul.mubr.f32.gmra.mrb[0].mxu0 %v567
      %v724 = vpop.f32.mrb[0].mxu0
      %v725 = vadd.f32 0.0, %v724
      %v726 = vpop.f32.mrb[0].mxu0
      %727 = vmatprep.mubr.f32.mxu0 %v570
      %728 = vmatmul.mubr.f32.gmra.mrb[0].mxu0 %v569
      %v729 = vpop.f32.mrb[0].mxu0
      %v730 = vadd.f32 0.0, %v729
      %v731 = vpop.f32.mrb[0].mxu0
      %732 = vmatprep.mubr.f32.mxu0 %v572
      %733 = vmatmul.mubr.f32.gmra.mrb[0].mxu0 %v571
      %v734 = vpop.f32.mrb[0].mxu0
      %v735 = vadd.f32 0.0, %v734
      %v736 = vpop.f32.mrb[0].mxu0
      %737 = vmatprep.mubr.f32.mxu0 %v574
      %738 = vmatmul.mubr.f32.gmra.mrb[0].mxu0 %v573
      %v739 = vpop.f32.mrb[0].mxu0
      %v740 = vadd.f32 0.0, %v739
      %v741 = vpop.f32.mrb[0].mxu0
      %742 = vmatprep.mubr.f32.mxu0 %v576
      %743 = vmatmul.mubr.f32.gmra.mrb[0].mxu0 %v575
      %v744 = vpop.f32.mrb[0].mxu0
      %v745 = vadd.f32 0.0, %v744
      %v746 = vpop.f32.mrb[0].mxu0
      %747 = vmatprep.mubr.f32.mxu0 %v578
      %748 = vmatmul.mubr.f32.gmra.mrb[0].mxu0 %v577
      %v749 = vpop.f32.mrb[0].mxu0
      %v750 = vadd.f32 0.0, %v749
      %v751 = vpop.f32.mrb[0].mxu0
      %752 = vmatprep.mubr.f32.mxu0 %v580
      %753 = vmatmul.mubr.f32.gmra.mrb[0].mxu0 %v579
      %v754 = vpop.f32.mrb[0].mxu0
      %v755 = vadd.f32 0.0, %v754
      %v756 = vpop.f32.mrb[0].mxu0
      %757 = vmatprep.mubr.f32.mxu0 %v582
      %758 = vmatmul.mubr.f32.gmra.mrb[0].mxu0 %v581
      %v759 = vpop.f32.mrb[0].mxu0
      %v760 = vadd.f32 0.0, %v759
      %v761 = vpop.f32.mrb[0].mxu0
      %762 = vmatprep.mubr.f32.mxu0 %v584
      %763 = vmatmul.mubr.f32.gmra.mrb[0].mxu0 %v583
      %v764 = vpop.f32.mrb[0].mxu0
      %v765 = vadd.f32 0.0, %v764
      %v766 = vpop.f32.mrb[0].mxu0
      %767 = vmatprep.mubr.f32.mxu0 %v586
      %768 = vmatmul.mubr.f32.gmra.mrb[0].mxu0 %v585
      %v769 = vpop.f32.mrb[0].mxu0
      %v770 = vadd.f32 0.0, %v769
      %v771 = vpop.f32.mrb[0].mxu0
      %772 = vmatprep.mubr.f32.mxu0 %v588
      %773 = vmatmul.mubr.f32.gmra.mrb[0].mxu0 %v587
      %v774 = vpop.f32.mrb[0].mxu0
      %v775 = vadd.f32 0.0, %v774
      %v776 = vpop.f32.mrb[0].mxu0
      %777 = vmatprep.mubr.f32.mxu0 %v590
      %778 = vmatmul.mubr.f32.gmra.mrb[0].mxu0 %v589
      %v779 = vpop.f32.mrb[0].mxu0
      %v780 = vadd.f32 0.0, %v779
      %v781 = vpop.f32.mrb[0].mxu0
      %782 = vmatprep.mubr.f32.mxu0 %v592
      %783 = vmatmul.mubr.f32.gmra.mrb[0].mxu0 %v591
      %v784 = vpop.f32.mrb[0].mxu0
      %v785 = vadd.f32 0.0, %v784
      %v786 = vpop.f32.mrb[0].mxu0
      %787 = vmatprep.mubr.f32.mxu0 %v594
      %788 = vmatmul.mubr.f32.gmra.mrb[0].mxu0 %v593
      %v789 = vpop.f32.mrb[0].mxu0
      %v790 = vadd.f32 0.0, %v789
      %v791 = vpop.f32.mrb[0].mxu0
      %792 = vmatprep.mubr.f32.mxu0 %v596
      %793 = vmatmul.mubr.f32.gmra.mrb[0].mxu0 %v595
      %v794 = vpop.f32.mrb[0].mxu0
      %v795 = vadd.f32 0.0, %v794
      %v796 = vpop.f32.mrb[0].mxu0
      %797 = vmatprep.mubr.f32.mxu0 %v598
      %798 = vmatmul.mubr.f32.gmra.mrb[0].mxu0 %v597
      %v799 = vpop.f32.mrb[0].mxu0
      %v800 = vadd.f32 0.0, %v799
      %v801 = vpop.f32.mrb[0].mxu0
      %802 = vmatprep.mubr.f32.mxu0 %v600
      %803 = vmatmul.mubr.f32.gmra.mrb[0].mxu0 %v599
      %v804 = vpop.f32.mrb[0].mxu0
      %v805 = vadd.f32 0.0, %v804
      %v806 = vpop.f32.mrb[0].mxu0
      %807 = vmatprep.mubr.f32.mxu0 %v602
      %808 = vmatmul.mubr.f32.gmra.mrb[0].mxu0 %v601
      %v809 = vpop.f32.mrb[0].mxu0
      %v810 = vadd.f32 0.0, %v809
      %v811 = vpop.f32.mrb[0].mxu0
      %812 = vmatprep.mubr.f32.mxu0 %v604
      %813 = vmatmul.mubr.f32.gmra.mrb[0].mxu0 %v603
      %v814 = vpop.f32.mrb[0].mxu0
      %v815 = vadd.f32 0.0, %v814
      %v816 = vpop.f32.mrb[0].mxu0
      %817 = vmatprep.mubr.f32.mxu0 %v606
      %818 = vmatmul.mubr.f32.gmra.mrb[0].mxu0 %v605
      %v819 = vpop.f32.mrb[0].mxu0
      %v820 = vadd.f32 0.0, %v819
      %v821 = vpop.f32.mrb[0].mxu0
      %822 = vmatprep.mubr.f32.mxu0 %v608
      %823 = vmatmul.mubr.f32.gmra.mrb[0].mxu0 %v607
      %v824 = vpop.f32.mrb[0].mxu0
      %v825 = vadd.f32 0.0, %v824
      %v826 = vpop.f32.mrb[0].mxu0
      %827 = vmatprep.mubr.f32.mxu0 %v610
      %828 = vmatmul.mubr.f32.gmra.mrb[0].mxu0 %v609
      %v829 = vpop.f32.mrb[0].mxu0
      %v830 = vadd.f32 0.0, %v829
      %v831 = vpop.f32.mrb[0].mxu0
      %832 = vmatprep.mubr.f32.mxu0 %v612
      %833 = vmatmul.mubr.f32.gmra.mrb[0].mxu0 %v611
      %v834 = vpop.f32.mrb[0].mxu0
      %v835 = vadd.f32 0.0, %v834
      %v836 = vpop.f32.mrb[0].mxu0
      %837 = vdwg.mxu0
      %838 = vmatprep.subr.mxu0 0.0
      %839 = vmatpush1.msra.mxu0 %v680
      %840 = vmatprep.subr.mxu0 0.0
      %841 = vmatpush1.msra.mxu0 %v685
      %842 = vmatprep.subr.mxu0 0.0
      %843 = vmatpush1.msra.mxu0 %v690
      %844 = vmatprep.subr.mxu0 0.0
      %845 = vmatpush1.msra.mxu0 %v695
      %846 = vmatprep.subr.mxu0 0.0
      %847 = vmatpush1.msra.mxu0 %v700
      %848 = vmatprep.subr.mxu0 0.0
      %849 = vmatpush1.msra.mxu0 %v705
      %850 = vmatprep.subr.mxu0 0.0
      %851 = vmatpush1.msra.mxu0 %v710
      %852 = vmatprep.subr.mxu0 0.0
      %853 = vmatpush1.msra.mxu0 %v715
      %854 = vmatprep.subr.mxu0 0.0
      %855 = vmatpush1.msra.mxu0 %v720
      %856 = vmatprep.subr.mxu0 0.0
      %857 = vmatpush1.msra.mxu0 %v725
      %858 = vmatprep.subr.mxu0 0.0
      %859 = vmatpush1.msra.mxu0 %v730
      %860 = vmatprep.subr.mxu0 0.0
      %861 = vmatpush1.msra.mxu0 %v735
      %862 = vmatprep.subr.mxu0 0.0
      %863 = vmatpush1.msra.mxu0 %v740
      %864 = vmatprep.subr.mxu0 0.0
      %865 = vmatpush1.msra.mxu0 %v745
      %866 = vmatprep.subr.mxu0 0.0
      %867 = vmatpush1.msra.mxu0 %v750
      %868 = vmatprep.subr.mxu0 0.0
      %869 = vmatpush1.msra.mxu0 %v755
      %870 = vmatprep.subr.mxu0 0.0
      %871 = vmatpush1.msra.mxu0 %v760
      %872 = vmatprep.subr.mxu0 0.0
      %873 = vmatpush1.msra.mxu0 %v765
      %874 = vmatprep.subr.mxu0 0.0
      %875 = vmatpush1.msra.mxu0 %v770
      %876 = vmatprep.subr.mxu0 0.0
      %877 = vmatpush1.msra.mxu0 %v775
      %878 = vmatprep.subr.mxu0 0.0
      %879 = vmatpush1.msra.mxu0 %v780
      %880 = vmatprep.subr.mxu0 0.0
      %881 = vmatpush1.msra.mxu0 %v785
      %882 = vmatprep.subr.mxu0 0.0
      %883 = vmatpush1.msra.mxu0 %v790
      %884 = vmatprep.subr.mxu0 0.0
      %885 = vmatpush1.msra.mxu0 %v795
      %886 = vmatprep.subr.mxu0 0.0
      %887 = vmatpush1.msra.mxu0 %v800
      %888 = vmatprep.subr.mxu0 0.0
      %889 = vmatpush1.msra.mxu0 %v805
      %890 = vmatprep.subr.mxu0 0.0
      %891 = vmatpush1.msra.mxu0 %v810
      %892 = vmatprep.subr.mxu0 0.0
      %893 = vmatpush1.msra.mxu0 %v815
      %894 = vmatprep.subr.mxu0 0.0
      %895 = vmatpush1.msra.mxu0 %v820
      %896 = vmatprep.subr.mxu0 0.0
      %897 = vmatpush1.msra.mxu0 %v825
      %898 = vmatprep.subr.mxu0 0.0
      %899 = vmatpush1.msra.mxu0 %v830
      %900 = vmatprep.subr.mxu0 0.0
      %901 = vmatpush1.msra.mxu0 %v835
      %902 = vmatprep.mubr.f32.mxu0 %v526
      %903 = vmatmul.mubr.f32.gmra.mrb[0].mxu0 %v525
      %v904 = vpop.f32.mrb[0].mxu0
      %v905 = vadd.f32 0.0, %v904
      %v906 = vpop.f32.mrb[0].mxu0
      %907 = vmatprep.mubr.f32.mxu0 %v528
      %908 = vmatmul.mubr.f32.gmra.mrb[0].mxu0 %v527
      %v909 = vpop.f32.mrb[0].mxu0
      %v910 = vadd.f32 0.0, %v909
      %v911 = vpop.f32.mrb[0].mxu0
      %912 = vmatprep.mubr.f32.mxu0 %v530
      %913 = vmatmul.mubr.f32.gmra.mrb[0].mxu0 %v529
      %v914 = vpop.f32.mrb[0].mxu0
      %v915 = vadd.f32 0.0, %v914
      %v916 = vpop.f32.mrb[0].mxu0
      %917 = vmatprep.mubr.f32.mxu0 %v532
      %918 = vmatmul.mubr.f32.gmra.mrb[0].mxu0 %v531
      %v919 = vpop.f32.mrb[0].mxu0
      %v920 = vadd.f32 0.0, %v919
      %v921 = vpop.f32.mrb[0].mxu0
      %922 = vmatprep.mubr.f32.mxu0 %v534
      %923 = vmatmul.mubr.f32.gmra.mrb[0].mxu0 %v533
      %v924 = vpop.f32.mrb[0].mxu0
      %v925 = vadd.f32 0.0, %v924
      %v926 = vpop.f32.mrb[0].mxu0
      %927 = vmatprep.mubr.f32.mxu0 %v536
      %928 = vmatmul.mubr.f32.gmra.mrb[0].mxu0 %v535
      %v929 = vpop.f32.mrb[0].mxu0
      %v930 = vadd.f32 0.0, %v929
      %v931 = vpop.f32.mrb[0].mxu0
      %932 = vmatprep.mubr.f32.mxu0 %v538
      %933 = vmatmul.mubr.f32.gmra.mrb[0].mxu0 %v537
      %v934 = vpop.f32.mrb[0].mxu0
      %v935 = vadd.f32 0.0, %v934
      %v936 = vpop.f32.mrb[0].mxu0
      %937 = vmatprep.mubr.f32.mxu0 %v540
      %938 = vmatmul.mubr.f32.gmra.mrb[0].mxu0 %v539
      %v939 = vpop.f32.mrb[0].mxu0
      %v940 = vadd.f32 0.0, %v939
      %v941 = vpop.f32.mrb[0].mxu0
      %942 = vmatprep.mubr.f32.mxu0 %v542
      %943 = vmatmul.mubr.f32.gmra.mrb[0].mxu0 %v541
      %v944 = vpop.f32.mrb[0].mxu0
      %v945 = vadd.f32 0.0, %v944
      %v946 = vpop.f32.mrb[0].mxu0
      %947 = vmatprep.mubr.f32.mxu0 %v544
      %948 = vmatmul.mubr.f32.gmra.mrb[0].mxu0 %v543
      %v949 = vpop.f32.mrb[0].mxu0
      %v950 = vadd.f32 0.0, %v949
      %v951 = vpop.f32.mrb[0].mxu0
      %952 = vmatprep.mubr.f32.mxu0 %v546
      %953 = vmatmul.mubr.f32.gmra.mrb[0].mxu0 %v545
      %v954 = vpop.f32.mrb[0].mxu0
      %v955 = vadd.f32 0.0, %v954
      %v956 = vpop.f32.mrb[0].mxu0
      %957 = vmatprep.mubr.f32.mxu0 %v548
      %958 = vmatmul.mubr.f32.gmra.mrb[0].mxu0 %v547
      %v959 = vpop.f32.mrb[0].mxu0
      %v960 = vadd.f32 0.0, %v959
      %v961 = vpop.f32.mrb[0].mxu0
      %962 = vdwg.mxu0
      %s963 = scalar_lea.vmem %s488, 512
      %v964 = vld [vmem:[%s963] sm:$0xff]
      %v965 = vld [vmem:[%s963 + $0x8] sm:$0xff]
      %v966 = vld [vmem:[%s963 + $0x10] sm:$0xff]
      %v967 = vld [vmem:[%s963 + $0x18] sm:$0xff]
      %v968 = vld [vmem:[%s963 + $0x20] sm:$0xff]
      %v969 = vld [vmem:[%s963 + $0x28] sm:$0xff]
      %v970 = vld [vmem:[%s963 + $0x30] sm:$0xff]
      %v971 = vld [vmem:[%s963 + $0x38] sm:$0xff]
      %v972 = vld [vmem:[%s963 + $0x40] sm:$0xff]
      %v973 = vld [vmem:[%s963 + $0x48] sm:$0xff]
      %v974 = vld [vmem:[%s963 + $0x50] sm:$0xff]
      %v975 = vld [vmem:[%s963 + $0x58] sm:$0xff]
      %v976 = vld [vmem:[%s963 + $0x60] sm:$0xff]
      %v977 = vld [vmem:[%s963 + $0x68] sm:$0xff]
      %v978 = vld [vmem:[%s963 + $0x70] sm:$0xff]
      %v979 = vld [vmem:[%s963 + $0x78] sm:$0xff]
      %v980 = vld [vmem:[%s963 + $0x80] sm:$0xff]
      %v981 = vld [vmem:[%s963 + $0x88] sm:$0xff]
      %v982 = vld [vmem:[%s963 + $0x90] sm:$0xff]
      %v983 = vld [vmem:[%s963 + $0x98] sm:$0xff]
      %v984 = vld [vmem:[%s963 + $0xa0] sm:$0xff]
      %v985 = vld [vmem:[%s963 + $0xa8] sm:$0xff]
      %v986 = vld [vmem:[%s963 + $0xb0] sm:$0xff]
      %v987 = vld [vmem:[%s963 + $0xb8] sm:$0xff]
      %v988 = vld [vmem:[%s963 + $0xc0] sm:$0xff]
      %v989 = vld [vmem:[%s963 + $0xc8] sm:$0xff]
      %v990 = vld [vmem:[%s963 + $0xd0] sm:$0xff]
      %v991 = vld [vmem:[%s963 + $0xd8] sm:$0xff]
      %v992 = vld [vmem:[%s963 + $0xe0] sm:$0xff]
      %v993 = vld [vmem:[%s963 + $0xe8] sm:$0xff]
      %v994 = vld [vmem:[%s963 + $0xf0] sm:$0xff]
      %v995 = vld [vmem:[%s963 + $0xf8] sm:$0xff]
      %v996 = vld [vmem:[%s963 + $0x100] sm:$0xff]
      %v997 = vld [vmem:[%s963 + $0x108] sm:$0xff]
      %v998 = vld [vmem:[%s963 + $0x110] sm:$0xff]
      %v999 = vld [vmem:[%s963 + $0x118] sm:$0xff]
      %v1000 = vld [vmem:[%s963 + $0x120] sm:$0xff]
      %v1001 = vld [vmem:[%s963 + $0x128] sm:$0xff]
      %v1002 = vld [vmem:[%s963 + $0x130] sm:$0xff]
      %v1003 = vld [vmem:[%s963 + $0x138] sm:$0xff]
      %v1004 = vld [vmem:[%s963 + $0x140] sm:$0xff]
      %v1005 = vld [vmem:[%s963 + $0x148] sm:$0xff]
      %v1006 = vld [vmem:[%s963 + $0x150] sm:$0xff]
      %v1007 = vld [vmem:[%s963 + $0x158] sm:$0xff]
      %v1008 = vld [vmem:[%s963 + $0x160] sm:$0xff]
      %v1009 = vld [vmem:[%s963 + $0x168] sm:$0xff]
      %v1010 = vld [vmem:[%s963 + $0x170] sm:$0xff]
      %v1011 = vld [vmem:[%s963 + $0x178] sm:$0xff]
      %v1012 = vld [vmem:[%s963 + $0x180] sm:$0xff]
      %v1013 = vld [vmem:[%s963 + $0x188] sm:$0xff]
      %v1014 = vld [vmem:[%s963 + $0x190] sm:$0xff]
      %v1015 = vld [vmem:[%s963 + $0x198] sm:$0xff]
      %v1016 = vld [vmem:[%s963 + $0x1a0] sm:$0xff]
      %v1017 = vld [vmem:[%s963 + $0x1a8] sm:$0xff]
      %v1018 = vld [vmem:[%s963 + $0x1b0] sm:$0xff]
      %v1019 = vld [vmem:[%s963 + $0x1b8] sm:$0xff]
      %v1020 = vld [vmem:[%s963 + $0x1c0] sm:$0xff]
      %v1021 = vld [vmem:[%s963 + $0x1c8] sm:$0xff]
      %v1022 = vld [vmem:[%s963 + $0x1d0] sm:$0xff]
      %v1023 = vld [vmem:[%s963 + $0x1d8] sm:$0xff]
      %v1024 = vld [vmem:[%s963 + $0x1e0] sm:$0xff]
      %v1025 = vld [vmem:[%s963 + $0x1e8] sm:$0xff]
      %v1026 = vld [vmem:[%s963 + $0x1f0] sm:$0xff]
      %v1027 = vld [vmem:[%s963 + $0x1f8] sm:$0xff]
      %1028 = vmatprep.subr.mxu0 0.0
      %1029 = vmatpush1.msra.mxu0 %v493
      %1030 = vmatprep.subr.mxu0 0.0
      %1031 = vmatpush1.msra.mxu0 %v494
      %1032 = vmatprep.subr.mxu0 0.0
      %1033 = vmatpush1.msra.mxu0 %v495
      %1034 = vmatprep.subr.mxu0 0.0
      %1035 = vmatpush1.msra.mxu0 %v496
      %1036 = vmatprep.subr.mxu0 0.0
      %1037 = vmatpush1.msra.mxu0 %v497
      %1038 = vmatprep.subr.mxu0 0.0
      %1039 = vmatpush1.msra.mxu0 %v498
      %1040 = vmatprep.subr.mxu0 0.0
      %1041 = vmatpush1.msra.mxu0 %v499
      %1042 = vmatprep.subr.mxu0 0.0
      %1043 = vmatpush1.msra.mxu0 %v500
      %1044 = vmatprep.subr.mxu0 0.0
      %1045 = vmatpush1.msra.mxu0 %v501
      %1046 = vmatprep.subr.mxu0 0.0
      %1047 = vmatpush1.msra.mxu0 %v502
      %1048 = vmatprep.subr.mxu0 0.0
      %1049 = vmatpush1.msra.mxu0 %v503
      %1050 = vmatprep.subr.mxu0 0.0
      %1051 = vmatpush1.msra.mxu0 %v504
      %1052 = vmatprep.subr.mxu0 0.0
      %1053 = vmatpush1.msra.mxu0 %v505
      %1054 = vmatprep.subr.mxu0 0.0
      %1055 = vmatpush1.msra.mxu0 %v506
      %1056 = vmatprep.subr.mxu0 0.0
      %1057 = vmatpush1.msra.mxu0 %v507
      %1058 = vmatprep.subr.mxu0 0.0
      %1059 = vmatpush1.msra.mxu0 %v508
      %1060 = vmatprep.subr.mxu0 0.0
      %1061 = vmatpush1.msra.mxu0 %v509
      %1062 = vmatprep.subr.mxu0 0.0
      %1063 = vmatpush1.msra.mxu0 %v510
      %1064 = vmatprep.subr.mxu0 0.0
      %1065 = vmatpush1.msra.mxu0 %v511
      %1066 = vmatprep.subr.mxu0 0.0
      %1067 = vmatpush1.msra.mxu0 %v512
      %1068 = vmatprep.subr.mxu0 0.0
      %1069 = vmatpush1.msra.mxu0 %v513
      %1070 = vmatprep.subr.mxu0 0.0
      %1071 = vmatpush1.msra.mxu0 %v514
      %1072 = vmatprep.subr.mxu0 0.0
      %1073 = vmatpush1.msra.mxu0 %v515
      %1074 = vmatprep.subr.mxu0 0.0
      %1075 = vmatpush1.msra.mxu0 %v516
      %1076 = vmatprep.subr.mxu0 0.0
      %1077 = vmatpush1.msra.mxu0 %v517
      %1078 = vmatprep.subr.mxu0 0.0
      %1079 = vmatpush1.msra.mxu0 %v518
      %1080 = vmatprep.subr.mxu0 0.0
      %1081 = vmatpush1.msra.mxu0 %v519
      %1082 = vmatprep.subr.mxu0 0.0
      %1083 = vmatpush1.msra.mxu0 %v520
      %1084 = vmatprep.subr.mxu0 0.0
      %1085 = vmatpush1.msra.mxu0 %v521
      %1086 = vmatprep.subr.mxu0 0.0
      %1087 = vmatpush1.msra.mxu0 %v522
      %1088 = vmatprep.subr.mxu0 0.0
      %1089 = vmatpush1.msra.mxu0 %v523
      %1090 = vmatprep.subr.mxu0 0.0
      %1091 = vmatpush1.msra.mxu0 %v524
      %1092 = vmatprep.mubr.f32.mxu0 %v965
      %1093 = vmatmul.mubr.f32.gmra.mrb[0].mxu0 %v964
      %v1094 = vpop.f32.mrb[0].mxu0
      %v1095 = vadd.f32 0.0, %v1094
      %v1096 = vpop.f32.mrb[0].mxu0
      %1097 = vmatprep.mubr.f32.mxu0 %v967
      %1098 = vmatmul.mubr.f32.gmra.mrb[0].mxu0 %v966
      %v1099 = vpop.f32.mrb[0].mxu0
      %v1100 = vadd.f32 0.0, %v1099
      %v1101 = vpop.f32.mrb[0].mxu0
      %1102 = vmatprep.mubr.f32.mxu0 %v969
      %1103 = vmatmul.mubr.f32.gmra.mrb[0].mxu0 %v968
      %v1104 = vpop.f32.mrb[0].mxu0
      %v1105 = vadd.f32 0.0, %v1104
      %v1106 = vpop.f32.mrb[0].mxu0
      %1107 = vmatprep.mubr.f32.mxu0 %v971
      %1108 = vmatmul.mubr.f32.gmra.mrb[0].mxu0 %v970
      %v1109 = vpop.f32.mrb[0].mxu0
      %v1110 = vadd.f32 0.0, %v1109
      %v1111 = vpop.f32.mrb[0].mxu0
      %1112 = vmatprep.mubr.f32.mxu0 %v973
      %1113 = vmatmul.mubr.f32.gmra.mrb[0].mxu0 %v972
      %v1114 = vpop.f32.mrb[0].mxu0
      %v1115 = vadd.f32 0.0, %v1114
      %v1116 = vpop.f32.mrb[0].mxu0
      %1117 = vmatprep.mubr.f32.mxu0 %v975
      %1118 = vmatmul.mubr.f32.gmra.mrb[0].mxu0 %v974
      %v1119 = vpop.f32.mrb[0].mxu0
      %v1120 = vadd.f32 0.0, %v1119
      %v1121 = vpop.f32.mrb[0].mxu0
      %1122 = vmatprep.mubr.f32.mxu0 %v977
      %1123 = vmatmul.mubr.f32.gmra.mrb[0].mxu0 %v976
      %v1124 = vpop.f32.mrb[0].mxu0
      %v1125 = vadd.f32 0.0, %v1124
      %v1126 = vpop.f32.mrb[0].mxu0
      %1127 = vmatprep.mubr.f32.mxu0 %v979
      %1128 = vmatmul.mubr.f32.gmra.mrb[0].mxu0 %v978
      %v1129 = vpop.f32.mrb[0].mxu0
      %v1130 = vadd.f32 0.0, %v1129
      %v1131 = vpop.f32.mrb[0].mxu0
      %1132 = vmatprep.mubr.f32.mxu0 %v981
      %1133 = vmatmul.mubr.f32.gmra.mrb[0].mxu0 %v980
      %v1134 = vpop.f32.mrb[0].mxu0
      %v1135 = vadd.f32 0.0, %v1134
      %v1136 = vpop.f32.mrb[0].mxu0
      %1137 = vmatprep.mubr.f32.mxu0 %v983
      %1138 = vmatmul.mubr.f32.gmra.mrb[0].mxu0 %v982
      %v1139 = vpop.f32.mrb[0].mxu0
      %v1140 = vadd.f32 0.0, %v1139
      %v1141 = vpop.f32.mrb[0].mxu0
      %1142 = vmatprep.mubr.f32.mxu0 %v985
      %1143 = vmatmul.mubr.f32.gmra.mrb[0].mxu0 %v984
      %v1144 = vpop.f32.mrb[0].mxu0
      %v1145 = vadd.f32 0.0, %v1144
      %v1146 = vpop.f32.mrb[0].mxu0
      %1147 = vmatprep.mubr.f32.mxu0 %v987
      %1148 = vmatmul.mubr.f32.gmra.mrb[0].mxu0 %v986
      %v1149 = vpop.f32.mrb[0].mxu0
      %v1150 = vadd.f32 0.0, %v1149
      %v1151 = vpop.f32.mrb[0].mxu0
      %1152 = vmatprep.mubr.f32.mxu0 %v989
      %1153 = vmatmul.mubr.f32.gmra.mrb[0].mxu0 %v988
      %v1154 = vpop.f32.mrb[0].mxu0
      %v1155 = vadd.f32 0.0, %v1154
      %v1156 = vpop.f32.mrb[0].mxu0
      %1157 = vmatprep.mubr.f32.mxu0 %v991
      %1158 = vmatmul.mubr.f32.gmra.mrb[0].mxu0 %v990
      %v1159 = vpop.f32.mrb[0].mxu0
      %v1160 = vadd.f32 0.0, %v1159
      %v1161 = vpop.f32.mrb[0].mxu0
      %1162 = vmatprep.mubr.f32.mxu0 %v993
      %1163 = vmatmul.mubr.f32.gmra.mrb[0].mxu0 %v992
      %v1164 = vpop.f32.mrb[0].mxu0
      %v1165 = vadd.f32 0.0, %v1164
      %v1166 = vpop.f32.mrb[0].mxu0
      %1167 = vmatprep.mubr.f32.mxu0 %v995
      %1168 = vmatmul.mubr.f32.gmra.mrb[0].mxu0 %v994
      %v1169 = vpop.f32.mrb[0].mxu0
      %v1170 = vadd.f32 0.0, %v1169
      %v1171 = vpop.f32.mrb[0].mxu0
      %1172 = vmatprep.mubr.f32.mxu0 %v997
      %1173 = vmatmul.mubr.f32.gmra.mrb[0].mxu0 %v996
      %v1174 = vpop.f32.mrb[0].mxu0
      %v1175 = vadd.f32 0.0, %v1174
      %v1176 = vpop.f32.mrb[0].mxu0
      %1177 = vmatprep.mubr.f32.mxu0 %v999
      %1178 = vmatmul.mubr.f32.gmra.mrb[0].mxu0 %v998
      %v1179 = vpop.f32.mrb[0].mxu0
      %v1180 = vadd.f32 0.0, %v1179
      %v1181 = vpop.f32.mrb[0].mxu0
      %1182 = vmatprep.mubr.f32.mxu0 %v1001
      %1183 = vmatmul.mubr.f32.gmra.mrb[0].mxu0 %v1000
      %v1184 = vpop.f32.mrb[0].mxu0
      %v1185 = vadd.f32 0.0, %v1184
      %v1186 = vpop.f32.mrb[0].mxu0
      %1187 = vmatprep.mubr.f32.mxu0 %v1003
      %1188 = vmatmul.mubr.f32.gmra.mrb[0].mxu0 %v1002
      %v1189 = vpop.f32.mrb[0].mxu0
      %v1190 = vadd.f32 0.0, %v1189
      %v1191 = vpop.f32.mrb[0].mxu0
      %1192 = vmatprep.mubr.f32.mxu0 %v1005
      %1193 = vmatmul.mubr.f32.gmra.mrb[0].mxu0 %v1004
      %v1194 = vpop.f32.mrb[0].mxu0
      %v1195 = vadd.f32 0.0, %v1194
      %v1196 = vpop.f32.mrb[0].mxu0
      %1197 = vmatprep.mubr.f32.mxu0 %v1007
      %1198 = vmatmul.mubr.f32.gmra.mrb[0].mxu0 %v1006
      %v1199 = vpop.f32.mrb[0].mxu0
      %v1200 = vadd.f32 0.0, %v1199
      %v1201 = vpop.f32.mrb[0].mxu0
      %1202 = vmatprep.mubr.f32.mxu0 %v1009
      %1203 = vmatmul.mubr.f32.gmra.mrb[0].mxu0 %v1008
      %v1204 = vpop.f32.mrb[0].mxu0
      %v1205 = vadd.f32 0.0, %v1204
      %v1206 = vpop.f32.mrb[0].mxu0
      %1207 = vmatprep.mubr.f32.mxu0 %v1011
      %1208 = vmatmul.mubr.f32.gmra.mrb[0].mxu0 %v1010
      %v1209 = vpop.f32.mrb[0].mxu0
      %v1210 = vadd.f32 0.0, %v1209
      %v1211 = vpop.f32.mrb[0].mxu0
      %1212 = vmatprep.mubr.f32.mxu0 %v1013
      %1213 = vmatmul.mubr.f32.gmra.mrb[0].mxu0 %v1012
      %v1214 = vpop.f32.mrb[0].mxu0
      %v1215 = vadd.f32 0.0, %v1214
      %v1216 = vpop.f32.mrb[0].mxu0
      %1217 = vmatprep.mubr.f32.mxu0 %v1015
      %1218 = vmatmul.mubr.f32.gmra.mrb[0].mxu0 %v1014
      %v1219 = vpop.f32.mrb[0].mxu0
      %v1220 = vadd.f32 0.0, %v1219
      %v1221 = vpop.f32.mrb[0].mxu0
      %1222 = vmatprep.mubr.f32.mxu0 %v1017
      %1223 = vmatmul.mubr.f32.gmra.mrb[0].mxu0 %v1016
      %v1224 = vpop.f32.mrb[0].mxu0
      %v1225 = vadd.f32 0.0, %v1224
      %v1226 = vpop.f32.mrb[0].mxu0
      %1227 = vmatprep.mubr.f32.mxu0 %v1019
      %1228 = vmatmul.mubr.f32.gmra.mrb[0].mxu0 %v1018
      %v1229 = vpop.f32.mrb[0].mxu0
      %v1230 = vadd.f32 0.0, %v1229
      %v1231 = vpop.f32.mrb[0].mxu0
      %1232 = vmatprep.mubr.f32.mxu0 %v1021
      %1233 = vmatmul.mubr.f32.gmra.mrb[0].mxu0 %v1020
      %v1234 = vpop.f32.mrb[0].mxu0
      %v1235 = vadd.f32 0.0, %v1234
      %v1236 = vpop.f32.mrb[0].mxu0
      %1237 = vmatprep.mubr.f32.mxu0 %v1023
      %1238 = vmatmul.mubr.f32.gmra.mrb[0].mxu0 %v1022
      %v1239 = vpop.f32.mrb[0].mxu0
      %v1240 = vadd.f32 0.0, %v1239
      %v1241 = vpop.f32.mrb[0].mxu0
      %1242 = vmatprep.mubr.f32.mxu0 %v1025
      %1243 = vmatmul.mubr.f32.gmra.mrb[0].mxu0 %v1024
      %v1244 = vpop.f32.mrb[0].mxu0
      %v1245 = vadd.f32 0.0, %v1244
      %v1246 = vpop.f32.mrb[0].mxu0
      %1247 = vmatprep.mubr.f32.mxu0 %v1027
      %1248 = vmatmul.mubr.f32.gmra.mrb[0].mxu0 %v1026
      %v1249 = vpop.f32.mrb[0].mxu0
      %v1250 = vadd.f32 0.0, %v1249
      %v1251 = vpop.f32.mrb[0].mxu0
      %1252 = vdwg.mxu0
      %1253 = vmatprep.subr.mxu0 0.0
      %1254 = vmatpush1.msra.mxu0 %v1095
      %1255 = vmatprep.subr.mxu0 0.0
      %1256 = vmatpush1.msra.mxu0 %v1100
      %1257 = vmatprep.subr.mxu0 0.0
      %1258 = vmatpush1.msra.mxu0 %v1105
      %1259 = vmatprep.subr.mxu0 0.0
      %1260 = vmatpush1.msra.mxu0 %v1110
      %1261 = vmatprep.subr.mxu0 0.0
      %1262 = vmatpush1.msra.mxu0 %v1115
      %1263 = vmatprep.subr.mxu0 0.0
      %1264 = vmatpush1.msra.mxu0 %v1120
      %1265 = vmatprep.subr.mxu0 0.0
      %1266 = vmatpush1.msra.mxu0 %v1125
      %1267 = vmatprep.subr.mxu0 0.0
      %1268 = vmatpush1.msra.mxu0 %v1130
      %1269 = vmatprep.subr.mxu0 0.0
      %1270 = vmatpush1.msra.mxu0 %v1135
      %1271 = vmatprep.subr.mxu0 0.0
      %1272 = vmatpush1.msra.mxu0 %v1140
      %1273 = vmatprep.subr.mxu0 0.0
      %1274 = vmatpush1.msra.mxu0 %v1145
      %1275 = vmatprep.subr.mxu0 0.0
      %1276 = vmatpush1.msra.mxu0 %v1150
      %1277 = vmatprep.subr.mxu0 0.0
      %1278 = vmatpush1.msra.mxu0 %v1155
      %1279 = vmatprep.subr.mxu0 0.0
      %1280 = vmatpush1.msra.mxu0 %v1160
      %1281 = vmatprep.subr.mxu0 0.0
      %1282 = vmatpush1.msra.mxu0 %v1165
      %1283 = vmatprep.subr.mxu0 0.0
      %1284 = vmatpush1.msra.mxu0 %v1170
      %1285 = vmatprep.subr.mxu0 0.0
      %1286 = vmatpush1.msra.mxu0 %v1175
      %1287 = vmatprep.subr.mxu0 0.0
      %1288 = vmatpush1.msra.mxu0 %v1180
      %1289 = vmatprep.subr.mxu0 0.0
      %1290 = vmatpush1.msra.mxu0 %v1185
      %1291 = vmatprep.subr.mxu0 0.0
      %1292 = vmatpush1.msra.mxu0 %v1190
      %1293 = vmatprep.subr.mxu0 0.0
      %1294 = vmatpush1.msra.mxu0 %v1195
      %1295 = vmatprep.subr.mxu0 0.0
      %1296 = vmatpush1.msra.mxu0 %v1200
      %1297 = vmatprep.subr.mxu0 0.0
      %1298 = vmatpush1.msra.mxu0 %v1205
      %1299 = vmatprep.subr.mxu0 0.0
      %1300 = vmatpush1.msra.mxu0 %v1210
      %1301 = vmatprep.subr.mxu0 0.0
      %1302 = vmatpush1.msra.mxu0 %v1215
      %1303 = vmatprep.subr.mxu0 0.0
      %1304 = vmatpush1.msra.mxu0 %v1220
      %1305 = vmatprep.subr.mxu0 0.0
      %1306 = vmatpush1.msra.mxu0 %v1225
      %1307 = vmatprep.subr.mxu0 0.0
      %1308 = vmatpush1.msra.mxu0 %v1230
      %1309 = vmatprep.subr.mxu0 0.0
      %1310 = vmatpush1.msra.mxu0 %v1235
      %1311 = vmatprep.subr.mxu0 0.0
      %1312 = vmatpush1.msra.mxu0 %v1240
      %1313 = vmatprep.subr.mxu0 0.0
      %1314 = vmatpush1.msra.mxu0 %v1245
      %1315 = vmatprep.subr.mxu0 0.0
      %1316 = vmatpush1.msra.mxu0 %v1250
      %1317 = vmatprep.mubr.f32.mxu0 %v526
      %1318 = vmatmul.mubr.f32.gmra.mrb[0].mxu0 %v525
      %v1319 = vpop.f32.mrb[0].mxu0
      %v1320 = vadd.f32 0.0, %v1319
      %v1321 = vpop.f32.mrb[0].mxu0
      %1322 = vmatprep.mubr.f32.mxu0 %v528
      %1323 = vmatmul.mubr.f32.gmra.mrb[0].mxu0 %v527
      %v1324 = vpop.f32.mrb[0].mxu0
      %v1325 = vadd.f32 0.0, %v1324
      %v1326 = vpop.f32.mrb[0].mxu0
      %1327 = vmatprep.mubr.f32.mxu0 %v530
      %1328 = vmatmul.mubr.f32.gmra.mrb[0].mxu0 %v529
      %v1329 = vpop.f32.mrb[0].mxu0
      %v1330 = vadd.f32 0.0, %v1329
      %v1331 = vpop.f32.mrb[0].mxu0
      %1332 = vmatprep.mubr.f32.mxu0 %v532
      %1333 = vmatmul.mubr.f32.gmra.mrb[0].mxu0 %v531
      %v1334 = vpop.f32.mrb[0].mxu0
      %v1335 = vadd.f32 0.0, %v1334
      %v1336 = vpop.f32.mrb[0].mxu0
      %1337 = vmatprep.mubr.f32.mxu0 %v534
      %1338 = vmatmul.mubr.f32.gmra.mrb[0].mxu0 %v533
      %v1339 = vpop.f32.mrb[0].mxu0
      %v1340 = vadd.f32 0.0, %v1339
      %v1341 = vpop.f32.mrb[0].mxu0
      %1342 = vmatprep.mubr.f32.mxu0 %v536
      %1343 = vmatmul.mubr.f32.gmra.mrb[0].mxu0 %v535
      %v1344 = vpop.f32.mrb[0].mxu0
      %v1345 = vadd.f32 0.0, %v1344
      %v1346 = vpop.f32.mrb[0].mxu0
      %1347 = vmatprep.mubr.f32.mxu0 %v538
      %1348 = vmatmul.mubr.f32.gmra.mrb[0].mxu0 %v537
      %v1349 = vpop.f32.mrb[0].mxu0
      %v1350 = vadd.f32 0.0, %v1349
      %v1351 = vpop.f32.mrb[0].mxu0
      %1352 = vmatprep.mubr.f32.mxu0 %v540
      %1353 = vmatmul.mubr.f32.gmra.mrb[0].mxu0 %v539
      %v1354 = vpop.f32.mrb[0].mxu0
      %v1355 = vadd.f32 0.0, %v1354
      %v1356 = vpop.f32.mrb[0].mxu0
      %1357 = vmatprep.mubr.f32.mxu0 %v542
      %1358 = vmatmul.mubr.f32.gmra.mrb[0].mxu0 %v541
      %v1359 = vpop.f32.mrb[0].mxu0
      %v1360 = vadd.f32 0.0, %v1359
      %v1361 = vpop.f32.mrb[0].mxu0
      %1362 = vmatprep.mubr.f32.mxu0 %v544
      %1363 = vmatmul.mubr.f32.gmra.mrb[0].mxu0 %v543
      %v1364 = vpop.f32.mrb[0].mxu0
      %v1365 = vadd.f32 0.0, %v1364
      %v1366 = vpop.f32.mrb[0].mxu0
      %1367 = vmatprep.mubr.f32.mxu0 %v546
      %1368 = vmatmul.mubr.f32.gmra.mrb[0].mxu0 %v545
      %v1369 = vpop.f32.mrb[0].mxu0
      %v1370 = vadd.f32 0.0, %v1369
      %v1371 = vpop.f32.mrb[0].mxu0
      %1372 = vmatprep.mubr.f32.mxu0 %v548
      %1373 = vmatmul.mubr.f32.gmra.mrb[0].mxu0 %v547
      %v1374 = vpop.f32.mrb[0].mxu0
      %v1375 = vadd.f32 0.0, %v1374
      %v1376 = vpop.f32.mrb[0].mxu0
      %1377 = vdwg.mxu0
      %s1378 = scalar_lea.vmem %s488, 1024
      %v1379 = vld [vmem:[%s1378] sm:$0xff]
      %v1380 = vld [vmem:[%s1378 + $0x8] sm:$0xff]
      %v1381 = vld [vmem:[%s1378 + $0x10] sm:$0xff]
      %v1382 = vld [vmem:[%s1378 + $0x18] sm:$0xff]
      %v1383 = vld [vmem:[%s1378 + $0x20] sm:$0xff]
      %v1384 = vld [vmem:[%s1378 + $0x28] sm:$0xff]
      %v1385 = vld [vmem:[%s1378 + $0x30] sm:$0xff]
      %v1386 = vld [vmem:[%s1378 + $0x38] sm:$0xff]
      %v1387 = vld [vmem:[%s1378 + $0x40] sm:$0xff]
      %v1388 = vld [vmem:[%s1378 + $0x48] sm:$0xff]
      %v1389 = vld [vmem:[%s1378 + $0x50] sm:$0xff]
      %v1390 = vld [vmem:[%s1378 + $0x58] sm:$0xff]
      %v1391 = vld [vmem:[%s1378 + $0x60] sm:$0xff]
      %v1392 = vld [vmem:[%s1378 + $0x68] sm:$0xff]
      %v1393 = vld [vmem:[%s1378 + $0x70] sm:$0xff]
      %v1394 = vld [vmem:[%s1378 + $0x78] sm:$0xff]
      %v1395 = vld [vmem:[%s1378 + $0x80] sm:$0xff]
      %v1396 = vld [vmem:[%s1378 + $0x88] sm:$0xff]
      %v1397 = vld [vmem:[%s1378 + $0x90] sm:$0xff]
      %v1398 = vld [vmem:[%s1378 + $0x98] sm:$0xff]
      %v1399 = vld [vmem:[%s1378 + $0xa0] sm:$0xff]
      %v1400 = vld [vmem:[%s1378 + $0xa8] sm:$0xff]
      %v1401 = vld [vmem:[%s1378 + $0xb0] sm:$0xff]
      %v1402 = vld [vmem:[%s1378 + $0xb8] sm:$0xff]
      %v1403 = vld [vmem:[%s1378 + $0xc0] sm:$0xff]
      %v1404 = vld [vmem:[%s1378 + $0xc8] sm:$0xff]
      %v1405 = vld [vmem:[%s1378 + $0xd0] sm:$0xff]
      %v1406 = vld [vmem:[%s1378 + $0xd8] sm:$0xff]
      %v1407 = vld [vmem:[%s1378 + $0xe0] sm:$0xff]
      %v1408 = vld [vmem:[%s1378 + $0xe8] sm:$0xff]
      %v1409 = vld [vmem:[%s1378 + $0xf0] sm:$0xff]
      %v1410 = vld [vmem:[%s1378 + $0xf8] sm:$0xff]
      %v1411 = vld [vmem:[%s1378 + $0x100] sm:$0xff]
      %v1412 = vld [vmem:[%s1378 + $0x108] sm:$0xff]
      %v1413 = vld [vmem:[%s1378 + $0x110] sm:$0xff]
      %v1414 = vld [vmem:[%s1378 + $0x118] sm:$0xff]
      %v1415 = vld [vmem:[%s1378 + $0x120] sm:$0xff]
      %v1416 = vld [vmem:[%s1378 + $0x128] sm:$0xff]
      %v1417 = vld [vmem:[%s1378 + $0x130] sm:$0xff]
      %v1418 = vld [vmem:[%s1378 + $0x138] sm:$0xff]
      %v1419 = vld [vmem:[%s1378 + $0x140] sm:$0xff]
      %v1420 = vld [vmem:[%s1378 + $0x148] sm:$0xff]
      %v1421 = vld [vmem:[%s1378 + $0x150] sm:$0xff]
      %v1422 = vld [vmem:[%s1378 + $0x158] sm:$0xff]
      %v1423 = vld [vmem:[%s1378 + $0x160] sm:$0xff]
      %v1424 = vld [vmem:[%s1378 + $0x168] sm:$0xff]
      %v1425 = vld [vmem:[%s1378 + $0x170] sm:$0xff]
      %v1426 = vld [vmem:[%s1378 + $0x178] sm:$0xff]
      %v1427 = vld [vmem:[%s1378 + $0x180] sm:$0xff]
      %v1428 = vld [vmem:[%s1378 + $0x188] sm:$0xff]
      %v1429 = vld [vmem:[%s1378 + $0x190] sm:$0xff]
      %v1430 = vld [vmem:[%s1378 + $0x198] sm:$0xff]
      %v1431 = vld [vmem:[%s1378 + $0x1a0] sm:$0xff]
      %v1432 = vld [vmem:[%s1378 + $0x1a8] sm:$0xff]
      %v1433 = vld [vmem:[%s1378 + $0x1b0] sm:$0xff]
      %v1434 = vld [vmem:[%s1378 + $0x1b8] sm:$0xff]
      %v1435 = vld [vmem:[%s1378 + $0x1c0] sm:$0xff]
      %v1436 = vld [vmem:[%s1378 + $0x1c8] sm:$0xff]
      %v1437 = vld [vmem:[%s1378 + $0x1d0] sm:$0xff]
      %v1438 = vld [vmem:[%s1378 + $0x1d8] sm:$0xff]
      %v1439 = vld [vmem:[%s1378 + $0x1e0] sm:$0xff]
      %v1440 = vld [vmem:[%s1378 + $0x1e8] sm:$0xff]
      %v1441 = vld [vmem:[%s1378 + $0x1f0] sm:$0xff]
      %v1442 = vld [vmem:[%s1378 + $0x1f8] sm:$0xff]
      %1443 = vmatprep.subr.mxu0 0.0
      %1444 = vmatpush1.msra.mxu0 %v493
      %1445 = vmatprep.subr.mxu0 0.0
      %1446 = vmatpush1.msra.mxu0 %v494
      %1447 = vmatprep.subr.mxu0 0.0
      %1448 = vmatpush1.msra.mxu0 %v495
      %1449 = vmatprep.subr.mxu0 0.0
      %1450 = vmatpush1.msra.mxu0 %v496
      %1451 = vmatprep.subr.mxu0 0.0
      %1452 = vmatpush1.msra.mxu0 %v497
      %1453 = vmatprep.subr.mxu0 0.0
      %1454 = vmatpush1.msra.mxu0 %v498
      %1455 = vmatprep.subr.mxu0 0.0
      %1456 = vmatpush1.msra.mxu0 %v499
      %1457 = vmatprep.subr.mxu0 0.0
      %1458 = vmatpush1.msra.mxu0 %v500
      %1459 = vmatprep.subr.mxu0 0.0
      %1460 = vmatpush1.msra.mxu0 %v501
      %1461 = vmatprep.subr.mxu0 0.0
      %1462 = vmatpush1.msra.mxu0 %v502
      %1463 = vmatprep.subr.mxu0 0.0
      %1464 = vmatpush1.msra.mxu0 %v503
      %1465 = vmatprep.subr.mxu0 0.0
      %1466 = vmatpush1.msra.mxu0 %v504
      %1467 = vmatprep.subr.mxu0 0.0
      %1468 = vmatpush1.msra.mxu0 %v505
      %1469 = vmatprep.subr.mxu0 0.0
      %1470 = vmatpush1.msra.mxu0 %v506
      %1471 = vmatprep.subr.mxu0 0.0
      %1472 = vmatpush1.msra.mxu0 %v507
      %1473 = vmatprep.subr.mxu0 0.0
      %1474 = vmatpush1.msra.mxu0 %v508
      %1475 = vmatprep.subr.mxu0 0.0
      %1476 = vmatpush1.msra.mxu0 %v509
      %1477 = vmatprep.subr.mxu0 0.0
      %1478 = vmatpush1.msra.mxu0 %v510
      %1479 = vmatprep.subr.mxu0 0.0
      %1480 = vmatpush1.msra.mxu0 %v511
      %1481 = vmatprep.subr.mxu0 0.0
      %1482 = vmatpush1.msra.mxu0 %v512
      %1483 = vmatprep.subr.mxu0 0.0
      %1484 = vmatpush1.msra.mxu0 %v513
      %1485 = vmatprep.subr.mxu0 0.0
      %1486 = vmatpush1.msra.mxu0 %v514
      %1487 = vmatprep.subr.mxu0 0.0
      %1488 = vmatpush1.msra.mxu0 %v515
      %1489 = vmatprep.subr.mxu0 0.0
      %1490 = vmatpush1.msra.mxu0 %v516
      %1491 = vmatprep.subr.mxu0 0.0
      %1492 = vmatpush1.msra.mxu0 %v517
      %1493 = vmatprep.subr.mxu0 0.0
      %1494 = vmatpush1.msra.mxu0 %v518
      %1495 = vmatprep.subr.mxu0 0.0
      %1496 = vmatpush1.msra.mxu0 %v519
      %1497 = vmatprep.subr.mxu0 0.0
      %1498 = vmatpush1.msra.mxu0 %v520
      %1499 = vmatprep.subr.mxu0 0.0
      %1500 = vmatpush1.msra.mxu0 %v521
      %1501 = vmatprep.subr.mxu0 0.0
      %1502 = vmatpush1.msra.mxu0 %v522
      %1503 = vmatprep.subr.mxu0 0.0
      %1504 = vmatpush1.msra.mxu0 %v523
      %1505 = vmatprep.subr.mxu0 0.0
      %1506 = vmatpush1.msra.mxu0 %v524
      %1507 = vmatprep.mubr.f32.mxu0 %v1380
      %1508 = vmatmul.mubr.f32.gmra.mrb[0].mxu0 %v1379
      %v1509 = vpop.f32.mrb[0].mxu0
      %v1510 = vadd.f32 0.0, %v1509
      %v1511 = vpop.f32.mrb[0].mxu0
      %1512 = vmatprep.mubr.f32.mxu0 %v1382
      %1513 = vmatmul.mubr.f32.gmra.mrb[0].mxu0 %v1381
      %v1514 = vpop.f32.mrb[0].mxu0
      %v1515 = vadd.f32 0.0, %v1514
      %v1516 = vpop.f32.mrb[0].mxu0
      %1517 = vmatprep.mubr.f32.mxu0 %v1384
      %1518 = vmatmul.mubr.f32.gmra.mrb[0].mxu0 %v1383
      %v1519 = vpop.f32.mrb[0].mxu0
      %v1520 = vadd.f32 0.0, %v1519
      %v1521 = vpop.f32.mrb[0].mxu0
      %1522 = vmatprep.mubr.f32.mxu0 %v1386
      %1523 = vmatmul.mubr.f32.gmra.mrb[0].mxu0 %v1385
      %v1524 = vpop.f32.mrb[0].mxu0
      %v1525 = vadd.f32 0.0, %v1524
      %v1526 = vpop.f32.mrb[0].mxu0
      %1527 = vmatprep.mubr.f32.mxu0 %v1388
      %1528 = vmatmul.mubr.f32.gmra.mrb[0].mxu0 %v1387
      %v1529 = vpop.f32.mrb[0].mxu0
      %v1530 = vadd.f32 0.0, %v1529
      %v1531 = vpop.f32.mrb[0].mxu0
      %1532 = vmatprep.mubr.f32.mxu0 %v1390
      %1533 = vmatmul.mubr.f32.gmra.mrb[0].mxu0 %v1389
      %v1534 = vpop.f32.mrb[0].mxu0
      %v1535 = vadd.f32 0.0, %v1534
      %v1536 = vpop.f32.mrb[0].mxu0
      %1537 = vmatprep.mubr.f32.mxu0 %v1392
      %1538 = vmatmul.mubr.f32.gmra.mrb[0].mxu0 %v1391
      %v1539 = vpop.f32.mrb[0].mxu0
      %v1540 = vadd.f32 0.0, %v1539
      %v1541 = vpop.f32.mrb[0].mxu0
      %1542 = vmatprep.mubr.f32.mxu0 %v1394
      %1543 = vmatmul.mubr.f32.gmra.mrb[0].mxu0 %v1393
      %v1544 = vpop.f32.mrb[0].mxu0
      %v1545 = vadd.f32 0.0, %v1544
      %v1546 = vpop.f32.mrb[0].mxu0
      %1547 = vmatprep.mubr.f32.mxu0 %v1396
      %1548 = vmatmul.mubr.f32.gmra.mrb[0].mxu0 %v1395
      %v1549 = vpop.f32.mrb[0].mxu0
      %v1550 = vadd.f32 0.0, %v1549
      %v1551 = vpop.f32.mrb[0].mxu0
      %1552 = vmatprep.mubr.f32.mxu0 %v1398
      %1553 = vmatmul.mubr.f32.gmra.mrb[0].mxu0 %v1397
      %v1554 = vpop.f32.mrb[0].mxu0
      %v1555 = vadd.f32 0.0, %v1554
      %v1556 = vpop.f32.mrb[0].mxu0
      %1557 = vmatprep.mubr.f32.mxu0 %v1400
      %1558 = vmatmul.mubr.f32.gmra.mrb[0].mxu0 %v1399
      %v1559 = vpop.f32.mrb[0].mxu0
      %v1560 = vadd.f32 0.0, %v1559
      %v1561 = vpop.f32.mrb[0].mxu0
      %1562 = vmatprep.mubr.f32.mxu0 %v1402
      %1563 = vmatmul.mubr.f32.gmra.mrb[0].mxu0 %v1401
      %v1564 = vpop.f32.mrb[0].mxu0
      %v1565 = vadd.f32 0.0, %v1564
      %v1566 = vpop.f32.mrb[0].mxu0
      %1567 = vmatprep.mubr.f32.mxu0 %v1404
      %1568 = vmatmul.mubr.f32.gmra.mrb[0].mxu0 %v1403
      %v1569 = vpop.f32.mrb[0].mxu0
      %v1570 = vadd.f32 0.0, %v1569
      %v1571 = vpop.f32.mrb[0].mxu0
      %1572 = vmatprep.mubr.f32.mxu0 %v1406
      %1573 = vmatmul.mubr.f32.gmra.mrb[0].mxu0 %v1405
      %v1574 = vpop.f32.mrb[0].mxu0
      %v1575 = vadd.f32 0.0, %v1574
      %v1576 = vpop.f32.mrb[0].mxu0
      %1577 = vmatprep.mubr.f32.mxu0 %v1408
      %1578 = vmatmul.mubr.f32.gmra.mrb[0].mxu0 %v1407
      %v1579 = vpop.f32.mrb[0].mxu0
      %v1580 = vadd.f32 0.0, %v1579
      %v1581 = vpop.f32.mrb[0].mxu0
      %1582 = vmatprep.mubr.f32.mxu0 %v1410
      %1583 = vmatmul.mubr.f32.gmra.mrb[0].mxu0 %v1409
      %v1584 = vpop.f32.mrb[0].mxu0
      %v1585 = vadd.f32 0.0, %v1584
      %v1586 = vpop.f32.mrb[0].mxu0
      %1587 = vmatprep.mubr.f32.mxu0 %v1412
      %1588 = vmatmul.mubr.f32.gmra.mrb[0].mxu0 %v1411
      %v1589 = vpop.f32.mrb[0].mxu0
      %v1590 = vadd.f32 0.0, %v1589
      %v1591 = vpop.f32.mrb[0].mxu0
      %1592 = vmatprep.mubr.f32.mxu0 %v1414
      %1593 = vmatmul.mubr.f32.gmra.mrb[0].mxu0 %v1413
      %v1594 = vpop.f32.mrb[0].mxu0
      %v1595 = vadd.f32 0.0, %v1594
      %v1596 = vpop.f32.mrb[0].mxu0
      %1597 = vmatprep.mubr.f32.mxu0 %v1416
      %1598 = vmatmul.mubr.f32.gmra.mrb[0].mxu0 %v1415
      %v1599 = vpop.f32.mrb[0].mxu0
      %v1600 = vadd.f32 0.0, %v1599
      %v1601 = vpop.f32.mrb[0].mxu0
      %1602 = vmatprep.mubr.f32.mxu0 %v1418
      %1603 = vmatmul.mubr.f32.gmra.mrb[0].mxu0 %v1417
      %v1604 = vpop.f32.mrb[0].mxu0
      %v1605 = vadd.f32 0.0, %v1604
      %v1606 = vpop.f32.mrb[0].mxu0
      %1607 = vmatprep.mubr.f32.mxu0 %v1420
      %1608 = vmatmul.mubr.f32.gmra.mrb[0].mxu0 %v1419
      %v1609 = vpop.f32.mrb[0].mxu0
      %v1610 = vadd.f32 0.0, %v1609
      %v1611 = vpop.f32.mrb[0].mxu0
      %1612 = vmatprep.mubr.f32.mxu0 %v1422
      %1613 = vmatmul.mubr.f32.gmra.mrb[0].mxu0 %v1421
      %v1614 = vpop.f32.mrb[0].mxu0
      %v1615 = vadd.f32 0.0, %v1614
      %v1616 = vpop.f32.mrb[0].mxu0
      %1617 = vmatprep.mubr.f32.mxu0 %v1424
      %1618 = vmatmul.mubr.f32.gmra.mrb[0].mxu0 %v1423
      %v1619 = vpop.f32.mrb[0].mxu0
      %v1620 = vadd.f32 0.0, %v1619
      %v1621 = vpop.f32.mrb[0].mxu0
      %1622 = vmatprep.mubr.f32.mxu0 %v1426
      %1623 = vmatmul.mubr.f32.gmra.mrb[0].mxu0 %v1425
      %v1624 = vpop.f32.mrb[0].mxu0
      %v1625 = vadd.f32 0.0, %v1624
      %v1626 = vpop.f32.mrb[0].mxu0
      %1627 = vmatprep.mubr.f32.mxu0 %v1428
      %1628 = vmatmul.mubr.f32.gmra.mrb[0].mxu0 %v1427
      %v1629 = vpop.f32.mrb[0].mxu0
      %v1630 = vadd.f32 0.0, %v1629
      %v1631 = vpop.f32.mrb[0].mxu0
      %1632 = vmatprep.mubr.f32.mxu0 %v1430
      %1633 = vmatmul.mubr.f32.gmra.mrb[0].mxu0 %v1429
      %v1634 = vpop.f32.mrb[0].mxu0
      %v1635 = vadd.f32 0.0, %v1634
      %v1636 = vpop.f32.mrb[0].mxu0
      %1637 = vmatprep.mubr.f32.mxu0 %v1432
      %1638 = vmatmul.mubr.f32.gmra.mrb[0].mxu0 %v1431
      %v1639 = vpop.f32.mrb[0].mxu0
      %v1640 = vadd.f32 0.0, %v1639
      %v1641 = vpop.f32.mrb[0].mxu0
      %1642 = vmatprep.mubr.f32.mxu0 %v1434
      %1643 = vmatmul.mubr.f32.gmra.mrb[0].mxu0 %v1433
      %v1644 = vpop.f32.mrb[0].mxu0
      %v1645 = vadd.f32 0.0, %v1644
      %v1646 = vpop.f32.mrb[0].mxu0
      %1647 = vmatprep.mubr.f32.mxu0 %v1436
      %1648 = vmatmul.mubr.f32.gmra.mrb[0].mxu0 %v1435
      %v1649 = vpop.f32.mrb[0].mxu0
      %v1650 = vadd.f32 0.0, %v1649
      %v1651 = vpop.f32.mrb[0].mxu0
      %1652 = vmatprep.mubr.f32.mxu0 %v1438
      %1653 = vmatmul.mubr.f32.gmra.mrb[0].mxu0 %v1437
      %v1654 = vpop.f32.mrb[0].mxu0
      %v1655 = vadd.f32 0.0, %v1654
      %v1656 = vpop.f32.mrb[0].mxu0
      %1657 = vmatprep.mubr.f32.mxu0 %v1440
      %1658 = vmatmul.mubr.f32.gmra.mrb[0].mxu0 %v1439
      %v1659 = vpop.f32.mrb[0].mxu0
      %v1660 = vadd.f32 0.0, %v1659
      %v1661 = vpop.f32.mrb[0].mxu0
      %1662 = vmatprep.mubr.f32.mxu0 %v1442
      %1663 = vmatmul.mubr.f32.gmra.mrb[0].mxu0 %v1441
      %v1664 = vpop.f32.mrb[0].mxu0
      %v1665 = vadd.f32 0.0, %v1664
      %v1666 = vpop.f32.mrb[0].mxu0
      %1667 = vdwg.mxu0
      %1668 = vmatprep.subr.mxu0 0.0
      %1669 = vmatpush1.msra.mxu0 %v1510
      %1670 = vmatprep.subr.mxu0 0.0
      %1671 = vmatpush1.msra.mxu0 %v1515
      %1672 = vmatprep.subr.mxu0 0.0
      %1673 = vmatpush1.msra.mxu0 %v1520
      %1674 = vmatprep.subr.mxu0 0.0
      %1675 = vmatpush1.msra.mxu0 %v1525
      %1676 = vmatprep.subr.mxu0 0.0
      %1677 = vmatpush1.msra.mxu0 %v1530
      %1678 = vmatprep.subr.mxu0 0.0
      %1679 = vmatpush1.msra.mxu0 %v1535
      %1680 = vmatprep.subr.mxu0 0.0
      %1681 = vmatpush1.msra.mxu0 %v1540
      %1682 = vmatprep.subr.mxu0 0.0
      %1683 = vmatpush1.msra.mxu0 %v1545
      %1684 = vmatprep.subr.mxu0 0.0
      %1685 = vmatpush1.msra.mxu0 %v1550
      %1686 = vmatprep.subr.mxu0 0.0
      %1687 = vmatpush1.msra.mxu0 %v1555
      %1688 = vmatprep.subr.mxu0 0.0
      %1689 = vmatpush1.msra.mxu0 %v1560
      %1690 = vmatprep.subr.mxu0 0.0
      %1691 = vmatpush1.msra.mxu0 %v1565
      %1692 = vmatprep.subr.mxu0 0.0
      %1693 = vmatpush1.msra.mxu0 %v1570
      %1694 = vmatprep.subr.mxu0 0.0
      %1695 = vmatpush1.msra.mxu0 %v1575
      %1696 = vmatprep.subr.mxu0 0.0
      %1697 = vmatpush1.msra.mxu0 %v1580
      %1698 = vmatprep.subr.mxu0 0.0
      %1699 = vmatpush1.msra.mxu0 %v1585
      %1700 = vmatprep.subr.mxu0 0.0
      %1701 = vmatpush1.msra.mxu0 %v1590
      %1702 = vmatprep.subr.mxu0 0.0
      %1703 = vmatpush1.msra.mxu0 %v1595
      %1704 = vmatprep.subr.mxu0 0.0
      %1705 = vmatpush1.msra.mxu0 %v1600
      %1706 = vmatprep.subr.mxu0 0.0
      %1707 = vmatpush1.msra.mxu0 %v1605
      %1708 = vmatprep.subr.mxu0 0.0
      %1709 = vmatpush1.msra.mxu0 %v1610
      %1710 = vmatprep.subr.mxu0 0.0
      %1711 = vmatpush1.msra.mxu0 %v1615
      %1712 = vmatprep.subr.mxu0 0.0
      %1713 = vmatpush1.msra.mxu0 %v1620
      %1714 = vmatprep.subr.mxu0 0.0
      %1715 = vmatpush1.msra.mxu0 %v1625
      %1716 = vmatprep.subr.mxu0 0.0
      %1717 = vmatpush1.msra.mxu0 %v1630
      %1718 = vmatprep.subr.mxu0 0.0
      %1719 = vmatpush1.msra.mxu0 %v1635
      %1720 = vmatprep.subr.mxu0 0.0
      %1721 = vmatpush1.msra.mxu0 %v1640
      %1722 = vmatprep.subr.mxu0 0.0
      %1723 = vmatpush1.msra.mxu0 %v1645
      %1724 = vmatprep.subr.mxu0 0.0
      %1725 = vmatpush1.msra.mxu0 %v1650
      %1726 = vmatprep.subr.mxu0 0.0
      %1727 = vmatpush1.msra.mxu0 %v1655
      %1728 = vmatprep.subr.mxu0 0.0
      %1729 = vmatpush1.msra.mxu0 %v1660
      %1730 = vmatprep.subr.mxu0 0.0
      %1731 = vmatpush1.msra.mxu0 %v1665
      %1732 = vmatprep.mubr.f32.mxu0 %v526
      %1733 = vmatmul.mubr.f32.gmra.mrb[0].mxu0 %v525
      %v1734 = vpop.f32.mrb[0].mxu0
      %v1735 = vadd.f32 0.0, %v1734
      %v1736 = vpop.f32.mrb[0].mxu0
      %1737 = vmatprep.mubr.f32.mxu0 %v528
      %1738 = vmatmul.mubr.f32.gmra.mrb[0].mxu0 %v527
      %v1739 = vpop.f32.mrb[0].mxu0
      %v1740 = vadd.f32 0.0, %v1739
      %v1741 = vpop.f32.mrb[0].mxu0
      %1742 = vmatprep.mubr.f32.mxu0 %v530
      %1743 = vmatmul.mubr.f32.gmra.mrb[0].mxu0 %v529
      %v1744 = vpop.f32.mrb[0].mxu0
      %v1745 = vadd.f32 0.0, %v1744
      %v1746 = vpop.f32.mrb[0].mxu0
      %1747 = vmatprep.mubr.f32.mxu0 %v532
      %1748 = vmatmul.mubr.f32.gmra.mrb[0].mxu0 %v531
      %v1749 = vpop.f32.mrb[0].mxu0
      %v1750 = vadd.f32 0.0, %v1749
      %v1751 = vpop.f32.mrb[0].mxu0
      %1752 = vmatprep.mubr.f32.mxu0 %v534
      %1753 = vmatmul.mubr.f32.gmra.mrb[0].mxu0 %v533
      %v1754 = vpop.f32.mrb[0].mxu0
      %v1755 = vadd.f32 0.0, %v1754
      %v1756 = vpop.f32.mrb[0].mxu0
      %1757 = vmatprep.mubr.f32.mxu0 %v536
      %1758 = vmatmul.mubr.f32.gmra.mrb[0].mxu0 %v535
      %v1759 = vpop.f32.mrb[0].mxu0
      %v1760 = vadd.f32 0.0, %v1759
      %v1761 = vpop.f32.mrb[0].mxu0
      %1762 = vmatprep.mubr.f32.mxu0 %v538
      %1763 = vmatmul.mubr.f32.gmra.mrb[0].mxu0 %v537
      %v1764 = vpop.f32.mrb[0].mxu0
      %v1765 = vadd.f32 0.0, %v1764
      %v1766 = vpop.f32.mrb[0].mxu0
      %1767 = vmatprep.mubr.f32.mxu0 %v540
      %1768 = vmatmul.mubr.f32.gmra.mrb[0].mxu0 %v539
      %v1769 = vpop.f32.mrb[0].mxu0
      %v1770 = vadd.f32 0.0, %v1769
      %v1771 = vpop.f32.mrb[0].mxu0
      %1772 = vmatprep.mubr.f32.mxu0 %v542
      %1773 = vmatmul.mubr.f32.gmra.mrb[0].mxu0 %v541
      %v1774 = vpop.f32.mrb[0].mxu0
      %v1775 = vadd.f32 0.0, %v1774
      %v1776 = vpop.f32.mrb[0].mxu0
      %1777 = vmatprep.mubr.f32.mxu0 %v544
      %1778 = vmatmul.mubr.f32.gmra.mrb[0].mxu0 %v543
      %v1779 = vpop.f32.mrb[0].mxu0
      %v1780 = vadd.f32 0.0, %v1779
      %v1781 = vpop.f32.mrb[0].mxu0
      %1782 = vmatprep.mubr.f32.mxu0 %v546
      %1783 = vmatmul.mubr.f32.gmra.mrb[0].mxu0 %v545
      %v1784 = vpop.f32.mrb[0].mxu0
      %v1785 = vadd.f32 0.0, %v1784
      %v1786 = vpop.f32.mrb[0].mxu0
      %1787 = vmatprep.mubr.f32.mxu0 %v548
      %1788 = vmatmul.mubr.f32.gmra.mrb[0].mxu0 %v547
      %v1789 = vpop.f32.mrb[0].mxu0
      %v1790 = vadd.f32 0.0, %v1789
      %v1791 = vpop.f32.mrb[0].mxu0
      %1792 = vdwg.mxu0
      %v1793 = vld [vmem:[%s3] sm:$0xff]
      %v1794 = vld [vmem:[%s3 + $0x8] sm:$0xff]
      %v1795 = vld [vmem:[%s3 + $0x10] sm:$0xff]
      %v1796 = vld [vmem:[%s3 + $0x18] sm:$0xff]
      %v1797 = vld [vmem:[%s3 + $0x20] sm:$0xff]
      %v1798 = vld [vmem:[%s3 + $0x28] sm:$0xff]
      %v1799 = vld [vmem:[%s3 + $0x30] sm:$0xff]
      %v1800 = vld [vmem:[%s3 + $0x38] sm:$0xff]
      %v1801 = vld [vmem:[%s3 + $0x40] sm:$0xff]
      %v1802 = vld [vmem:[%s3 + $0x48] sm:$0xff]
      %v1803 = vld [vmem:[%s3 + $0x50] sm:$0xff]
      %v1804 = vld [vmem:[%s3 + $0x58] sm:$0xff]
      %v1805 = vld [vmem:[%s3 + $0x60] sm:$0xff]
      %v1806 = vld [vmem:[%s3 + $0x68] sm:$0xff]
      %v1807 = vld [vmem:[%s3 + $0x70] sm:$0xff]
      %v1808 = vld [vmem:[%s3 + $0x78] sm:$0xff]
      %v1809 = vld [vmem:[%s3 + $0x80] sm:$0xff]
      %v1810 = vld [vmem:[%s3 + $0x88] sm:$0xff]
      %v1811 = vld [vmem:[%s3 + $0x90] sm:$0xff]
      %v1812 = vld [vmem:[%s3 + $0x98] sm:$0xff]
      %v1813 = vld [vmem:[%s3 + $0xa0] sm:$0xff]
      %v1814 = vld [vmem:[%s3 + $0xa8] sm:$0xff]
      %v1815 = vld [vmem:[%s3 + $0xb0] sm:$0xff]
      %v1816 = vld [vmem:[%s3 + $0xb8] sm:$0xff]
      %v1817 = vld [vmem:[%s3 + $0xc0] sm:$0xff]
      %v1818 = vld [vmem:[%s3 + $0xc8] sm:$0xff]
      %v1819 = vld [vmem:[%s3 + $0xd0] sm:$0xff]
      %v1820 = vld [vmem:[%s3 + $0xd8] sm:$0xff]
      %v1821 = vld [vmem:[%s3 + $0xe0] sm:$0xff]
      %v1822 = vld [vmem:[%s3 + $0xe8] sm:$0xff]
      %v1823 = vld [vmem:[%s3 + $0xf0] sm:$0xff]
      %v1824 = vld [vmem:[%s3 + $0xf8] sm:$0xff]
      %v1825 = vld [vmem:[%s3 + $0x100] sm:$0xff]
      %v1826 = vld [vmem:[%s3 + $0x108] sm:$0xff]
      %v1827 = vld [vmem:[%s3 + $0x110] sm:$0xff]
      %v1828 = vld [vmem:[%s3 + $0x118] sm:$0xff]
      %v1829 = vld [vmem:[%s3 + $0x120] sm:$0xff]
      %v1830 = vld [vmem:[%s3 + $0x128] sm:$0xff]
      %v1831 = vld [vmem:[%s3 + $0x130] sm:$0xff]
      %v1832 = vld [vmem:[%s3 + $0x138] sm:$0xff]
      %v1833 = vld [vmem:[%s3 + $0x140] sm:$0xff]
      %v1834 = vld [vmem:[%s3 + $0x148] sm:$0xff]
      %v1835 = vld [vmem:[%s3 + $0x150] sm:$0xff]
      %v1836 = vld [vmem:[%s3 + $0x158] sm:$0xff]
      %v1837 = vld [vmem:[%s3 + $0x160] sm:$0xff]
      %v1838 = vld [vmem:[%s3 + $0x168] sm:$0xff]
      %v1839 = vld [vmem:[%s3 + $0x170] sm:$0xff]
      %v1840 = vld [vmem:[%s3 + $0x178] sm:$0xff]
      %v1841 = vld [vmem:[%s3 + $0x180] sm:$0xff]
      %v1842 = vld [vmem:[%s3 + $0x188] sm:$0xff]
      %v1843 = vld [vmem:[%s3 + $0x190] sm:$0xff]
      %v1844 = vld [vmem:[%s3 + $0x198] sm:$0xff]
      %v1845 = vld [vmem:[%s3 + $0x1a0] sm:$0xff]
      %v1846 = vld [vmem:[%s3 + $0x1a8] sm:$0xff]
      %v1847 = vld [vmem:[%s3 + $0x1b0] sm:$0xff]
      %v1848 = vld [vmem:[%s3 + $0x1b8] sm:$0xff]
      %v1849 = vld [vmem:[%s3 + $0x1c0] sm:$0xff]
      %v1850 = vld [vmem:[%s3 + $0x1c8] sm:$0xff]
      %v1851 = vld [vmem:[%s3 + $0x1d0] sm:$0xff]
      %v1852 = vld [vmem:[%s3 + $0x1d8] sm:$0xff]
      %v1853 = vld [vmem:[%s3 + $0x1e0] sm:$0xff]
      %v1854 = vld [vmem:[%s3 + $0x1e8] sm:$0xff]
      %v1855 = vld [vmem:[%s3 + $0x1f0] sm:$0xff]
      %v1856 = vld [vmem:[%s3 + $0x1f8] sm:$0xff]
      %v1857 = vld [vmem:[%s3 + $0x200] sm:$0xff]
      %v1858 = vld [vmem:[%s3 + $0x208] sm:$0xff]
      %v1859 = vld [vmem:[%s3 + $0x210] sm:$0xff]
      %v1860 = vld [vmem:[%s3 + $0x218] sm:$0xff]
      %v1861 = vld [vmem:[%s3 + $0x220] sm:$0xff]
      %v1862 = vld [vmem:[%s3 + $0x228] sm:$0xff]
      %v1863 = vld [vmem:[%s3 + $0x230] sm:$0xff]
      %v1864 = vld [vmem:[%s3 + $0x238] sm:$0xff]
      %v1865 = vld [vmem:[%s3 + $0x240] sm:$0xff]
      %v1866 = vld [vmem:[%s3 + $0x248] sm:$0xff]
      %v1867 = vld [vmem:[%s3 + $0x250] sm:$0xff]
      %v1868 = vld [vmem:[%s3 + $0x258] sm:$0xff]
      %v1869 = vld [vmem:[%s3 + $0x260] sm:$0xff]
      %v1870 = vld [vmem:[%s3 + $0x268] sm:$0xff]
      %v1871 = vld [vmem:[%s3 + $0x270] sm:$0xff]
      %v1872 = vld [vmem:[%s3 + $0x278] sm:$0xff]
      %v1873 = vld [vmem:[%s3 + $0x280] sm:$0xff]
      %v1874 = vld [vmem:[%s3 + $0x288] sm:$0xff]
      %v1875 = vld [vmem:[%s3 + $0x290] sm:$0xff]
      %v1876 = vld [vmem:[%s3 + $0x298] sm:$0xff]
      %v1877 = vld [vmem:[%s3 + $0x2a0] sm:$0xff]
      %v1878 = vld [vmem:[%s3 + $0x2a8] sm:$0xff]
      %v1879 = vld [vmem:[%s3 + $0x2b0] sm:$0xff]
      %v1880 = vld [vmem:[%s3 + $0x2b8] sm:$0xff]
      %v1881 = vld [vmem:[%s3 + $0x2c0] sm:$0xff]
      %v1882 = vld [vmem:[%s3 + $0x2c8] sm:$0xff]
      %v1883 = vld [vmem:[%s3 + $0x2d0] sm:$0xff]
      %v1884 = vld [vmem:[%s3 + $0x2d8] sm:$0xff]
      %v1885 = vld [vmem:[%s3 + $0x2e0] sm:$0xff]
      %v1886 = vld [vmem:[%s3 + $0x2e8] sm:$0xff]
      %v1887 = vld [vmem:[%s3 + $0x2f0] sm:$0xff]
      %v1888 = vld [vmem:[%s3 + $0x2f8] sm:$0xff]
      %s1889 = scalar_lea.vmem %s3, 768
      %v1890 = vld [vmem:[%s1889] sm:$0xff]
      %v1891 = vld [vmem:[%s1889 + $0x8] sm:$0xff]
      %v1892 = vld [vmem:[%s1889 + $0x10] sm:$0xff]
      %v1893 = vld [vmem:[%s1889 + $0x18] sm:$0xff]
      %v1894 = vld [vmem:[%s1889 + $0x20] sm:$0xff]
      %v1895 = vld [vmem:[%s1889 + $0x28] sm:$0xff]
      %v1896 = vld [vmem:[%s1889 + $0x30] sm:$0xff]
      %v1897 = vld [vmem:[%s1889 + $0x38] sm:$0xff]
      %v1898 = vld [vmem:[%s1889 + $0x40] sm:$0xff]
      %v1899 = vld [vmem:[%s1889 + $0x48] sm:$0xff]
      %v1900 = vld [vmem:[%s1889 + $0x50] sm:$0xff]
      %v1901 = vld [vmem:[%s1889 + $0x58] sm:$0xff]
      %v1902 = vld [vmem:[%s1889 + $0x60] sm:$0xff]
      %v1903 = vld [vmem:[%s1889 + $0x68] sm:$0xff]
      %v1904 = vld [vmem:[%s1889 + $0x70] sm:$0xff]
      %v1905 = vld [vmem:[%s1889 + $0x78] sm:$0xff]
      %v1906 = vld [vmem:[%s1889 + $0x80] sm:$0xff]
      %v1907 = vld [vmem:[%s1889 + $0x88] sm:$0xff]
      %v1908 = vld [vmem:[%s1889 + $0x90] sm:$0xff]
      %v1909 = vld [vmem:[%s1889 + $0x98] sm:$0xff]
      %v1910 = vld [vmem:[%s1889 + $0xa0] sm:$0xff]
      %v1911 = vld [vmem:[%s1889 + $0xa8] sm:$0xff]
      %v1912 = vld [vmem:[%s1889 + $0xb0] sm:$0xff]
      %v1913 = vld [vmem:[%s1889 + $0xb8] sm:$0xff]
      %v1914 = vld [vmem:[%s1889 + $0xc0] sm:$0xff]
      %v1915 = vld [vmem:[%s1889 + $0xc8] sm:$0xff]
      %v1916 = vld [vmem:[%s1889 + $0xd0] sm:$0xff]
      %v1917 = vld [vmem:[%s1889 + $0xd8] sm:$0xff]
      %v1918 = vld [vmem:[%s1889 + $0xe0] sm:$0xff]
      %v1919 = vld [vmem:[%s1889 + $0xe8] sm:$0xff]
      %v1920 = vld [vmem:[%s1889 + $0xf0] sm:$0xff]
      %v1921 = vld [vmem:[%s1889 + $0xf8] sm:$0xff]
      %v1922 = vld [vmem:[%s1889 + $0x100] sm:$0xff]
      %v1923 = vld [vmem:[%s1889 + $0x108] sm:$0xff]
      %v1924 = vld [vmem:[%s1889 + $0x110] sm:$0xff]
      %v1925 = vld [vmem:[%s1889 + $0x118] sm:$0xff]
      %v1926 = vld [vmem:[%s1889 + $0x120] sm:$0xff]
      %v1927 = vld [vmem:[%s1889 + $0x128] sm:$0xff]
      %v1928 = vld [vmem:[%s1889 + $0x130] sm:$0xff]
      %v1929 = vld [vmem:[%s1889 + $0x138] sm:$0xff]
      %v1930 = vld [vmem:[%s1889 + $0x140] sm:$0xff]
      %v1931 = vld [vmem:[%s1889 + $0x148] sm:$0xff]
      %v1932 = vld [vmem:[%s1889 + $0x150] sm:$0xff]
      %v1933 = vld [vmem:[%s1889 + $0x158] sm:$0xff]
      %v1934 = vld [vmem:[%s1889 + $0x160] sm:$0xff]
      %v1935 = vld [vmem:[%s1889 + $0x168] sm:$0xff]
      %v1936 = vld [vmem:[%s1889 + $0x170] sm:$0xff]
      %v1937 = vld [vmem:[%s1889 + $0x178] sm:$0xff]
      %v1938 = vld [vmem:[%s1889 + $0x180] sm:$0xff]
      %v1939 = vld [vmem:[%s1889 + $0x188] sm:$0xff]
      %v1940 = vld [vmem:[%s1889 + $0x190] sm:$0xff]
      %v1941 = vld [vmem:[%s1889 + $0x198] sm:$0xff]
      %v1942 = vld [vmem:[%s1889 + $0x1a0] sm:$0xff]
      %v1943 = vld [vmem:[%s1889 + $0x1a8] sm:$0xff]
      %v1944 = vld [vmem:[%s1889 + $0x1b0] sm:$0xff]
      %v1945 = vld [vmem:[%s1889 + $0x1b8] sm:$0xff]
      %v1946 = vld [vmem:[%s1889 + $0x1c0] sm:$0xff]
      %v1947 = vld [vmem:[%s1889 + $0x1c8] sm:$0xff]
      %v1948 = vld [vmem:[%s1889 + $0x1d0] sm:$0xff]
      %v1949 = vld [vmem:[%s1889 + $0x1d8] sm:$0xff]
      %v1950 = vld [vmem:[%s1889 + $0x1e0] sm:$0xff]
      %v1951 = vld [vmem:[%s1889 + $0x1e8] sm:$0xff]
      %v1952 = vld [vmem:[%s1889 + $0x1f0] sm:$0xff]
      %v1953 = vld [vmem:[%s1889 + $0x1f8] sm:$0xff]
      %v1954 = vld [vmem:[%s1889 + $0x200] sm:$0xff]
      %v1955 = vld [vmem:[%s1889 + $0x208] sm:$0xff]
      %v1956 = vld [vmem:[%s1889 + $0x210] sm:$0xff]
      %v1957 = vld [vmem:[%s1889 + $0x218] sm:$0xff]
      %v1958 = vld [vmem:[%s1889 + $0x220] sm:$0xff]
      %v1959 = vld [vmem:[%s1889 + $0x228] sm:$0xff]
      %v1960 = vld [vmem:[%s1889 + $0x230] sm:$0xff]
      %v1961 = vld [vmem:[%s1889 + $0x238] sm:$0xff]
      %v1962 = vld [vmem:[%s1889 + $0x240] sm:$0xff]
      %v1963 = vld [vmem:[%s1889 + $0x248] sm:$0xff]
      %v1964 = vld [vmem:[%s1889 + $0x250] sm:$0xff]
      %v1965 = vld [vmem:[%s1889 + $0x258] sm:$0xff]
      %v1966 = vld [vmem:[%s1889 + $0x260] sm:$0xff]
      %v1967 = vld [vmem:[%s1889 + $0x268] sm:$0xff]
      %v1968 = vld [vmem:[%s1889 + $0x270] sm:$0xff]
      %v1969 = vld [vmem:[%s1889 + $0x278] sm:$0xff]
      %v1970 = vld [vmem:[%s1889 + $0x280] sm:$0xff]
      %v1971 = vld [vmem:[%s1889 + $0x288] sm:$0xff]
      %v1972 = vld [vmem:[%s1889 + $0x290] sm:$0xff]
      %v1973 = vld [vmem:[%s1889 + $0x298] sm:$0xff]
      %v1974 = vld [vmem:[%s1889 + $0x2a0] sm:$0xff]
      %v1975 = vld [vmem:[%s1889 + $0x2a8] sm:$0xff]
      %v1976 = vld [vmem:[%s1889 + $0x2b0] sm:$0xff]
      %v1977 = vld [vmem:[%s1889 + $0x2b8] sm:$0xff]
      %v1978 = vld [vmem:[%s1889 + $0x2c0] sm:$0xff]
      %v1979 = vld [vmem:[%s1889 + $0x2c8] sm:$0xff]
      %v1980 = vld [vmem:[%s1889 + $0x2d0] sm:$0xff]
      %v1981 = vld [vmem:[%s1889 + $0x2d8] sm:$0xff]
      %v1982 = vld [vmem:[%s1889 + $0x2e0] sm:$0xff]
      %v1983 = vld [vmem:[%s1889 + $0x2e8] sm:$0xff]
      %v1984 = vld [vmem:[%s1889 + $0x2f0] sm:$0xff]
      %v1985 = vld [vmem:[%s1889 + $0x2f8] sm:$0xff]
      %2022 = vrot.lane.b32.xlu0 %v905, 96
      %v2023 = vpop.permute.xlu0 %2022
      %2024 = vrot.lane.b32.xlu0 %v910, 96
      %v2025 = vpop.permute.xlu0 %2024
      %2026 = vrot.lane.b32.xlu0 %v915, 96
      %v2027 = vpop.permute.xlu0 %2026
      %2028 = vrot.lane.b32.xlu0 %v920, 96
      %v2029 = vpop.permute.xlu0 %2028
      %2030 = vrot.lane.b32.xlu0 %v925, 96
      %v2031 = vpop.permute.xlu0 %2030
      %2032 = vrot.lane.b32.xlu0 %v930, 96
      %v2033 = vpop.permute.xlu0 %2032
      %2034 = vrot.lane.b32.xlu0 %v935, 96
      %v2035 = vpop.permute.xlu0 %2034
      %2036 = vrot.lane.b32.xlu0 %v940, 96
      %v2037 = vpop.permute.xlu0 %2036
      %2038 = vrot.lane.b32.xlu0 %v945, 96
      %v2039 = vpop.permute.xlu0 %2038
      %2040 = vrot.lane.b32.xlu0 %v950, 96
      %v2041 = vpop.permute.xlu0 %2040
      %2042 = vrot.lane.b32.xlu0 %v955, 96
      %v2043 = vpop.permute.xlu0 %2042
      %2044 = vrot.lane.b32.xlu0 %v960, 96
      %v2045 = vpop.permute.xlu0 %2044
      %2046 = vrot.lane.b32.xlu0 %v1320, 96
      %v2047 = vpop.permute.xlu0 %2046
      %2048 = vrot.lane.b32.xlu0 %v1325, 96
      %v2049 = vpop.permute.xlu0 %2048
      %2050 = vrot.lane.b32.xlu0 %v1330, 96
      %v2051 = vpop.permute.xlu0 %2050
      %2052 = vrot.lane.b32.xlu0 %v1335, 96
      %v2053 = vpop.permute.xlu0 %2052
      %2054 = vrot.lane.b32.xlu0 %v1340, 96
      %v2055 = vpop.permute.xlu0 %2054
      %2056 = vrot.lane.b32.xlu0 %v1345, 96
      %v2057 = vpop.permute.xlu0 %2056
      %2058 = vrot.lane.b32.xlu0 %v1350, 96
      %v2059 = vpop.permute.xlu0 %2058
      %2060 = vrot.lane.b32.xlu0 %v1355, 96
      %v2061 = vpop.permute.xlu0 %2060
      %2062 = vrot.lane.b32.xlu0 %v1360, 96
      %v2063 = vpop.permute.xlu0 %2062
      %2064 = vrot.lane.b32.xlu0 %v1365, 96
      %v2065 = vpop.permute.xlu0 %2064
      %2066 = vrot.lane.b32.xlu0 %v1370, 96
      %v2067 = vpop.permute.xlu0 %2066
      %2068 = vrot.lane.b32.xlu0 %v1375, 96
      %v2069 = vpop.permute.xlu0 %2068
      %2070 = vrot.lane.b32.xlu0 %v1735, 96
      %v2071 = vpop.permute.xlu0 %2070
      %2072 = vrot.lane.b32.xlu0 %v1740, 96
      %v2073 = vpop.permute.xlu0 %2072
      %2074 = vrot.lane.b32.xlu0 %v1745, 96
      %v2075 = vpop.permute.xlu0 %2074
      %2076 = vrot.lane.b32.xlu0 %v1750, 96
      %v2077 = vpop.permute.xlu0 %2076
      %2078 = vrot.lane.b32.xlu0 %v1755, 96
      %v2079 = vpop.permute.xlu0 %2078
      %2080 = vrot.lane.b32.xlu0 %v1760, 96
      %v2081 = vpop.permute.xlu0 %2080
      %2082 = vrot.lane.b32.xlu0 %v1765, 96
      %v2083 = vpop.permute.xlu0 %2082
      %2084 = vrot.lane.b32.xlu0 %v1770, 96
      %v2085 = vpop.permute.xlu0 %2084
      %2086 = vrot.lane.b32.xlu0 %v1775, 96
      %v2087 = vpop.permute.xlu0 %2086
      %2088 = vrot.lane.b32.xlu0 %v1780, 96
      %v2089 = vpop.permute.xlu0 %2088
      %2090 = vrot.lane.b32.xlu0 %v1785, 96
      %v2091 = vpop.permute.xlu0 %2090
      %2092 = vrot.lane.b32.xlu0 %v1790, 96
      %v2093 = vpop.permute.xlu0 %2092
      %vm2130 = vcmask 261120
      %v2132 = vsel %vm2130, %v1892, 0
      %v2135 = vsel %vm2130, %v1895, 0
      %v2138 = vsel %vm2130, %v1898, 0
      %v2141 = vsel %vm2130, %v1901, 0
      %v2144 = vsel %vm2130, %v1904, 0
      %v2147 = vsel %vm2130, %v1907, 0
      %v2150 = vsel %vm2130, %v1910, 0
      %v2153 = vsel %vm2130, %v1913, 0
      %v2156 = vsel %vm2130, %v1916, 0
      %v2159 = vsel %vm2130, %v1919, 0
      %v2162 = vsel %vm2130, %v1922, 0
      %v2165 = vsel %vm2130, %v1925, 0
      %v2168 = vsel %vm2130, %v1928, 0
      %v2171 = vsel %vm2130, %v1931, 0
      %v2174 = vsel %vm2130, %v1934, 0
      %v2177 = vsel %vm2130, %v1937, 0
      %v2180 = vsel %vm2130, %v1940, 0
      %v2183 = vsel %vm2130, %v1943, 0
      %v2186 = vsel %vm2130, %v1946, 0
      %v2189 = vsel %vm2130, %v1949, 0
      %v2192 = vsel %vm2130, %v1952, 0
      %v2195 = vsel %vm2130, %v1955, 0
      %v2198 = vsel %vm2130, %v1958, 0
      %v2201 = vsel %vm2130, %v1961, 0
      %v2204 = vsel %vm2130, %v1964, 0
      %v2207 = vsel %vm2130, %v1967, 0
      %v2210 = vsel %vm2130, %v1970, 0
      %v2213 = vsel %vm2130, %v1973, 0
      %v2216 = vsel %vm2130, %v1976, 0
      %v2219 = vsel %vm2130, %v1979, 0
      %v2222 = vsel %vm2130, %v1982, 0
      %v2225 = vsel %vm2130, %v1985, 0
      %2227 = vmatprep.subr.mxu0 0.0
      %2228 = vmatpush1.msra.mxu0 %v2023
      %2229 = vmatprep.subr.mxu0 0.0
      %2230 = vmatpush1.msra.mxu0 %v2025
      %2231 = vmatprep.subr.mxu0 0.0
      %2232 = vmatpush1.msra.mxu0 %v2027
      %2233 = vmatprep.subr.mxu0 0.0
      %2234 = vmatpush1.msra.mxu0 %v2029
      %2235 = vmatprep.subr.mxu0 0.0
      %2236 = vmatpush1.msra.mxu0 %v2031
      %2237 = vmatprep.subr.mxu0 0.0
      %2238 = vmatpush1.msra.mxu0 %v2033
      %2239 = vmatprep.subr.mxu0 0.0
      %2240 = vmatpush1.msra.mxu0 %v2035
      %2241 = vmatprep.subr.mxu0 0.0
      %2242 = vmatpush1.msra.mxu0 %v2037
      %2243 = vmatprep.subr.mxu0 0.0
      %2244 = vmatpush1.msra.mxu0 %v2039
      %2245 = vmatprep.subr.mxu0 0.0
      %2246 = vmatpush1.msra.mxu0 %v2041
      %2247 = vmatprep.subr.mxu0 0.0
      %2248 = vmatpush1.msra.mxu0 %v2043
      %2249 = vmatprep.subr.mxu0 0.0
      %2250 = vmatpush1.msra.mxu0 %v2045
      %2251 = vmatprep.subr.mxu0 0.0
      %2252 = vmatpush1.msra.mxu0 %v2047
      %2253 = vmatprep.subr.mxu0 0.0
      %2254 = vmatpush1.msra.mxu0 %v2049
      %2255 = vmatprep.subr.mxu0 0.0
      %2256 = vmatpush1.msra.mxu0 %v2051
      %2257 = vmatprep.subr.mxu0 0.0
      %2258 = vmatpush1.msra.mxu0 %v2053
      %2259 = vmatprep.subr.mxu0 0.0
      %2260 = vmatpush1.msra.mxu0 %v2055
      %2261 = vmatprep.subr.mxu0 0.0
      %2262 = vmatpush1.msra.mxu0 %v2057
      %2263 = vmatprep.subr.mxu0 0.0
      %2264 = vmatpush1.msra.mxu0 %v2059
      %2265 = vmatprep.subr.mxu0 0.0
      %2266 = vmatpush1.msra.mxu0 %v2061
      %2267 = vmatprep.subr.mxu0 0.0
      %2268 = vmatpush1.msra.mxu0 %v2063
      %2269 = vmatprep.subr.mxu0 0.0
      %2270 = vmatpush1.msra.mxu0 %v2065
      %2271 = vmatprep.subr.mxu0 0.0
      %2272 = vmatpush1.msra.mxu0 %v2067
      %2273 = vmatprep.subr.mxu0 0.0
      %2274 = vmatpush1.msra.mxu0 %v2069
      %2275 = vmatprep.subr.mxu0 0.0
      %2276 = vmatpush1.msra.mxu0 %v2071
      %2277 = vmatprep.subr.mxu0 0.0
      %2278 = vmatpush1.msra.mxu0 %v2073
      %2279 = vmatprep.subr.mxu0 0.0
      %2280 = vmatpush1.msra.mxu0 %v2075
      %2281 = vmatprep.subr.mxu0 0.0
      %2282 = vmatpush1.msra.mxu0 %v2077
      %2283 = vmatprep.subr.mxu0 0.0
      %2284 = vmatpush1.msra.mxu0 %v2079
      %2285 = vmatprep.subr.mxu0 0.0
      %2286 = vmatpush1.msra.mxu0 %v2081
      %2287 = vmatprep.subr.mxu0 0.0
      %2288 = vmatpush1.msra.mxu0 %v2083
      %2289 = vmatprep.subr.mxu0 0.0
      %2290 = vmatpush1.msra.mxu0 %v2085
      %2291 = vmatprep.mubr.f32.mxu0 %v1891
      %2292 = vmatmul.mubr.f32.gmra.mrb[0].mxu0 %v1890
      %v2293 = vpop.f32.mrb[0].mxu0
      %v2294 = vadd.f32 0.0, %v2293
      %v2295 = vpop.f32.mrb[0].mxu0
      %2296 = vmatprep.mubr.f32.mxu0 %v1894
      %2297 = vmatmul.mubr.f32.gmra.mrb[0].mxu0 %v1893
      %v2298 = vpop.f32.mrb[0].mxu0
      %v2299 = vadd.f32 0.0, %v2298
      %v2300 = vpop.f32.mrb[0].mxu0
      %2301 = vmatprep.mubr.f32.mxu0 %v1897
      %2302 = vmatmul.mubr.f32.gmra.mrb[0].mxu0 %v1896
      %v2303 = vpop.f32.mrb[0].mxu0
      %v2304 = vadd.f32 0.0, %v2303
      %v2305 = vpop.f32.mrb[0].mxu0
      %2306 = vmatprep.mubr.f32.mxu0 %v1900
      %2307 = vmatmul.mubr.f32.gmra.mrb[0].mxu0 %v1899
      %v2308 = vpop.f32.mrb[0].mxu0
      %v2309 = vadd.f32 0.0, %v2308
      %v2310 = vpop.f32.mrb[0].mxu0
      %2311 = vmatprep.mubr.f32.mxu0 %v1903
      %2312 = vmatmul.mubr.f32.gmra.mrb[0].mxu0 %v1902
      %v2313 = vpop.f32.mrb[0].mxu0
      %v2314 = vadd.f32 0.0, %v2313
      %v2315 = vpop.f32.mrb[0].mxu0
      %2316 = vmatprep.mubr.f32.mxu0 %v1906
      %2317 = vmatmul.mubr.f32.gmra.mrb[0].mxu0 %v1905
      %v2318 = vpop.f32.mrb[0].mxu0
      %v2319 = vadd.f32 0.0, %v2318
      %v2320 = vpop.f32.mrb[0].mxu0
      %2321 = vmatprep.mubr.f32.mxu0 %v1909
      %2322 = vmatmul.mubr.f32.gmra.mrb[0].mxu0 %v1908
      %v2323 = vpop.f32.mrb[0].mxu0
      %v2324 = vadd.f32 0.0, %v2323
      %v2325 = vpop.f32.mrb[0].mxu0
      %2326 = vmatprep.mubr.f32.mxu0 %v1912
      %2327 = vmatmul.mubr.f32.gmra.mrb[0].mxu0 %v1911
      %v2328 = vpop.f32.mrb[0].mxu0
      %v2329 = vadd.f32 0.0, %v2328
      %v2330 = vpop.f32.mrb[0].mxu0
      %2331 = vmatprep.mubr.f32.mxu0 %v1915
      %2332 = vmatmul.mubr.f32.gmra.mrb[0].mxu0 %v1914
      %v2333 = vpop.f32.mrb[0].mxu0
      %v2334 = vadd.f32 0.0, %v2333
      %v2335 = vpop.f32.mrb[0].mxu0
      %2336 = vmatprep.mubr.f32.mxu0 %v1918
      %2337 = vmatmul.mubr.f32.gmra.mrb[0].mxu0 %v1917
      %v2338 = vpop.f32.mrb[0].mxu0
      %v2339 = vadd.f32 0.0, %v2338
      %v2340 = vpop.f32.mrb[0].mxu0
      %2341 = vmatprep.mubr.f32.mxu0 %v1921
      %2342 = vmatmul.mubr.f32.gmra.mrb[0].mxu0 %v1920
      %v2343 = vpop.f32.mrb[0].mxu0
      %v2344 = vadd.f32 0.0, %v2343
      %v2345 = vpop.f32.mrb[0].mxu0
      %2346 = vmatprep.mubr.f32.mxu0 %v1924
      %2347 = vmatmul.mubr.f32.gmra.mrb[0].mxu0 %v1923
      %v2348 = vpop.f32.mrb[0].mxu0
      %v2349 = vadd.f32 0.0, %v2348
      %v2350 = vpop.f32.mrb[0].mxu0
      %2351 = vmatprep.mubr.f32.mxu0 %v1927
      %2352 = vmatmul.mubr.f32.gmra.mrb[0].mxu0 %v1926
      %v2353 = vpop.f32.mrb[0].mxu0
      %v2354 = vadd.f32 0.0, %v2353
      %v2355 = vpop.f32.mrb[0].mxu0
      %2356 = vmatprep.mubr.f32.mxu0 %v1930
      %2357 = vmatmul.mubr.f32.gmra.mrb[0].mxu0 %v1929
      %v2358 = vpop.f32.mrb[0].mxu0
      %v2359 = vadd.f32 0.0, %v2358
      %v2360 = vpop.f32.mrb[0].mxu0
      %2361 = vmatprep.mubr.f32.mxu0 %v1933
      %2362 = vmatmul.mubr.f32.gmra.mrb[0].mxu0 %v1932
      %v2363 = vpop.f32.mrb[0].mxu0
      %v2364 = vadd.f32 0.0, %v2363
      %v2365 = vpop.f32.mrb[0].mxu0
      %2366 = vmatprep.mubr.f32.mxu0 %v1936
      %2367 = vmatmul.mubr.f32.gmra.mrb[0].mxu0 %v1935
      %v2368 = vpop.f32.mrb[0].mxu0
      %v2369 = vadd.f32 0.0, %v2368
      %v2370 = vpop.f32.mrb[0].mxu0
      %2371 = vmatprep.mubr.f32.mxu0 %v1939
      %2372 = vmatmul.mubr.f32.gmra.mrb[0].mxu0 %v1938
      %v2373 = vpop.f32.mrb[0].mxu0
      %v2374 = vadd.f32 0.0, %v2373
      %v2375 = vpop.f32.mrb[0].mxu0
      %2376 = vmatprep.mubr.f32.mxu0 %v1942
      %2377 = vmatmul.mubr.f32.gmra.mrb[0].mxu0 %v1941
      %v2378 = vpop.f32.mrb[0].mxu0
      %v2379 = vadd.f32 0.0, %v2378
      %v2380 = vpop.f32.mrb[0].mxu0
      %2381 = vmatprep.mubr.f32.mxu0 %v1945
      %2382 = vmatmul.mubr.f32.gmra.mrb[0].mxu0 %v1944
      %v2383 = vpop.f32.mrb[0].mxu0
      %v2384 = vadd.f32 0.0, %v2383
      %v2385 = vpop.f32.mrb[0].mxu0
      %2386 = vmatprep.mubr.f32.mxu0 %v1948
      %2387 = vmatmul.mubr.f32.gmra.mrb[0].mxu0 %v1947
      %v2388 = vpop.f32.mrb[0].mxu0
      %v2389 = vadd.f32 0.0, %v2388
      %v2390 = vpop.f32.mrb[0].mxu0
      %2391 = vmatprep.mubr.f32.mxu0 %v1951
      %2392 = vmatmul.mubr.f32.gmra.mrb[0].mxu0 %v1950
      %v2393 = vpop.f32.mrb[0].mxu0
      %v2394 = vadd.f32 0.0, %v2393
      %v2395 = vpop.f32.mrb[0].mxu0
      %2396 = vmatprep.mubr.f32.mxu0 %v1954
      %2397 = vmatmul.mubr.f32.gmra.mrb[0].mxu0 %v1953
      %v2398 = vpop.f32.mrb[0].mxu0
      %v2399 = vadd.f32 0.0, %v2398
      %v2400 = vpop.f32.mrb[0].mxu0
      %2401 = vmatprep.mubr.f32.mxu0 %v1957
      %2402 = vmatmul.mubr.f32.gmra.mrb[0].mxu0 %v1956
      %v2403 = vpop.f32.mrb[0].mxu0
      %v2404 = vadd.f32 0.0, %v2403
      %v2405 = vpop.f32.mrb[0].mxu0
      %2406 = vmatprep.mubr.f32.mxu0 %v1960
      %2407 = vmatmul.mubr.f32.gmra.mrb[0].mxu0 %v1959
      %v2408 = vpop.f32.mrb[0].mxu0
      %v2409 = vadd.f32 0.0, %v2408
      %v2410 = vpop.f32.mrb[0].mxu0
      %2411 = vmatprep.mubr.f32.mxu0 %v1963
      %2412 = vmatmul.mubr.f32.gmra.mrb[0].mxu0 %v1962
      %v2413 = vpop.f32.mrb[0].mxu0
      %v2414 = vadd.f32 0.0, %v2413
      %v2415 = vpop.f32.mrb[0].mxu0
      %2416 = vmatprep.mubr.f32.mxu0 %v1966
      %2417 = vmatmul.mubr.f32.gmra.mrb[0].mxu0 %v1965
      %v2418 = vpop.f32.mrb[0].mxu0
      %v2419 = vadd.f32 0.0, %v2418
      %v2420 = vpop.f32.mrb[0].mxu0
      %2421 = vmatprep.mubr.f32.mxu0 %v1969
      %2422 = vmatmul.mubr.f32.gmra.mrb[0].mxu0 %v1968
      %v2423 = vpop.f32.mrb[0].mxu0
      %v2424 = vadd.f32 0.0, %v2423
      %v2425 = vpop.f32.mrb[0].mxu0
      %2426 = vmatprep.mubr.f32.mxu0 %v1972
      %2427 = vmatmul.mubr.f32.gmra.mrb[0].mxu0 %v1971
      %v2428 = vpop.f32.mrb[0].mxu0
      %v2429 = vadd.f32 0.0, %v2428
      %v2430 = vpop.f32.mrb[0].mxu0
      %2431 = vmatprep.mubr.f32.mxu0 %v1975
      %2432 = vmatmul.mubr.f32.gmra.mrb[0].mxu0 %v1974
      %v2433 = vpop.f32.mrb[0].mxu0
      %v2434 = vadd.f32 0.0, %v2433
      %v2435 = vpop.f32.mrb[0].mxu0
      %2436 = vmatprep.mubr.f32.mxu0 %v1978
      %2437 = vmatmul.mubr.f32.gmra.mrb[0].mxu0 %v1977
      %v2438 = vpop.f32.mrb[0].mxu0
      %v2439 = vadd.f32 0.0, %v2438
      %v2440 = vpop.f32.mrb[0].mxu0
      %2441 = vmatprep.mubr.f32.mxu0 %v1981
      %2442 = vmatmul.mubr.f32.gmra.mrb[0].mxu0 %v1980
      %v2443 = vpop.f32.mrb[0].mxu0
      %v2444 = vadd.f32 0.0, %v2443
      %v2445 = vpop.f32.mrb[0].mxu0
      %2446 = vmatprep.mubr.f32.mxu0 %v1984
      %2447 = vmatmul.mubr.f32.gmra.mrb[0].mxu0 %v1983
      %v2448 = vpop.f32.mrb[0].mxu0
      %v2449 = vadd.f32 0.0, %v2448
      %v2450 = vpop.f32.mrb[0].mxu0
      %2451 = vdwg.mxu0
      %2452 = vmatprep.subr.mxu0 0.0
      %2453 = vmatpush1.msra.mxu0 %v2087
      %2454 = vmatprep.subr.mxu0 0.0
      %2455 = vmatpush1.msra.mxu0 %v2089
      %2456 = vmatprep.subr.mxu0 0.0
      %2457 = vmatpush1.msra.mxu0 %v2091
      %2458 = vmatprep.subr.mxu0 0.0
      %2459 = vmatpush1.msra.mxu0 %v2093
      %2460 = vmatprep.subr.mxu0 0.0
      %2461 = vmatpush1.msra.mxu0 0.0
      %2462 = vmatprep.subr.mxu0 0.0
      %2463 = vmatpush1.msra.mxu0 0.0
      %2464 = vmatprep.subr.mxu0 0.0
      %2465 = vmatpush1.msra.mxu0 0.0
      %2466 = vmatprep.subr.mxu0 0.0
      %2467 = vmatpush1.msra.mxu0 0.0
      %2468 = vmatprep.subr.mxu0 0.0
      %2469 = vmatpush1.msra.mxu0 0.0
      %2470 = vmatprep.subr.mxu0 0.0
      %2471 = vmatpush1.msra.mxu0 0.0
      %2472 = vmatprep.subr.mxu0 0.0
      %2473 = vmatpush1.msra.mxu0 0.0
      %2474 = vmatprep.subr.mxu0 0.0
      %2475 = vmatpush1.msra.mxu0 0.0
      %2476 = vmatprep.subr.mxu0 0.0
      %2477 = vmatpush1.msra.mxu0 0.0
      %2478 = vmatprep.subr.mxu0 0.0
      %2479 = vmatpush1.msra.mxu0 0.0
      %2480 = vmatprep.subr.mxu0 0.0
      %2481 = vmatpush1.msra.mxu0 0.0
      %2482 = vmatprep.subr.mxu0 0.0
      %2483 = vmatpush1.msra.mxu0 0.0
      %2484 = vmatprep.subr.mxu0 0.0
      %2485 = vmatpush1.msra.mxu0 0.0
      %2486 = vmatprep.subr.mxu0 0.0
      %2487 = vmatpush1.msra.mxu0 0.0
      %2488 = vmatprep.subr.mxu0 0.0
      %2489 = vmatpush1.msra.mxu0 0.0
      %2490 = vmatprep.subr.mxu0 0.0
      %2491 = vmatpush1.msra.mxu0 0.0
      %2492 = vmatprep.subr.mxu0 0.0
      %2493 = vmatpush1.msra.mxu0 0.0
      %2494 = vmatprep.subr.mxu0 0.0
      %2495 = vmatpush1.msra.mxu0 0.0
      %2496 = vmatprep.subr.mxu0 0.0
      %2497 = vmatpush1.msra.mxu0 0.0
      %2498 = vmatprep.subr.mxu0 0.0
      %2499 = vmatpush1.msra.mxu0 0.0
      %2500 = vmatprep.subr.mxu0 0.0
      %2501 = vmatpush1.msra.mxu0 0.0
      %2502 = vmatprep.subr.mxu0 0.0
      %2503 = vmatpush1.msra.mxu0 0.0
      %2504 = vmatprep.subr.mxu0 0.0
      %2505 = vmatpush1.msra.mxu0 0.0
      %2506 = vmatprep.subr.mxu0 0.0
      %2507 = vmatpush1.msra.mxu0 0.0
      %2508 = vmatprep.subr.mxu0 0.0
      %2509 = vmatpush1.msra.mxu0 0.0
      %2510 = vmatprep.subr.mxu0 0.0
      %2511 = vmatpush1.msra.mxu0 0.0
      %2512 = vmatprep.subr.mxu0 0.0
      %2513 = vmatpush1.msra.mxu0 0.0
      %2514 = vmatprep.subr.mxu0 0.0
      %2515 = vmatpush1.msra.mxu0 0.0
      %2516 = vmatprep.mubr.f32.mxu0 0.0
      %2517 = vmatmul.mubr.f32.gmra.mrb[0].mxu0 %v2132
      %v2518 = vpop.f32.mrb[0].mxu0
      %v2519 = vadd.f32 %v2294, %v2518
      %v2520 = vpop.f32.mrb[0].mxu0
      %2521 = vmatprep.mubr.f32.mxu0 0.0
      %2522 = vmatmul.mubr.f32.gmra.mrb[0].mxu0 %v2135
      %v2523 = vpop.f32.mrb[0].mxu0
      %v2524 = vadd.f32 %v2299, %v2523
      %v2525 = vpop.f32.mrb[0].mxu0
      %2526 = vmatprep.mubr.f32.mxu0 0.0
      %2527 = vmatmul.mubr.f32.gmra.mrb[0].mxu0 %v2138
      %v2528 = vpop.f32.mrb[0].mxu0
      %v2529 = vadd.f32 %v2304, %v2528
      %v2530 = vpop.f32.mrb[0].mxu0
      %2531 = vmatprep.mubr.f32.mxu0 0.0
      %2532 = vmatmul.mubr.f32.gmra.mrb[0].mxu0 %v2141
      %v2533 = vpop.f32.mrb[0].mxu0
      %v2534 = vadd.f32 %v2309, %v2533
      %v2535 = vpop.f32.mrb[0].mxu0
      %2536 = vmatprep.mubr.f32.mxu0 0.0
      %2537 = vmatmul.mubr.f32.gmra.mrb[0].mxu0 %v2144
      %v2538 = vpop.f32.mrb[0].mxu0
      %v2539 = vadd.f32 %v2314, %v2538
      %v2540 = vpop.f32.mrb[0].mxu0
      %2541 = vmatprep.mubr.f32.mxu0 0.0
      %2542 = vmatmul.mubr.f32.gmra.mrb[0].mxu0 %v2147
      %v2543 = vpop.f32.mrb[0].mxu0
      %v2544 = vadd.f32 %v2319, %v2543
      %v2545 = vpop.f32.mrb[0].mxu0
      %2546 = vmatprep.mubr.f32.mxu0 0.0
      %2547 = vmatmul.mubr.f32.gmra.mrb[0].mxu0 %v2150
      %v2548 = vpop.f32.mrb[0].mxu0
      %v2549 = vadd.f32 %v2324, %v2548
      %v2550 = vpop.f32.mrb[0].mxu0
      %2551 = vmatprep.mubr.f32.mxu0 0.0
      %2552 = vmatmul.mubr.f32.gmra.mrb[0].mxu0 %v2153
      %v2553 = vpop.f32.mrb[0].mxu0
      %v2554 = vadd.f32 %v2329, %v2553
      %v2555 = vpop.f32.mrb[0].mxu0
      %2556 = vmatprep.mubr.f32.mxu0 0.0
      %2557 = vmatmul.mubr.f32.gmra.mrb[0].mxu0 %v2156
      %v2558 = vpop.f32.mrb[0].mxu0
      %v2559 = vadd.f32 %v2334, %v2558
      %v2560 = vpop.f32.mrb[0].mxu0
      %2561 = vmatprep.mubr.f32.mxu0 0.0
      %2562 = vmatmul.mubr.f32.gmra.mrb[0].mxu0 %v2159
      %v2563 = vpop.f32.mrb[0].mxu0
      %v2564 = vadd.f32 %v2339, %v2563
      %v2565 = vpop.f32.mrb[0].mxu0
      %2566 = vmatprep.mubr.f32.mxu0 0.0
      %2567 = vmatmul.mubr.f32.gmra.mrb[0].mxu0 %v2162
      %v2568 = vpop.f32.mrb[0].mxu0
      %v2569 = vadd.f32 %v2344, %v2568
      %v2570 = vpop.f32.mrb[0].mxu0
      %2571 = vmatprep.mubr.f32.mxu0 0.0
      %2572 = vmatmul.mubr.f32.gmra.mrb[0].mxu0 %v2165
      %v2573 = vpop.f32.mrb[0].mxu0
      %v2574 = vadd.f32 %v2349, %v2573
      %v2575 = vpop.f32.mrb[0].mxu0
      %2576 = vmatprep.mubr.f32.mxu0 0.0
      %2577 = vmatmul.mubr.f32.gmra.mrb[0].mxu0 %v2168
      %v2578 = vpop.f32.mrb[0].mxu0
      %v2579 = vadd.f32 %v2354, %v2578
      %v2580 = vpop.f32.mrb[0].mxu0
      %2581 = vmatprep.mubr.f32.mxu0 0.0
      %2582 = vmatmul.mubr.f32.gmra.mrb[0].mxu0 %v2171
      %v2583 = vpop.f32.mrb[0].mxu0
      %v2584 = vadd.f32 %v2359, %v2583
      %v2585 = vpop.f32.mrb[0].mxu0
      %2586 = vmatprep.mubr.f32.mxu0 0.0
      %2587 = vmatmul.mubr.f32.gmra.mrb[0].mxu0 %v2174
      %v2588 = vpop.f32.mrb[0].mxu0
      %v2589 = vadd.f32 %v2364, %v2588
      %v2590 = vpop.f32.mrb[0].mxu0
      %2591 = vmatprep.mubr.f32.mxu0 0.0
      %2592 = vmatmul.mubr.f32.gmra.mrb[0].mxu0 %v2177
      %v2593 = vpop.f32.mrb[0].mxu0
      %v2594 = vadd.f32 %v2369, %v2593
      %v2595 = vpop.f32.mrb[0].mxu0
      %2596 = vmatprep.mubr.f32.mxu0 0.0
      %2597 = vmatmul.mubr.f32.gmra.mrb[0].mxu0 %v2180
      %v2598 = vpop.f32.mrb[0].mxu0
      %v2599 = vadd.f32 %v2374, %v2598
      %v2600 = vpop.f32.mrb[0].mxu0
      %2601 = vmatprep.mubr.f32.mxu0 0.0
      %2602 = vmatmul.mubr.f32.gmra.mrb[0].mxu0 %v2183
      %v2603 = vpop.f32.mrb[0].mxu0
      %v2604 = vadd.f32 %v2379, %v2603
      %v2605 = vpop.f32.mrb[0].mxu0
      %2606 = vmatprep.mubr.f32.mxu0 0.0
      %2607 = vmatmul.mubr.f32.gmra.mrb[0].mxu0 %v2186
      %v2608 = vpop.f32.mrb[0].mxu0
      %v2609 = vadd.f32 %v2384, %v2608
      %v2610 = vpop.f32.mrb[0].mxu0
      %2611 = vmatprep.mubr.f32.mxu0 0.0
      %2612 = vmatmul.mubr.f32.gmra.mrb[0].mxu0 %v2189
      %v2613 = vpop.f32.mrb[0].mxu0
      %v2614 = vadd.f32 %v2389, %v2613
      %v2615 = vpop.f32.mrb[0].mxu0
      %2616 = vmatprep.mubr.f32.mxu0 0.0
      %2617 = vmatmul.mubr.f32.gmra.mrb[0].mxu0 %v2192
      %v2618 = vpop.f32.mrb[0].mxu0
      %v2619 = vadd.f32 %v2394, %v2618
      %v2620 = vpop.f32.mrb[0].mxu0
      %2621 = vmatprep.mubr.f32.mxu0 0.0
      %2622 = vmatmul.mubr.f32.gmra.mrb[0].mxu0 %v2195
      %v2623 = vpop.f32.mrb[0].mxu0
      %v2624 = vadd.f32 %v2399, %v2623
      %v2625 = vpop.f32.mrb[0].mxu0
      %2626 = vmatprep.mubr.f32.mxu0 0.0
      %2627 = vmatmul.mubr.f32.gmra.mrb[0].mxu0 %v2198
      %v2628 = vpop.f32.mrb[0].mxu0
      %v2629 = vadd.f32 %v2404, %v2628
      %v2630 = vpop.f32.mrb[0].mxu0
      %2631 = vmatprep.mubr.f32.mxu0 0.0
      %2632 = vmatmul.mubr.f32.gmra.mrb[0].mxu0 %v2201
      %v2633 = vpop.f32.mrb[0].mxu0
      %v2634 = vadd.f32 %v2409, %v2633
      %v2635 = vpop.f32.mrb[0].mxu0
      %2636 = vmatprep.mubr.f32.mxu0 0.0
      %2637 = vmatmul.mubr.f32.gmra.mrb[0].mxu0 %v2204
      %v2638 = vpop.f32.mrb[0].mxu0
      %v2639 = vadd.f32 %v2414, %v2638
      %v2640 = vpop.f32.mrb[0].mxu0
      %2641 = vmatprep.mubr.f32.mxu0 0.0
      %2642 = vmatmul.mubr.f32.gmra.mrb[0].mxu0 %v2207
      %v2643 = vpop.f32.mrb[0].mxu0
      %v2644 = vadd.f32 %v2419, %v2643
      %v2645 = vpop.f32.mrb[0].mxu0
      %2646 = vmatprep.mubr.f32.mxu0 0.0
      %2647 = vmatmul.mubr.f32.gmra.mrb[0].mxu0 %v2210
      %v2648 = vpop.f32.mrb[0].mxu0
      %v2649 = vadd.f32 %v2424, %v2648
      %v2650 = vpop.f32.mrb[0].mxu0
      %2651 = vmatprep.mubr.f32.mxu0 0.0
      %2652 = vmatmul.mubr.f32.gmra.mrb[0].mxu0 %v2213
      %v2653 = vpop.f32.mrb[0].mxu0
      %v2654 = vadd.f32 %v2429, %v2653
      %v2655 = vpop.f32.mrb[0].mxu0
      %2656 = vmatprep.mubr.f32.mxu0 0.0
      %2657 = vmatmul.mubr.f32.gmra.mrb[0].mxu0 %v2216
      %v2658 = vpop.f32.mrb[0].mxu0
      %v2659 = vadd.f32 %v2434, %v2658
      %v2660 = vpop.f32.mrb[0].mxu0
      %2661 = vmatprep.mubr.f32.mxu0 0.0
      %2662 = vmatmul.mubr.f32.gmra.mrb[0].mxu0 %v2219
      %v2663 = vpop.f32.mrb[0].mxu0
      %v2664 = vadd.f32 %v2439, %v2663
      %v2665 = vpop.f32.mrb[0].mxu0
      %2666 = vmatprep.mubr.f32.mxu0 0.0
      %2667 = vmatmul.mubr.f32.gmra.mrb[0].mxu0 %v2222
      %v2668 = vpop.f32.mrb[0].mxu0
      %v2669 = vadd.f32 %v2444, %v2668
      %v2670 = vpop.f32.mrb[0].mxu0
      %2671 = vmatprep.mubr.f32.mxu0 0.0
      %2672 = vmatmul.mubr.f32.gmra.mrb[0].mxu0 %v2225
      %v2673 = vpop.f32.mrb[0].mxu0
      %v2674 = vadd.f32 %v2449, %v2673
      %v2675 = vpop.f32.mrb[0].mxu0
      %2676 = vdwg.mxu0
      %v2678 = vsel %vm2130, %v1795, 0
      %v2681 = vsel %vm2130, %v1798, 0
      %v2684 = vsel %vm2130, %v1801, 0
      %v2687 = vsel %vm2130, %v1804, 0
      %v2690 = vsel %vm2130, %v1807, 0
      %v2693 = vsel %vm2130, %v1810, 0
      %v2696 = vsel %vm2130, %v1813, 0
      %v2699 = vsel %vm2130, %v1816, 0
      %v2702 = vsel %vm2130, %v1819, 0
      %v2705 = vsel %vm2130, %v1822, 0
      %v2708 = vsel %vm2130, %v1825, 0
      %v2711 = vsel %vm2130, %v1828, 0
      %v2714 = vsel %vm2130, %v1831, 0
      %v2717 = vsel %vm2130, %v1834, 0
      %v2720 = vsel %vm2130, %v1837, 0
      %v2723 = vsel %vm2130, %v1840, 0
      %v2726 = vsel %vm2130, %v1843, 0
      %v2729 = vsel %vm2130, %v1846, 0
      %v2732 = vsel %vm2130, %v1849, 0
      %v2735 = vsel %vm2130, %v1852, 0
      %v2738 = vsel %vm2130, %v1855, 0
      %v2741 = vsel %vm2130, %v1858, 0
      %v2744 = vsel %vm2130, %v1861, 0
      %v2747 = vsel %vm2130, %v1864, 0
      %v2750 = vsel %vm2130, %v1867, 0
      %v2753 = vsel %vm2130, %v1870, 0
      %v2756 = vsel %vm2130, %v1873, 0
      %v2759 = vsel %vm2130, %v1876, 0
      %v2762 = vsel %vm2130, %v1879, 0
      %v2765 = vsel %vm2130, %v1882, 0
      %v2768 = vsel %vm2130, %v1885, 0
      %v2771 = vsel %vm2130, %v1888, 0
      %2773 = vmatprep.subr.mxu0 0.0
      %2774 = vmatpush1.msra.mxu0 %v905
      %2775 = vmatprep.subr.mxu0 0.0
      %2776 = vmatpush1.msra.mxu0 %v910
      %2777 = vmatprep.subr.mxu0 0.0
      %2778 = vmatpush1.msra.mxu0 %v915
      %2779 = vmatprep.subr.mxu0 0.0
      %2780 = vmatpush1.msra.mxu0 %v920
      %2781 = vmatprep.subr.mxu0 0.0
      %2782 = vmatpush1.msra.mxu0 %v925
      %2783 = vmatprep.subr.mxu0 0.0
      %2784 = vmatpush1.msra.mxu0 %v930
      %2785 = vmatprep.subr.mxu0 0.0
      %2786 = vmatpush1.msra.mxu0 %v935
      %2787 = vmatprep.subr.mxu0 0.0
      %2788 = vmatpush1.msra.mxu0 %v940
      %2789 = vmatprep.subr.mxu0 0.0
      %2790 = vmatpush1.msra.mxu0 %v945
      %2791 = vmatprep.subr.mxu0 0.0
      %2792 = vmatpush1.msra.mxu0 %v950
      %2793 = vmatprep.subr.mxu0 0.0
      %2794 = vmatpush1.msra.mxu0 %v955
      %2795 = vmatprep.subr.mxu0 0.0
      %2796 = vmatpush1.msra.mxu0 %v960
      %2797 = vmatprep.subr.mxu0 0.0
      %2798 = vmatpush1.msra.mxu0 %v1320
      %2799 = vmatprep.subr.mxu0 0.0
      %2800 = vmatpush1.msra.mxu0 %v1325
      %2801 = vmatprep.subr.mxu0 0.0
      %2802 = vmatpush1.msra.mxu0 %v1330
      %2803 = vmatprep.subr.mxu0 0.0
      %2804 = vmatpush1.msra.mxu0 %v1335
      %2805 = vmatprep.subr.mxu0 0.0
      %2806 = vmatpush1.msra.mxu0 %v1340
      %2807 = vmatprep.subr.mxu0 0.0
      %2808 = vmatpush1.msra.mxu0 %v1345
      %2809 = vmatprep.subr.mxu0 0.0
      %2810 = vmatpush1.msra.mxu0 %v1350
      %2811 = vmatprep.subr.mxu0 0.0
      %2812 = vmatpush1.msra.mxu0 %v1355
      %2813 = vmatprep.subr.mxu0 0.0
      %2814 = vmatpush1.msra.mxu0 %v1360
      %2815 = vmatprep.subr.mxu0 0.0
      %2816 = vmatpush1.msra.mxu0 %v1365
      %2817 = vmatprep.subr.mxu0 0.0
      %2818 = vmatpush1.msra.mxu0 %v1370
      %2819 = vmatprep.subr.mxu0 0.0
      %2820 = vmatpush1.msra.mxu0 %v1375
      %2821 = vmatprep.subr.mxu0 0.0
      %2822 = vmatpush1.msra.mxu0 %v1735
      %2823 = vmatprep.subr.mxu0 0.0
      %2824 = vmatpush1.msra.mxu0 %v1740
      %2825 = vmatprep.subr.mxu0 0.0
      %2826 = vmatpush1.msra.mxu0 %v1745
      %2827 = vmatprep.subr.mxu0 0.0
      %2828 = vmatpush1.msra.mxu0 %v1750
      %2829 = vmatprep.subr.mxu0 0.0
      %2830 = vmatpush1.msra.mxu0 %v1755
      %2831 = vmatprep.subr.mxu0 0.0
      %2832 = vmatpush1.msra.mxu0 %v1760
      %2833 = vmatprep.subr.mxu0 0.0
      %2834 = vmatpush1.msra.mxu0 %v1765
      %2835 = vmatprep.subr.mxu0 0.0
      %2836 = vmatpush1.msra.mxu0 %v1770
      %2837 = vmatprep.mubr.f32.mxu0 %v1794
      %2838 = vmatmul.mubr.f32.gmra.mrb[0].mxu0 %v1793
      %v2839 = vpop.f32.mrb[0].mxu0
      %v2840 = vadd.f32 %v2519, %v2839
      %v2841 = vpop.f32.mrb[0].mxu0
      %2842 = vmatprep.mubr.f32.mxu0 %v1797
      %2843 = vmatmul.mubr.f32.gmra.mrb[0].mxu0 %v1796
      %v2844 = vpop.f32.mrb[0].mxu0
      %v2845 = vadd.f32 %v2524, %v2844
      %v2846 = vpop.f32.mrb[0].mxu0
      %2847 = vmatprep.mubr.f32.mxu0 %v1800
      %2848 = vmatmul.mubr.f32.gmra.mrb[0].mxu0 %v1799
      %v2849 = vpop.f32.mrb[0].mxu0
      %v2850 = vadd.f32 %v2529, %v2849
      %v2851 = vpop.f32.mrb[0].mxu0
      %2852 = vmatprep.mubr.f32.mxu0 %v1803
      %2853 = vmatmul.mubr.f32.gmra.mrb[0].mxu0 %v1802
      %v2854 = vpop.f32.mrb[0].mxu0
      %v2855 = vadd.f32 %v2534, %v2854
      %v2856 = vpop.f32.mrb[0].mxu0
      %2857 = vmatprep.mubr.f32.mxu0 %v1806
      %2858 = vmatmul.mubr.f32.gmra.mrb[0].mxu0 %v1805
      %v2859 = vpop.f32.mrb[0].mxu0
      %v2860 = vadd.f32 %v2539, %v2859
      %v2861 = vpop.f32.mrb[0].mxu0
      %2862 = vmatprep.mubr.f32.mxu0 %v1809
      %2863 = vmatmul.mubr.f32.gmra.mrb[0].mxu0 %v1808
      %v2864 = vpop.f32.mrb[0].mxu0
      %v2865 = vadd.f32 %v2544, %v2864
      %v2866 = vpop.f32.mrb[0].mxu0
      %2867 = vmatprep.mubr.f32.mxu0 %v1812
      %2868 = vmatmul.mubr.f32.gmra.mrb[0].mxu0 %v1811
      %v2869 = vpop.f32.mrb[0].mxu0
      %v2870 = vadd.f32 %v2549, %v2869
      %v2871 = vpop.f32.mrb[0].mxu0
      %2872 = vmatprep.mubr.f32.mxu0 %v1815
      %2873 = vmatmul.mubr.f32.gmra.mrb[0].mxu0 %v1814
      %v2874 = vpop.f32.mrb[0].mxu0
      %v2875 = vadd.f32 %v2554, %v2874
      %v2876 = vpop.f32.mrb[0].mxu0
      %2877 = vmatprep.mubr.f32.mxu0 %v1818
      %2878 = vmatmul.mubr.f32.gmra.mrb[0].mxu0 %v1817
      %v2879 = vpop.f32.mrb[0].mxu0
      %v2880 = vadd.f32 %v2559, %v2879
      %v2881 = vpop.f32.mrb[0].mxu0
      %2882 = vmatprep.mubr.f32.mxu0 %v1821
      %2883 = vmatmul.mubr.f32.gmra.mrb[0].mxu0 %v1820
      %v2884 = vpop.f32.mrb[0].mxu0
      %v2885 = vadd.f32 %v2564, %v2884
      %v2886 = vpop.f32.mrb[0].mxu0
      %2887 = vmatprep.mubr.f32.mxu0 %v1824
      %2888 = vmatmul.mubr.f32.gmra.mrb[0].mxu0 %v1823
      %v2889 = vpop.f32.mrb[0].mxu0
      %v2890 = vadd.f32 %v2569, %v2889
      %v2891 = vpop.f32.mrb[0].mxu0
      %2892 = vmatprep.mubr.f32.mxu0 %v1827
      %2893 = vmatmul.mubr.f32.gmra.mrb[0].mxu0 %v1826
      %v2894 = vpop.f32.mrb[0].mxu0
      %v2895 = vadd.f32 %v2574, %v2894
      %v2896 = vpop.f32.mrb[0].mxu0
      %2897 = vmatprep.mubr.f32.mxu0 %v1830
      %2898 = vmatmul.mubr.f32.gmra.mrb[0].mxu0 %v1829
      %v2899 = vpop.f32.mrb[0].mxu0
      %v2900 = vadd.f32 %v2579, %v2899
      %v2901 = vpop.f32.mrb[0].mxu0
      %2902 = vmatprep.mubr.f32.mxu0 %v1833
      %2903 = vmatmul.mubr.f32.gmra.mrb[0].mxu0 %v1832
      %v2904 = vpop.f32.mrb[0].mxu0
      %v2905 = vadd.f32 %v2584, %v2904
      %v2906 = vpop.f32.mrb[0].mxu0
      %2907 = vmatprep.mubr.f32.mxu0 %v1836
      %2908 = vmatmul.mubr.f32.gmra.mrb[0].mxu0 %v1835
      %v2909 = vpop.f32.mrb[0].mxu0
      %v2910 = vadd.f32 %v2589, %v2909
      %v2911 = vpop.f32.mrb[0].mxu0
      %2912 = vmatprep.mubr.f32.mxu0 %v1839
      %2913 = vmatmul.mubr.f32.gmra.mrb[0].mxu0 %v1838
      %v2914 = vpop.f32.mrb[0].mxu0
      %v2915 = vadd.f32 %v2594, %v2914
      %v2916 = vpop.f32.mrb[0].mxu0
      %2917 = vmatprep.mubr.f32.mxu0 %v1842
      %2918 = vmatmul.mubr.f32.gmra.mrb[0].mxu0 %v1841
      %v2919 = vpop.f32.mrb[0].mxu0
      %v2920 = vadd.f32 %v2599, %v2919
      %v2921 = vpop.f32.mrb[0].mxu0
      %2922 = vmatprep.mubr.f32.mxu0 %v1845
      %2923 = vmatmul.mubr.f32.gmra.mrb[0].mxu0 %v1844
      %v2924 = vpop.f32.mrb[0].mxu0
      %v2925 = vadd.f32 %v2604, %v2924
      %v2926 = vpop.f32.mrb[0].mxu0
      %2927 = vmatprep.mubr.f32.mxu0 %v1848
      %2928 = vmatmul.mubr.f32.gmra.mrb[0].mxu0 %v1847
      %v2929 = vpop.f32.mrb[0].mxu0
      %v2930 = vadd.f32 %v2609, %v2929
      %v2931 = vpop.f32.mrb[0].mxu0
      %2932 = vmatprep.mubr.f32.mxu0 %v1851
      %2933 = vmatmul.mubr.f32.gmra.mrb[0].mxu0 %v1850
      %v2934 = vpop.f32.mrb[0].mxu0
      %v2935 = vadd.f32 %v2614, %v2934
      %v2936 = vpop.f32.mrb[0].mxu0
      %2937 = vmatprep.mubr.f32.mxu0 %v1854
      %2938 = vmatmul.mubr.f32.gmra.mrb[0].mxu0 %v1853
      %v2939 = vpop.f32.mrb[0].mxu0
      %v2940 = vadd.f32 %v2619, %v2939
      %v2941 = vpop.f32.mrb[0].mxu0
      %2942 = vmatprep.mubr.f32.mxu0 %v1857
      %2943 = vmatmul.mubr.f32.gmra.mrb[0].mxu0 %v1856
      %v2944 = vpop.f32.mrb[0].mxu0
      %v2945 = vadd.f32 %v2624, %v2944
      %v2946 = vpop.f32.mrb[0].mxu0
      %2947 = vmatprep.mubr.f32.mxu0 %v1860
      %2948 = vmatmul.mubr.f32.gmra.mrb[0].mxu0 %v1859
      %v2949 = vpop.f32.mrb[0].mxu0
      %v2950 = vadd.f32 %v2629, %v2949
      %v2951 = vpop.f32.mrb[0].mxu0
      %2952 = vmatprep.mubr.f32.mxu0 %v1863
      %2953 = vmatmul.mubr.f32.gmra.mrb[0].mxu0 %v1862
      %v2954 = vpop.f32.mrb[0].mxu0
      %v2955 = vadd.f32 %v2634, %v2954
      %v2956 = vpop.f32.mrb[0].mxu0
      %2957 = vmatprep.mubr.f32.mxu0 %v1866
      %2958 = vmatmul.mubr.f32.gmra.mrb[0].mxu0 %v1865
      %v2959 = vpop.f32.mrb[0].mxu0
      %v2960 = vadd.f32 %v2639, %v2959
      %v2961 = vpop.f32.mrb[0].mxu0
      %2962 = vmatprep.mubr.f32.mxu0 %v1869
      %2963 = vmatmul.mubr.f32.gmra.mrb[0].mxu0 %v1868
      %v2964 = vpop.f32.mrb[0].mxu0
      %v2965 = vadd.f32 %v2644, %v2964
      %v2966 = vpop.f32.mrb[0].mxu0
      %2967 = vmatprep.mubr.f32.mxu0 %v1872
      %2968 = vmatmul.mubr.f32.gmra.mrb[0].mxu0 %v1871
      %v2969 = vpop.f32.mrb[0].mxu0
      %v2970 = vadd.f32 %v2649, %v2969
      %v2971 = vpop.f32.mrb[0].mxu0
      %2972 = vmatprep.mubr.f32.mxu0 %v1875
      %2973 = vmatmul.mubr.f32.gmra.mrb[0].mxu0 %v1874
      %v2974 = vpop.f32.mrb[0].mxu0
      %v2975 = vadd.f32 %v2654, %v2974
      %v2976 = vpop.f32.mrb[0].mxu0
      %2977 = vmatprep.mubr.f32.mxu0 %v1878
      %2978 = vmatmul.mubr.f32.gmra.mrb[0].mxu0 %v1877
      %v2979 = vpop.f32.mrb[0].mxu0
      %v2980 = vadd.f32 %v2659, %v2979
      %v2981 = vpop.f32.mrb[0].mxu0
      %2982 = vmatprep.mubr.f32.mxu0 %v1881
      %2983 = vmatmul.mubr.f32.gmra.mrb[0].mxu0 %v1880
      %v2984 = vpop.f32.mrb[0].mxu0
      %v2985 = vadd.f32 %v2664, %v2984
      %v2986 = vpop.f32.mrb[0].mxu0
      %2987 = vmatprep.mubr.f32.mxu0 %v1884
      %2988 = vmatmul.mubr.f32.gmra.mrb[0].mxu0 %v1883
      %v2989 = vpop.f32.mrb[0].mxu0
      %v2990 = vadd.f32 %v2669, %v2989
      %v2991 = vpop.f32.mrb[0].mxu0
      %2992 = vmatprep.mubr.f32.mxu0 %v1887
      %2993 = vmatmul.mubr.f32.gmra.mrb[0].mxu0 %v1886
      %v2994 = vpop.f32.mrb[0].mxu0
      %v2995 = vadd.f32 %v2674, %v2994
      %v2996 = vpop.f32.mrb[0].mxu0
      %2997 = vdwg.mxu0
      %2998 = vmatprep.subr.mxu0 0.0
      %2999 = vmatpush1.msra.mxu0 %v1775
      %3000 = vmatprep.subr.mxu0 0.0
      %3001 = vmatpush1.msra.mxu0 %v1780
      %3002 = vmatprep.subr.mxu0 0.0
      %3003 = vmatpush1.msra.mxu0 %v1785
      %3004 = vmatprep.subr.mxu0 0.0
      %3005 = vmatpush1.msra.mxu0 %v1790
      %3006 = vmatprep.subr.mxu0 0.0
      %3007 = vmatpush1.msra.mxu0 0.0
      %3008 = vmatprep.subr.mxu0 0.0
      %3009 = vmatpush1.msra.mxu0 0.0
      %3010 = vmatprep.subr.mxu0 0.0
      %3011 = vmatpush1.msra.mxu0 0.0
      %3012 = vmatprep.subr.mxu0 0.0
      %3013 = vmatpush1.msra.mxu0 0.0
      %3014 = vmatprep.subr.mxu0 0.0
      %3015 = vmatpush1.msra.mxu0 0.0
      %3016 = vmatprep.subr.mxu0 0.0
      %3017 = vmatpush1.msra.mxu0 0.0
      %3018 = vmatprep.subr.mxu0 0.0
      %3019 = vmatpush1.msra.mxu0 0.0
      %3020 = vmatprep.subr.mxu0 0.0
      %3021 = vmatpush1.msra.mxu0 0.0
      %3022 = vmatprep.subr.mxu0 0.0
      %3023 = vmatpush1.msra.mxu0 0.0
      %3024 = vmatprep.subr.mxu0 0.0
      %3025 = vmatpush1.msra.mxu0 0.0
      %3026 = vmatprep.subr.mxu0 0.0
      %3027 = vmatpush1.msra.mxu0 0.0
      %3028 = vmatprep.subr.mxu0 0.0
      %3029 = vmatpush1.msra.mxu0 0.0
      %3030 = vmatprep.subr.mxu0 0.0
      %3031 = vmatpush1.msra.mxu0 0.0
      %3032 = vmatprep.subr.mxu0 0.0
      %3033 = vmatpush1.msra.mxu0 0.0
      %3034 = vmatprep.subr.mxu0 0.0
      %3035 = vmatpush1.msra.mxu0 0.0
      %3036 = vmatprep.subr.mxu0 0.0
      %3037 = vmatpush1.msra.mxu0 0.0
      %3038 = vmatprep.subr.mxu0 0.0
      %3039 = vmatpush1.msra.mxu0 0.0
      %3040 = vmatprep.subr.mxu0 0.0
      %3041 = vmatpush1.msra.mxu0 0.0
      %3042 = vmatprep.subr.mxu0 0.0
      %3043 = vmatpush1.msra.mxu0 0.0
      %3044 = vmatprep.subr.mxu0 0.0
      %3045 = vmatpush1.msra.mxu0 0.0
      %3046 = vmatprep.subr.mxu0 0.0
      %3047 = vmatpush1.msra.mxu0 0.0
      %3048 = vmatprep.subr.mxu0 0.0
      %3049 = vmatpush1.msra.mxu0 0.0
      %3050 = vmatprep.subr.mxu0 0.0
      %3051 = vmatpush1.msra.mxu0 0.0
      %3052 = vmatprep.subr.mxu0 0.0
      %3053 = vmatpush1.msra.mxu0 0.0
      %3054 = vmatprep.subr.mxu0 0.0
      %3055 = vmatpush1.msra.mxu0 0.0
      %3056 = vmatprep.subr.mxu0 0.0
      %3057 = vmatpush1.msra.mxu0 0.0
      %3058 = vmatprep.subr.mxu0 0.0
      %3059 = vmatpush1.msra.mxu0 0.0
      %3060 = vmatprep.subr.mxu0 0.0
      %3061 = vmatpush1.msra.mxu0 0.0
      %3062 = vmatprep.mubr.f32.mxu0 0.0
      %3063 = vmatmul.mubr.f32.gmra.mrb[0].mxu0 %v2678
      %v3064 = vpop.f32.mrb[0].mxu0
      %v3065 = vadd.f32 %v2840, %v3064
      %v3066 = vpop.f32.mrb[0].mxu0
      %3067 = vmatprep.mubr.f32.mxu0 0.0
      %3068 = vmatmul.mubr.f32.gmra.mrb[0].mxu0 %v2681
      %v3069 = vpop.f32.mrb[0].mxu0
      %v3070 = vadd.f32 %v2845, %v3069
      %v3071 = vpop.f32.mrb[0].mxu0
      %3072 = vmatprep.mubr.f32.mxu0 0.0
      %3073 = vmatmul.mubr.f32.gmra.mrb[0].mxu0 %v2684
      %v3074 = vpop.f32.mrb[0].mxu0
      %v3075 = vadd.f32 %v2850, %v3074
      %v3076 = vpop.f32.mrb[0].mxu0
      %3077 = vmatprep.mubr.f32.mxu0 0.0
      %3078 = vmatmul.mubr.f32.gmra.mrb[0].mxu0 %v2687
      %v3079 = vpop.f32.mrb[0].mxu0
      %v3080 = vadd.f32 %v2855, %v3079
      %v3081 = vpop.f32.mrb[0].mxu0
      %3082 = vmatprep.mubr.f32.mxu0 0.0
      %3083 = vmatmul.mubr.f32.gmra.mrb[0].mxu0 %v2690
      %v3084 = vpop.f32.mrb[0].mxu0
      %v3085 = vadd.f32 %v2860, %v3084
      %v3086 = vpop.f32.mrb[0].mxu0
      %3087 = vmatprep.mubr.f32.mxu0 0.0
      %3088 = vmatmul.mubr.f32.gmra.mrb[0].mxu0 %v2693
      %v3089 = vpop.f32.mrb[0].mxu0
      %v3090 = vadd.f32 %v2865, %v3089
      %v3091 = vpop.f32.mrb[0].mxu0
      %3092 = vmatprep.mubr.f32.mxu0 0.0
      %3093 = vmatmul.mubr.f32.gmra.mrb[0].mxu0 %v2696
      %v3094 = vpop.f32.mrb[0].mxu0
      %v3095 = vadd.f32 %v2870, %v3094
      %v3096 = vpop.f32.mrb[0].mxu0
      %3097 = vmatprep.mubr.f32.mxu0 0.0
      %3098 = vmatmul.mubr.f32.gmra.mrb[0].mxu0 %v2699
      %v3099 = vpop.f32.mrb[0].mxu0
      %v3100 = vadd.f32 %v2875, %v3099
      %v3101 = vpop.f32.mrb[0].mxu0
      %3102 = vmatprep.mubr.f32.mxu0 0.0
      %3103 = vmatmul.mubr.f32.gmra.mrb[0].mxu0 %v2702
      %v3104 = vpop.f32.mrb[0].mxu0
      %v3105 = vadd.f32 %v2880, %v3104
      %v3106 = vpop.f32.mrb[0].mxu0
      %3107 = vmatprep.mubr.f32.mxu0 0.0
      %3108 = vmatmul.mubr.f32.gmra.mrb[0].mxu0 %v2705
      %v3109 = vpop.f32.mrb[0].mxu0
      %v3110 = vadd.f32 %v2885, %v3109
      %v3111 = vpop.f32.mrb[0].mxu0
      %3112 = vmatprep.mubr.f32.mxu0 0.0
      %3113 = vmatmul.mubr.f32.gmra.mrb[0].mxu0 %v2708
      %v3114 = vpop.f32.mrb[0].mxu0
      %v3115 = vadd.f32 %v2890, %v3114
      %v3116 = vpop.f32.mrb[0].mxu0
      %3117 = vmatprep.mubr.f32.mxu0 0.0
      %3118 = vmatmul.mubr.f32.gmra.mrb[0].mxu0 %v2711
      %v3119 = vpop.f32.mrb[0].mxu0
      %v3120 = vadd.f32 %v2895, %v3119
      %v3121 = vpop.f32.mrb[0].mxu0
      %3122 = vmatprep.mubr.f32.mxu0 0.0
      %3123 = vmatmul.mubr.f32.gmra.mrb[0].mxu0 %v2714
      %v3124 = vpop.f32.mrb[0].mxu0
      %v3125 = vadd.f32 %v2900, %v3124
      %v3126 = vpop.f32.mrb[0].mxu0
      %3127 = vmatprep.mubr.f32.mxu0 0.0
      %3128 = vmatmul.mubr.f32.gmra.mrb[0].mxu0 %v2717
      %v3129 = vpop.f32.mrb[0].mxu0
      %v3130 = vadd.f32 %v2905, %v3129
      %v3131 = vpop.f32.mrb[0].mxu0
      %3132 = vmatprep.mubr.f32.mxu0 0.0
      %3133 = vmatmul.mubr.f32.gmra.mrb[0].mxu0 %v2720
      %v3134 = vpop.f32.mrb[0].mxu0
      %v3135 = vadd.f32 %v2910, %v3134
      %v3136 = vpop.f32.mrb[0].mxu0
      %3137 = vmatprep.mubr.f32.mxu0 0.0
      %3138 = vmatmul.mubr.f32.gmra.mrb[0].mxu0 %v2723
      %v3139 = vpop.f32.mrb[0].mxu0
      %v3140 = vadd.f32 %v2915, %v3139
      %v3141 = vpop.f32.mrb[0].mxu0
      %3142 = vmatprep.mubr.f32.mxu0 0.0
      %3143 = vmatmul.mubr.f32.gmra.mrb[0].mxu0 %v2726
      %v3144 = vpop.f32.mrb[0].mxu0
      %v3145 = vadd.f32 %v2920, %v3144
      %v3146 = vpop.f32.mrb[0].mxu0
      %3147 = vmatprep.mubr.f32.mxu0 0.0
      %3148 = vmatmul.mubr.f32.gmra.mrb[0].mxu0 %v2729
      %v3149 = vpop.f32.mrb[0].mxu0
      %v3150 = vadd.f32 %v2925, %v3149
      %v3151 = vpop.f32.mrb[0].mxu0
      %3152 = vmatprep.mubr.f32.mxu0 0.0
      %3153 = vmatmul.mubr.f32.gmra.mrb[0].mxu0 %v2732
      %v3154 = vpop.f32.mrb[0].mxu0
      %v3155 = vadd.f32 %v2930, %v3154
      %v3156 = vpop.f32.mrb[0].mxu0
      %3157 = vmatprep.mubr.f32.mxu0 0.0
      %3158 = vmatmul.mubr.f32.gmra.mrb[0].mxu0 %v2735
      %v3159 = vpop.f32.mrb[0].mxu0
      %v3160 = vadd.f32 %v2935, %v3159
      %v3161 = vpop.f32.mrb[0].mxu0
      %3162 = vmatprep.mubr.f32.mxu0 0.0
      %3163 = vmatmul.mubr.f32.gmra.mrb[0].mxu0 %v2738
      %v3164 = vpop.f32.mrb[0].mxu0
      %v3165 = vadd.f32 %v2940, %v3164
      %v3166 = vpop.f32.mrb[0].mxu0
      %3167 = vmatprep.mubr.f32.mxu0 0.0
      %3168 = vmatmul.mubr.f32.gmra.mrb[0].mxu0 %v2741
      %v3169 = vpop.f32.mrb[0].mxu0
      %v3170 = vadd.f32 %v2945, %v3169
      %v3171 = vpop.f32.mrb[0].mxu0
      %3172 = vmatprep.mubr.f32.mxu0 0.0
      %3173 = vmatmul.mubr.f32.gmra.mrb[0].mxu0 %v2744
      %v3174 = vpop.f32.mrb[0].mxu0
      %v3175 = vadd.f32 %v2950, %v3174
      %v3176 = vpop.f32.mrb[0].mxu0
      %3177 = vmatprep.mubr.f32.mxu0 0.0
      %3178 = vmatmul.mubr.f32.gmra.mrb[0].mxu0 %v2747
      %v3179 = vpop.f32.mrb[0].mxu0
      %v3180 = vadd.f32 %v2955, %v3179
      %v3181 = vpop.f32.mrb[0].mxu0
      %3182 = vmatprep.mubr.f32.mxu0 0.0
      %3183 = vmatmul.mubr.f32.gmra.mrb[0].mxu0 %v2750
      %v3184 = vpop.f32.mrb[0].mxu0
      %v3185 = vadd.f32 %v2960, %v3184
      %v3186 = vpop.f32.mrb[0].mxu0
      %3187 = vmatprep.mubr.f32.mxu0 0.0
      %3188 = vmatmul.mubr.f32.gmra.mrb[0].mxu0 %v2753
      %v3189 = vpop.f32.mrb[0].mxu0
      %v3190 = vadd.f32 %v2965, %v3189
      %v3191 = vpop.f32.mrb[0].mxu0
      %3192 = vmatprep.mubr.f32.mxu0 0.0
      %3193 = vmatmul.mubr.f32.gmra.mrb[0].mxu0 %v2756
      %v3194 = vpop.f32.mrb[0].mxu0
      %v3195 = vadd.f32 %v2970, %v3194
      %v3196 = vpop.f32.mrb[0].mxu0
      %3197 = vmatprep.mubr.f32.mxu0 0.0
      %3198 = vmatmul.mubr.f32.gmra.mrb[0].mxu0 %v2759
      %v3199 = vpop.f32.mrb[0].mxu0
      %v3200 = vadd.f32 %v2975, %v3199
      %v3201 = vpop.f32.mrb[0].mxu0
      %3202 = vmatprep.mubr.f32.mxu0 0.0
      %3203 = vmatmul.mubr.f32.gmra.mrb[0].mxu0 %v2762
      %v3204 = vpop.f32.mrb[0].mxu0
      %v3205 = vadd.f32 %v2980, %v3204
      %v3206 = vpop.f32.mrb[0].mxu0
      %3207 = vmatprep.mubr.f32.mxu0 0.0
      %3208 = vmatmul.mubr.f32.gmra.mrb[0].mxu0 %v2765
      %v3209 = vpop.f32.mrb[0].mxu0
      %v3210 = vadd.f32 %v2985, %v3209
      %v3211 = vpop.f32.mrb[0].mxu0
      %3212 = vmatprep.mubr.f32.mxu0 0.0
      %3213 = vmatmul.mubr.f32.gmra.mrb[0].mxu0 %v2768
      %v3214 = vpop.f32.mrb[0].mxu0
      %v3215 = vadd.f32 %v2990, %v3214
      %v3216 = vpop.f32.mrb[0].mxu0
      %3217 = vmatprep.mubr.f32.mxu0 0.0
      %3218 = vmatmul.mubr.f32.gmra.mrb[0].mxu0 %v2771
      %v3219 = vpop.f32.mrb[0].mxu0
      %v3220 = vadd.f32 %v2995, %v3219
      %v3221 = vpop.f32.mrb[0].mxu0
      %3222 = vdwg.mxu0
      %s3223 = scalar_lea.vmem %s3, 1536
      %v3224 = vld [vmem:[%s3223] sm:$0xff]
      %v3225 = vld [vmem:[%s3223 + $0x8] sm:$0xff]
      %v3226 = vld [vmem:[%s3223 + $0x10] sm:$0xff]
      %v3227 = vld [vmem:[%s3223 + $0x18] sm:$0xff]
      %v3228 = vld [vmem:[%s3223 + $0x20] sm:$0xff]
      %v3229 = vld [vmem:[%s3223 + $0x28] sm:$0xff]
      %v3230 = vld [vmem:[%s3223 + $0x30] sm:$0xff]
      %v3231 = vld [vmem:[%s3223 + $0x38] sm:$0xff]
      %v3232 = vld [vmem:[%s3223 + $0x40] sm:$0xff]
      %v3233 = vld [vmem:[%s3223 + $0x48] sm:$0xff]
      %v3234 = vld [vmem:[%s3223 + $0x50] sm:$0xff]
      %v3235 = vld [vmem:[%s3223 + $0x58] sm:$0xff]
      %v3236 = vld [vmem:[%s3223 + $0x60] sm:$0xff]
      %v3237 = vld [vmem:[%s3223 + $0x68] sm:$0xff]
      %v3238 = vld [vmem:[%s3223 + $0x70] sm:$0xff]
      %v3239 = vld [vmem:[%s3223 + $0x78] sm:$0xff]
      %v3240 = vld [vmem:[%s3223 + $0x80] sm:$0xff]
      %v3241 = vld [vmem:[%s3223 + $0x88] sm:$0xff]
      %v3242 = vld [vmem:[%s3223 + $0x90] sm:$0xff]
      %v3243 = vld [vmem:[%s3223 + $0x98] sm:$0xff]
      %v3244 = vld [vmem:[%s3223 + $0xa0] sm:$0xff]
      %v3245 = vld [vmem:[%s3223 + $0xa8] sm:$0xff]
      %v3246 = vld [vmem:[%s3223 + $0xb0] sm:$0xff]
      %v3247 = vld [vmem:[%s3223 + $0xb8] sm:$0xff]
      %v3248 = vld [vmem:[%s3223 + $0xc0] sm:$0xff]
      %v3249 = vld [vmem:[%s3223 + $0xc8] sm:$0xff]
      %v3250 = vld [vmem:[%s3223 + $0xd0] sm:$0xff]
      %v3251 = vld [vmem:[%s3223 + $0xd8] sm:$0xff]
      %v3252 = vld [vmem:[%s3223 + $0xe0] sm:$0xff]
      %v3253 = vld [vmem:[%s3223 + $0xe8] sm:$0xff]
      %v3254 = vld [vmem:[%s3223 + $0xf0] sm:$0xff]
      %v3255 = vld [vmem:[%s3223 + $0xf8] sm:$0xff]
      %v3256 = vld [vmem:[%s3223 + $0x100] sm:$0xff]
      %v3257 = vld [vmem:[%s3223 + $0x108] sm:$0xff]
      %v3258 = vld [vmem:[%s3223 + $0x110] sm:$0xff]
      %v3259 = vld [vmem:[%s3223 + $0x118] sm:$0xff]
      %v3260 = vld [vmem:[%s3223 + $0x120] sm:$0xff]
      %v3261 = vld [vmem:[%s3223 + $0x128] sm:$0xff]
      %v3262 = vld [vmem:[%s3223 + $0x130] sm:$0xff]
      %v3263 = vld [vmem:[%s3223 + $0x138] sm:$0xff]
      %v3264 = vld [vmem:[%s3223 + $0x140] sm:$0xff]
      %v3265 = vld [vmem:[%s3223 + $0x148] sm:$0xff]
      %v3266 = vld [vmem:[%s3223 + $0x150] sm:$0xff]
      %v3267 = vld [vmem:[%s3223 + $0x158] sm:$0xff]
      %v3268 = vld [vmem:[%s3223 + $0x160] sm:$0xff]
      %v3269 = vld [vmem:[%s3223 + $0x168] sm:$0xff]
      %v3270 = vld [vmem:[%s3223 + $0x170] sm:$0xff]
      %v3271 = vld [vmem:[%s3223 + $0x178] sm:$0xff]
      %v3272 = vld [vmem:[%s3223 + $0x180] sm:$0xff]
      %v3273 = vld [vmem:[%s3223 + $0x188] sm:$0xff]
      %v3274 = vld [vmem:[%s3223 + $0x190] sm:$0xff]
      %v3275 = vld [vmem:[%s3223 + $0x198] sm:$0xff]
      %v3276 = vld [vmem:[%s3223 + $0x1a0] sm:$0xff]
      %v3277 = vld [vmem:[%s3223 + $0x1a8] sm:$0xff]
      %v3278 = vld [vmem:[%s3223 + $0x1b0] sm:$0xff]
      %v3279 = vld [vmem:[%s3223 + $0x1b8] sm:$0xff]
      %v3280 = vld [vmem:[%s3223 + $0x1c0] sm:$0xff]
      %v3281 = vld [vmem:[%s3223 + $0x1c8] sm:$0xff]
      %v3282 = vld [vmem:[%s3223 + $0x1d0] sm:$0xff]
      %v3283 = vld [vmem:[%s3223 + $0x1d8] sm:$0xff]
      %v3284 = vld [vmem:[%s3223 + $0x1e0] sm:$0xff]
      %v3285 = vld [vmem:[%s3223 + $0x1e8] sm:$0xff]
      %v3286 = vld [vmem:[%s3223 + $0x1f0] sm:$0xff]
      %v3287 = vld [vmem:[%s3223 + $0x1f8] sm:$0xff]
      %v3288 = vld [vmem:[%s3223 + $0x200] sm:$0xff]
      %v3289 = vld [vmem:[%s3223 + $0x208] sm:$0xff]
      %v3290 = vld [vmem:[%s3223 + $0x210] sm:$0xff]
      %v3291 = vld [vmem:[%s3223 + $0x218] sm:$0xff]
      %v3292 = vld [vmem:[%s3223 + $0x220] sm:$0xff]
      %v3293 = vld [vmem:[%s3223 + $0x228] sm:$0xff]
      %v3294 = vld [vmem:[%s3223 + $0x230] sm:$0xff]
      %v3295 = vld [vmem:[%s3223 + $0x238] sm:$0xff]
      %v3296 = vld [vmem:[%s3223 + $0x240] sm:$0xff]
      %v3297 = vld [vmem:[%s3223 + $0x248] sm:$0xff]
      %v3298 = vld [vmem:[%s3223 + $0x250] sm:$0xff]
      %v3299 = vld [vmem:[%s3223 + $0x258] sm:$0xff]
      %v3300 = vld [vmem:[%s3223 + $0x260] sm:$0xff]
      %v3301 = vld [vmem:[%s3223 + $0x268] sm:$0xff]
      %v3302 = vld [vmem:[%s3223 + $0x270] sm:$0xff]
      %v3303 = vld [vmem:[%s3223 + $0x278] sm:$0xff]
      %v3304 = vld [vmem:[%s3223 + $0x280] sm:$0xff]
      %v3305 = vld [vmem:[%s3223 + $0x288] sm:$0xff]
      %v3306 = vld [vmem:[%s3223 + $0x290] sm:$0xff]
      %v3307 = vld [vmem:[%s3223 + $0x298] sm:$0xff]
      %v3308 = vld [vmem:[%s3223 + $0x2a0] sm:$0xff]
      %v3309 = vld [vmem:[%s3223 + $0x2a8] sm:$0xff]
      %v3310 = vld [vmem:[%s3223 + $0x2b0] sm:$0xff]
      %v3311 = vld [vmem:[%s3223 + $0x2b8] sm:$0xff]
      %v3312 = vld [vmem:[%s3223 + $0x2c0] sm:$0xff]
      %v3313 = vld [vmem:[%s3223 + $0x2c8] sm:$0xff]
      %v3314 = vld [vmem:[%s3223 + $0x2d0] sm:$0xff]
      %v3315 = vld [vmem:[%s3223 + $0x2d8] sm:$0xff]
      %v3316 = vld [vmem:[%s3223 + $0x2e0] sm:$0xff]
      %v3317 = vld [vmem:[%s3223 + $0x2e8] sm:$0xff]
      %v3318 = vld [vmem:[%s3223 + $0x2f0] sm:$0xff]
      %v3319 = vld [vmem:[%s3223 + $0x2f8] sm:$0xff]
      %3320 = vrot.lane.b32.xlu0 %v905, 64
      %v3321 = vpop.permute.xlu0 %3320
      %3322 = vrot.lane.b32.xlu0 %v910, 64
      %v3323 = vpop.permute.xlu0 %3322
      %3324 = vrot.lane.b32.xlu0 %v915, 64
      %v3325 = vpop.permute.xlu0 %3324
      %3326 = vrot.lane.b32.xlu0 %v920, 64
      %v3327 = vpop.permute.xlu0 %3326
      %3328 = vrot.lane.b32.xlu0 %v925, 64
      %v3329 = vpop.permute.xlu0 %3328
      %3330 = vrot.lane.b32.xlu0 %v930, 64
      %v3331 = vpop.permute.xlu0 %3330
      %3332 = vrot.lane.b32.xlu0 %v935, 64
      %v3333 = vpop.permute.xlu0 %3332
      %3334 = vrot.lane.b32.xlu0 %v940, 64
      %v3335 = vpop.permute.xlu0 %3334
      %3336 = vrot.lane.b32.xlu0 %v945, 64
      %v3337 = vpop.permute.xlu0 %3336
      %3338 = vrot.lane.b32.xlu0 %v950, 64
      %v3339 = vpop.permute.xlu0 %3338
      %3340 = vrot.lane.b32.xlu0 %v955, 64
      %v3341 = vpop.permute.xlu0 %3340
      %3342 = vrot.lane.b32.xlu0 %v960, 64
      %v3343 = vpop.permute.xlu0 %3342
      %3344 = vrot.lane.b32.xlu0 %v1320, 64
      %v3345 = vpop.permute.xlu0 %3344
      %3346 = vrot.lane.b32.xlu0 %v1325, 64
      %v3347 = vpop.permute.xlu0 %3346
      %3348 = vrot.lane.b32.xlu0 %v1330, 64
      %v3349 = vpop.permute.xlu0 %3348
      %3350 = vrot.lane.b32.xlu0 %v1335, 64
      %v3351 = vpop.permute.xlu0 %3350
      %3352 = vrot.lane.b32.xlu0 %v1340, 64
      %v3353 = vpop.permute.xlu0 %3352
      %3354 = vrot.lane.b32.xlu0 %v1345, 64
      %v3355 = vpop.permute.xlu0 %3354
      %3356 = vrot.lane.b32.xlu0 %v1350, 64
      %v3357 = vpop.permute.xlu0 %3356
      %3358 = vrot.lane.b32.xlu0 %v1355, 64
      %v3359 = vpop.permute.xlu0 %3358
      %3360 = vrot.lane.b32.xlu0 %v1360, 64
      %v3361 = vpop.permute.xlu0 %3360
      %3362 = vrot.lane.b32.xlu0 %v1365, 64
      %v3363 = vpop.permute.xlu0 %3362
      %3364 = vrot.lane.b32.xlu0 %v1370, 64
      %v3365 = vpop.permute.xlu0 %3364
      %3366 = vrot.lane.b32.xlu0 %v1375, 64
      %v3367 = vpop.permute.xlu0 %3366
      %3368 = vrot.lane.b32.xlu0 %v1735, 64
      %v3369 = vpop.permute.xlu0 %3368
      %3370 = vrot.lane.b32.xlu0 %v1740, 64
      %v3371 = vpop.permute.xlu0 %3370
      %3372 = vrot.lane.b32.xlu0 %v1745, 64
      %v3373 = vpop.permute.xlu0 %3372
      %3374 = vrot.lane.b32.xlu0 %v1750, 64
      %v3375 = vpop.permute.xlu0 %3374
      %3376 = vrot.lane.b32.xlu0 %v1755, 64
      %v3377 = vpop.permute.xlu0 %3376
      %3378 = vrot.lane.b32.xlu0 %v1760, 64
      %v3379 = vpop.permute.xlu0 %3378
      %3380 = vrot.lane.b32.xlu0 %v1765, 64
      %v3381 = vpop.permute.xlu0 %3380
      %3382 = vrot.lane.b32.xlu0 %v1770, 64
      %v3383 = vpop.permute.xlu0 %3382
      %3384 = vrot.lane.b32.xlu0 %v1775, 64
      %v3385 = vpop.permute.xlu0 %3384
      %3386 = vrot.lane.b32.xlu0 %v1780, 64
      %v3387 = vpop.permute.xlu0 %3386
      %3388 = vrot.lane.b32.xlu0 %v1785, 64
      %v3389 = vpop.permute.xlu0 %3388
      %3390 = vrot.lane.b32.xlu0 %v1790, 64
      %v3391 = vpop.permute.xlu0 %3390
      %v3429 = vsel %vm2130, %v3226, 0
      %v3432 = vsel %vm2130, %v3229, 0
      %v3435 = vsel %vm2130, %v3232, 0
      %v3438 = vsel %vm2130, %v3235, 0
      %v3441 = vsel %vm2130, %v3238, 0
      %v3444 = vsel %vm2130, %v3241, 0
      %v3447 = vsel %vm2130, %v3244, 0
      %v3450 = vsel %vm2130, %v3247, 0
      %v3453 = vsel %vm2130, %v3250, 0
      %v3456 = vsel %vm2130, %v3253, 0
      %v3459 = vsel %vm2130, %v3256, 0
      %v3462 = vsel %vm2130, %v3259, 0
      %v3465 = vsel %vm2130, %v3262, 0
      %v3468 = vsel %vm2130, %v3265, 0
      %v3471 = vsel %vm2130, %v3268, 0
      %v3474 = vsel %vm2130, %v3271, 0
      %v3477 = vsel %vm2130, %v3274, 0
      %v3480 = vsel %vm2130, %v3277, 0
      %v3483 = vsel %vm2130, %v3280, 0
      %v3486 = vsel %vm2130, %v3283, 0
      %v3489 = vsel %vm2130, %v3286, 0
      %v3492 = vsel %vm2130, %v3289, 0
      %v3495 = vsel %vm2130, %v3292, 0
      %v3498 = vsel %vm2130, %v3295, 0
      %v3501 = vsel %vm2130, %v3298, 0
      %v3504 = vsel %vm2130, %v3301, 0
      %v3507 = vsel %vm2130, %v3304, 0
      %v3510 = vsel %vm2130, %v3307, 0
      %v3513 = vsel %vm2130, %v3310, 0
      %v3516 = vsel %vm2130, %v3313, 0
      %v3519 = vsel %vm2130, %v3316, 0
      %v3522 = vsel %vm2130, %v3319, 0
      %3524 = vmatprep.subr.mxu0 0.0
      %3525 = vmatpush1.msra.mxu0 %v3321
      %3526 = vmatprep.subr.mxu0 0.0
      %3527 = vmatpush1.msra.mxu0 %v3323
      %3528 = vmatprep.subr.mxu0 0.0
      %3529 = vmatpush1.msra.mxu0 %v3325
      %3530 = vmatprep.subr.mxu0 0.0
      %3531 = vmatpush1.msra.mxu0 %v3327
      %3532 = vmatprep.subr.mxu0 0.0
      %3533 = vmatpush1.msra.mxu0 %v3329
      %3534 = vmatprep.subr.mxu0 0.0
      %3535 = vmatpush1.msra.mxu0 %v3331
      %3536 = vmatprep.subr.mxu0 0.0
      %3537 = vmatpush1.msra.mxu0 %v3333
      %3538 = vmatprep.subr.mxu0 0.0
      %3539 = vmatpush1.msra.mxu0 %v3335
      %3540 = vmatprep.subr.mxu0 0.0
      %3541 = vmatpush1.msra.mxu0 %v3337
      %3542 = vmatprep.subr.mxu0 0.0
      %3543 = vmatpush1.msra.mxu0 %v3339
      %3544 = vmatprep.subr.mxu0 0.0
      %3545 = vmatpush1.msra.mxu0 %v3341
      %3546 = vmatprep.subr.mxu0 0.0
      %3547 = vmatpush1.msra.mxu0 %v3343
      %3548 = vmatprep.subr.mxu0 0.0
      %3549 = vmatpush1.msra.mxu0 %v3345
      %3550 = vmatprep.subr.mxu0 0.0
      %3551 = vmatpush1.msra.mxu0 %v3347
      %3552 = vmatprep.subr.mxu0 0.0
      %3553 = vmatpush1.msra.mxu0 %v3349
      %3554 = vmatprep.subr.mxu0 0.0
      %3555 = vmatpush1.msra.mxu0 %v3351
      %3556 = vmatprep.subr.mxu0 0.0
      %3557 = vmatpush1.msra.mxu0 %v3353
      %3558 = vmatprep.subr.mxu0 0.0
      %3559 = vmatpush1.msra.mxu0 %v3355
      %3560 = vmatprep.subr.mxu0 0.0
      %3561 = vmatpush1.msra.mxu0 %v3357
      %3562 = vmatprep.subr.mxu0 0.0
      %3563 = vmatpush1.msra.mxu0 %v3359
      %3564 = vmatprep.subr.mxu0 0.0
      %3565 = vmatpush1.msra.mxu0 %v3361
      %3566 = vmatprep.subr.mxu0 0.0
      %3567 = vmatpush1.msra.mxu0 %v3363
      %3568 = vmatprep.subr.mxu0 0.0
      %3569 = vmatpush1.msra.mxu0 %v3365
      %3570 = vmatprep.subr.mxu0 0.0
      %3571 = vmatpush1.msra.mxu0 %v3367
      %3572 = vmatprep.subr.mxu0 0.0
      %3573 = vmatpush1.msra.mxu0 %v3369
      %3574 = vmatprep.subr.mxu0 0.0
      %3575 = vmatpush1.msra.mxu0 %v3371
      %3576 = vmatprep.subr.mxu0 0.0
      %3577 = vmatpush1.msra.mxu0 %v3373
      %3578 = vmatprep.subr.mxu0 0.0
      %3579 = vmatpush1.msra.mxu0 %v3375
      %3580 = vmatprep.subr.mxu0 0.0
      %3581 = vmatpush1.msra.mxu0 %v3377
      %3582 = vmatprep.subr.mxu0 0.0
      %3583 = vmatpush1.msra.mxu0 %v3379
      %3584 = vmatprep.subr.mxu0 0.0
      %3585 = vmatpush1.msra.mxu0 %v3381
      %3586 = vmatprep.subr.mxu0 0.0
      %3587 = vmatpush1.msra.mxu0 %v3383
      %3588 = vmatprep.mubr.f32.mxu0 %v3225
      %3589 = vmatmul.mubr.f32.gmra.mrb[0].mxu0 %v3224
      %v3590 = vpop.f32.mrb[0].mxu0
      %v3591 = vadd.f32 0.0, %v3590
      %v3592 = vpop.f32.mrb[0].mxu0
      %3593 = vmatprep.mubr.f32.mxu0 %v3228
      %3594 = vmatmul.mubr.f32.gmra.mrb[0].mxu0 %v3227
      %v3595 = vpop.f32.mrb[0].mxu0
      %v3596 = vadd.f32 0.0, %v3595
      %v3597 = vpop.f32.mrb[0].mxu0
      %3598 = vmatprep.mubr.f32.mxu0 %v3231
      %3599 = vmatmul.mubr.f32.gmra.mrb[0].mxu0 %v3230
      %v3600 = vpop.f32.mrb[0].mxu0
      %v3601 = vadd.f32 0.0, %v3600
      %v3602 = vpop.f32.mrb[0].mxu0
      %3603 = vmatprep.mubr.f32.mxu0 %v3234
      %3604 = vmatmul.mubr.f32.gmra.mrb[0].mxu0 %v3233
      %v3605 = vpop.f32.mrb[0].mxu0
      %v3606 = vadd.f32 0.0, %v3605
      %v3607 = vpop.f32.mrb[0].mxu0
      %3608 = vmatprep.mubr.f32.mxu0 %v3237
      %3609 = vmatmul.mubr.f32.gmra.mrb[0].mxu0 %v3236
      %v3610 = vpop.f32.mrb[0].mxu0
      %v3611 = vadd.f32 0.0, %v3610
      %v3612 = vpop.f32.mrb[0].mxu0
      %3613 = vmatprep.mubr.f32.mxu0 %v3240
      %3614 = vmatmul.mubr.f32.gmra.mrb[0].mxu0 %v3239
      %v3615 = vpop.f32.mrb[0].mxu0
      %v3616 = vadd.f32 0.0, %v3615
      %v3617 = vpop.f32.mrb[0].mxu0
      %3618 = vmatprep.mubr.f32.mxu0 %v3243
      %3619 = vmatmul.mubr.f32.gmra.mrb[0].mxu0 %v3242
      %v3620 = vpop.f32.mrb[0].mxu0
      %v3621 = vadd.f32 0.0, %v3620
      %v3622 = vpop.f32.mrb[0].mxu0
      %3623 = vmatprep.mubr.f32.mxu0 %v3246
      %3624 = vmatmul.mubr.f32.gmra.mrb[0].mxu0 %v3245
      %v3625 = vpop.f32.mrb[0].mxu0
      %v3626 = vadd.f32 0.0, %v3625
      %v3627 = vpop.f32.mrb[0].mxu0
      %3628 = vmatprep.mubr.f32.mxu0 %v3249
      %3629 = vmatmul.mubr.f32.gmra.mrb[0].mxu0 %v3248
      %v3630 = vpop.f32.mrb[0].mxu0
      %v3631 = vadd.f32 0.0, %v3630
      %v3632 = vpop.f32.mrb[0].mxu0
      %3633 = vmatprep.mubr.f32.mxu0 %v3252
      %3634 = vmatmul.mubr.f32.gmra.mrb[0].mxu0 %v3251
      %v3635 = vpop.f32.mrb[0].mxu0
      %v3636 = vadd.f32 0.0, %v3635
      %v3637 = vpop.f32.mrb[0].mxu0
      %3638 = vmatprep.mubr.f32.mxu0 %v3255
      %3639 = vmatmul.mubr.f32.gmra.mrb[0].mxu0 %v3254
      %v3640 = vpop.f32.mrb[0].mxu0
      %v3641 = vadd.f32 0.0, %v3640
      %v3642 = vpop.f32.mrb[0].mxu0
      %3643 = vmatprep.mubr.f32.mxu0 %v3258
      %3644 = vmatmul.mubr.f32.gmra.mrb[0].mxu0 %v3257
      %v3645 = vpop.f32.mrb[0].mxu0
      %v3646 = vadd.f32 0.0, %v3645
      %v3647 = vpop.f32.mrb[0].mxu0
      %3648 = vmatprep.mubr.f32.mxu0 %v3261
      %3649 = vmatmul.mubr.f32.gmra.mrb[0].mxu0 %v3260
      %v3650 = vpop.f32.mrb[0].mxu0
      %v3651 = vadd.f32 0.0, %v3650
      %v3652 = vpop.f32.mrb[0].mxu0
      %3653 = vmatprep.mubr.f32.mxu0 %v3264
      %3654 = vmatmul.mubr.f32.gmra.mrb[0].mxu0 %v3263
      %v3655 = vpop.f32.mrb[0].mxu0
      %v3656 = vadd.f32 0.0, %v3655
      %v3657 = vpop.f32.mrb[0].mxu0
      %3658 = vmatprep.mubr.f32.mxu0 %v3267
      %3659 = vmatmul.mubr.f32.gmra.mrb[0].mxu0 %v3266
      %v3660 = vpop.f32.mrb[0].mxu0
      %v3661 = vadd.f32 0.0, %v3660
      %v3662 = vpop.f32.mrb[0].mxu0
      %3663 = vmatprep.mubr.f32.mxu0 %v3270
      %3664 = vmatmul.mubr.f32.gmra.mrb[0].mxu0 %v3269
      %v3665 = vpop.f32.mrb[0].mxu0
      %v3666 = vadd.f32 0.0, %v3665
      %v3667 = vpop.f32.mrb[0].mxu0
      %3668 = vmatprep.mubr.f32.mxu0 %v3273
      %3669 = vmatmul.mubr.f32.gmra.mrb[0].mxu0 %v3272
      %v3670 = vpop.f32.mrb[0].mxu0
      %v3671 = vadd.f32 0.0, %v3670
      %v3672 = vpop.f32.mrb[0].mxu0
      %3673 = vmatprep.mubr.f32.mxu0 %v3276
      %3674 = vmatmul.mubr.f32.gmra.mrb[0].mxu0 %v3275
      %v3675 = vpop.f32.mrb[0].mxu0
      %v3676 = vadd.f32 0.0, %v3675
      %v3677 = vpop.f32.mrb[0].mxu0
      %3678 = vmatprep.mubr.f32.mxu0 %v3279
      %3679 = vmatmul.mubr.f32.gmra.mrb[0].mxu0 %v3278
      %v3680 = vpop.f32.mrb[0].mxu0
      %v3681 = vadd.f32 0.0, %v3680
      %v3682 = vpop.f32.mrb[0].mxu0
      %3683 = vmatprep.mubr.f32.mxu0 %v3282
      %3684 = vmatmul.mubr.f32.gmra.mrb[0].mxu0 %v3281
      %v3685 = vpop.f32.mrb[0].mxu0
      %v3686 = vadd.f32 0.0, %v3685
      %v3687 = vpop.f32.mrb[0].mxu0
      %3688 = vmatprep.mubr.f32.mxu0 %v3285
      %3689 = vmatmul.mubr.f32.gmra.mrb[0].mxu0 %v3284
      %v3690 = vpop.f32.mrb[0].mxu0
      %v3691 = vadd.f32 0.0, %v3690
      %v3692 = vpop.f32.mrb[0].mxu0
      %3693 = vmatprep.mubr.f32.mxu0 %v3288
      %3694 = vmatmul.mubr.f32.gmra.mrb[0].mxu0 %v3287
      %v3695 = vpop.f32.mrb[0].mxu0
      %v3696 = vadd.f32 0.0, %v3695
      %v3697 = vpop.f32.mrb[0].mxu0
      %3698 = vmatprep.mubr.f32.mxu0 %v3291
      %3699 = vmatmul.mubr.f32.gmra.mrb[0].mxu0 %v3290
      %v3700 = vpop.f32.mrb[0].mxu0
      %v3701 = vadd.f32 0.0, %v3700
      %v3702 = vpop.f32.mrb[0].mxu0
      %3703 = vmatprep.mubr.f32.mxu0 %v3294
      %3704 = vmatmul.mubr.f32.gmra.mrb[0].mxu0 %v3293
      %v3705 = vpop.f32.mrb[0].mxu0
      %v3706 = vadd.f32 0.0, %v3705
      %v3707 = vpop.f32.mrb[0].mxu0
      %3708 = vmatprep.mubr.f32.mxu0 %v3297
      %3709 = vmatmul.mubr.f32.gmra.mrb[0].mxu0 %v3296
      %v3710 = vpop.f32.mrb[0].mxu0
      %v3711 = vadd.f32 0.0, %v3710
      %v3712 = vpop.f32.mrb[0].mxu0
      %3713 = vmatprep.mubr.f32.mxu0 %v3300
      %3714 = vmatmul.mubr.f32.gmra.mrb[0].mxu0 %v3299
      %v3715 = vpop.f32.mrb[0].mxu0
      %v3716 = vadd.f32 0.0, %v3715
      %v3717 = vpop.f32.mrb[0].mxu0
      %3718 = vmatprep.mubr.f32.mxu0 %v3303
      %3719 = vmatmul.mubr.f32.gmra.mrb[0].mxu0 %v3302
      %v3720 = vpop.f32.mrb[0].mxu0
      %v3721 = vadd.f32 0.0, %v3720
      %v3722 = vpop.f32.mrb[0].mxu0
      %3723 = vmatprep.mubr.f32.mxu0 %v3306
      %3724 = vmatmul.mubr.f32.gmra.mrb[0].mxu0 %v3305
      %v3725 = vpop.f32.mrb[0].mxu0
      %v3726 = vadd.f32 0.0, %v3725
      %v3727 = vpop.f32.mrb[0].mxu0
      %3728 = vmatprep.mubr.f32.mxu0 %v3309
      %3729 = vmatmul.mubr.f32.gmra.mrb[0].mxu0 %v3308
      %v3730 = vpop.f32.mrb[0].mxu0
      %v3731 = vadd.f32 0.0, %v3730
      %v3732 = vpop.f32.mrb[0].mxu0
      %3733 = vmatprep.mubr.f32.mxu0 %v3312
      %3734 = vmatmul.mubr.f32.gmra.mrb[0].mxu0 %v3311
      %v3735 = vpop.f32.mrb[0].mxu0
      %v3736 = vadd.f32 0.0, %v3735
      %v3737 = vpop.f32.mrb[0].mxu0
      %3738 = vmatprep.mubr.f32.mxu0 %v3315
      %3739 = vmatmul.mubr.f32.gmra.mrb[0].mxu0 %v3314
      %v3740 = vpop.f32.mrb[0].mxu0
      %v3741 = vadd.f32 0.0, %v3740
      %v3742 = vpop.f32.mrb[0].mxu0
      %3743 = vmatprep.mubr.f32.mxu0 %v3318
      %3744 = vmatmul.mubr.f32.gmra.mrb[0].mxu0 %v3317
      %v3745 = vpop.f32.mrb[0].mxu0
      %v3746 = vadd.f32 0.0, %v3745
      %v3747 = vpop.f32.mrb[0].mxu0
      %3748 = vdwg.mxu0
      %3749 = vmatprep.subr.mxu0 0.0
      %3750 = vmatpush1.msra.mxu0 %v3385
      %3751 = vmatprep.subr.mxu0 0.0
      %3752 = vmatpush1.msra.mxu0 %v3387
      %3753 = vmatprep.subr.mxu0 0.0
      %3754 = vmatpush1.msra.mxu0 %v3389
      %3755 = vmatprep.subr.mxu0 0.0
      %3756 = vmatpush1.msra.mxu0 %v3391
      %3757 = vmatprep.subr.mxu0 0.0
      %3758 = vmatpush1.msra.mxu0 0.0
      %3759 = vmatprep.subr.mxu0 0.0
      %3760 = vmatpush1.msra.mxu0 0.0
      %3761 = vmatprep.subr.mxu0 0.0
      %3762 = vmatpush1.msra.mxu0 0.0
      %3763 = vmatprep.subr.mxu0 0.0
      %3764 = vmatpush1.msra.mxu0 0.0
      %3765 = vmatprep.subr.mxu0 0.0
      %3766 = vmatpush1.msra.mxu0 0.0
      %3767 = vmatprep.subr.mxu0 0.0
      %3768 = vmatpush1.msra.mxu0 0.0
      %3769 = vmatprep.subr.mxu0 0.0
      %3770 = vmatpush1.msra.mxu0 0.0
      %3771 = vmatprep.subr.mxu0 0.0
      %3772 = vmatpush1.msra.mxu0 0.0
      %3773 = vmatprep.subr.mxu0 0.0
      %3774 = vmatpush1.msra.mxu0 0.0
      %3775 = vmatprep.subr.mxu0 0.0
      %3776 = vmatpush1.msra.mxu0 0.0
      %3777 = vmatprep.subr.mxu0 0.0
      %3778 = vmatpush1.msra.mxu0 0.0
      %3779 = vmatprep.subr.mxu0 0.0
      %3780 = vmatpush1.msra.mxu0 0.0
      %3781 = vmatprep.subr.mxu0 0.0
      %3782 = vmatpush1.msra.mxu0 0.0
      %3783 = vmatprep.subr.mxu0 0.0
      %3784 = vmatpush1.msra.mxu0 0.0
      %3785 = vmatprep.subr.mxu0 0.0
      %3786 = vmatpush1.msra.mxu0 0.0
      %3787 = vmatprep.subr.mxu0 0.0
      %3788 = vmatpush1.msra.mxu0 0.0
      %3789 = vmatprep.subr.mxu0 0.0
      %3790 = vmatpush1.msra.mxu0 0.0
      %3791 = vmatprep.subr.mxu0 0.0
      %3792 = vmatpush1.msra.mxu0 0.0
      %3793 = vmatprep.subr.mxu0 0.0
      %3794 = vmatpush1.msra.mxu0 0.0
      %3795 = vmatprep.subr.mxu0 0.0
      %3796 = vmatpush1.msra.mxu0 0.0
      %3797 = vmatprep.subr.mxu0 0.0
      %3798 = vmatpush1.msra.mxu0 0.0
      %3799 = vmatprep.subr.mxu0 0.0
      %3800 = vmatpush1.msra.mxu0 0.0
      %3801 = vmatprep.subr.mxu0 0.0
      %3802 = vmatpush1.msra.mxu0 0.0
      %3803 = vmatprep.subr.mxu0 0.0
      %3804 = vmatpush1.msra.mxu0 0.0
      %3805 = vmatprep.subr.mxu0 0.0
      %3806 = vmatpush1.msra.mxu0 0.0
      %3807 = vmatprep.subr.mxu0 0.0
      %3808 = vmatpush1.msra.mxu0 0.0
      %3809 = vmatprep.subr.mxu0 0.0
      %3810 = vmatpush1.msra.mxu0 0.0
      %3811 = vmatprep.subr.mxu0 0.0
      %3812 = vmatpush1.msra.mxu0 0.0
      %3813 = vmatprep.mubr.f32.mxu0 0.0
      %3814 = vmatmul.mubr.f32.gmra.mrb[0].mxu0 %v3429
      %v3815 = vpop.f32.mrb[0].mxu0
      %v3816 = vadd.f32 %v3591, %v3815
      %v3817 = vpop.f32.mrb[0].mxu0
      %3818 = vmatprep.mubr.f32.mxu0 0.0
      %3819 = vmatmul.mubr.f32.gmra.mrb[0].mxu0 %v3432
      %v3820 = vpop.f32.mrb[0].mxu0
      %v3821 = vadd.f32 %v3596, %v3820
      %v3822 = vpop.f32.mrb[0].mxu0
      %3823 = vmatprep.mubr.f32.mxu0 0.0
      %3824 = vmatmul.mubr.f32.gmra.mrb[0].mxu0 %v3435
      %v3825 = vpop.f32.mrb[0].mxu0
      %v3826 = vadd.f32 %v3601, %v3825
      %v3827 = vpop.f32.mrb[0].mxu0
      %3828 = vmatprep.mubr.f32.mxu0 0.0
      %3829 = vmatmul.mubr.f32.gmra.mrb[0].mxu0 %v3438
      %v3830 = vpop.f32.mrb[0].mxu0
      %v3831 = vadd.f32 %v3606, %v3830
      %v3832 = vpop.f32.mrb[0].mxu0
      %3833 = vmatprep.mubr.f32.mxu0 0.0
      %3834 = vmatmul.mubr.f32.gmra.mrb[0].mxu0 %v3441
      %v3835 = vpop.f32.mrb[0].mxu0
      %v3836 = vadd.f32 %v3611, %v3835
      %v3837 = vpop.f32.mrb[0].mxu0
      %3838 = vmatprep.mubr.f32.mxu0 0.0
      %3839 = vmatmul.mubr.f32.gmra.mrb[0].mxu0 %v3444
      %v3840 = vpop.f32.mrb[0].mxu0
      %v3841 = vadd.f32 %v3616, %v3840
      %v3842 = vpop.f32.mrb[0].mxu0
      %3843 = vmatprep.mubr.f32.mxu0 0.0
      %3844 = vmatmul.mubr.f32.gmra.mrb[0].mxu0 %v3447
      %v3845 = vpop.f32.mrb[0].mxu0
      %v3846 = vadd.f32 %v3621, %v3845
      %v3847 = vpop.f32.mrb[0].mxu0
      %3848 = vmatprep.mubr.f32.mxu0 0.0
      %3849 = vmatmul.mubr.f32.gmra.mrb[0].mxu0 %v3450
      %v3850 = vpop.f32.mrb[0].mxu0
      %v3851 = vadd.f32 %v3626, %v3850
      %v3852 = vpop.f32.mrb[0].mxu0
      %3853 = vmatprep.mubr.f32.mxu0 0.0
      %3854 = vmatmul.mubr.f32.gmra.mrb[0].mxu0 %v3453
      %v3855 = vpop.f32.mrb[0].mxu0
      %v3856 = vadd.f32 %v3631, %v3855
      %v3857 = vpop.f32.mrb[0].mxu0
      %3858 = vmatprep.mubr.f32.mxu0 0.0
      %3859 = vmatmul.mubr.f32.gmra.mrb[0].mxu0 %v3456
      %v3860 = vpop.f32.mrb[0].mxu0
      %v3861 = vadd.f32 %v3636, %v3860
      %v3862 = vpop.f32.mrb[0].mxu0
      %3863 = vmatprep.mubr.f32.mxu0 0.0
      %3864 = vmatmul.mubr.f32.gmra.mrb[0].mxu0 %v3459
      %v3865 = vpop.f32.mrb[0].mxu0
      %v3866 = vadd.f32 %v3641, %v3865
      %v3867 = vpop.f32.mrb[0].mxu0
      %3868 = vmatprep.mubr.f32.mxu0 0.0
      %3869 = vmatmul.mubr.f32.gmra.mrb[0].mxu0 %v3462
      %v3870 = vpop.f32.mrb[0].mxu0
      %v3871 = vadd.f32 %v3646, %v3870
      %v3872 = vpop.f32.mrb[0].mxu0
      %3873 = vmatprep.mubr.f32.mxu0 0.0
      %3874 = vmatmul.mubr.f32.gmra.mrb[0].mxu0 %v3465
      %v3875 = vpop.f32.mrb[0].mxu0
      %v3876 = vadd.f32 %v3651, %v3875
      %v3877 = vpop.f32.mrb[0].mxu0
      %3878 = vmatprep.mubr.f32.mxu0 0.0
      %3879 = vmatmul.mubr.f32.gmra.mrb[0].mxu0 %v3468
      %v3880 = vpop.f32.mrb[0].mxu0
      %v3881 = vadd.f32 %v3656, %v3880
      %v3882 = vpop.f32.mrb[0].mxu0
      %3883 = vmatprep.mubr.f32.mxu0 0.0
      %3884 = vmatmul.mubr.f32.gmra.mrb[0].mxu0 %v3471
      %v3885 = vpop.f32.mrb[0].mxu0
      %v3886 = vadd.f32 %v3661, %v3885
      %v3887 = vpop.f32.mrb[0].mxu0
      %3888 = vmatprep.mubr.f32.mxu0 0.0
      %3889 = vmatmul.mubr.f32.gmra.mrb[0].mxu0 %v3474
      %v3890 = vpop.f32.mrb[0].mxu0
      %v3891 = vadd.f32 %v3666, %v3890
      %v3892 = vpop.f32.mrb[0].mxu0
      %3893 = vmatprep.mubr.f32.mxu0 0.0
      %3894 = vmatmul.mubr.f32.gmra.mrb[0].mxu0 %v3477
      %v3895 = vpop.f32.mrb[0].mxu0
      %v3896 = vadd.f32 %v3671, %v3895
      %v3897 = vpop.f32.mrb[0].mxu0
      %3898 = vmatprep.mubr.f32.mxu0 0.0
      %3899 = vmatmul.mubr.f32.gmra.mrb[0].mxu0 %v3480
      %v3900 = vpop.f32.mrb[0].mxu0
      %v3901 = vadd.f32 %v3676, %v3900
      %v3902 = vpop.f32.mrb[0].mxu0
      %3903 = vmatprep.mubr.f32.mxu0 0.0
      %3904 = vmatmul.mubr.f32.gmra.mrb[0].mxu0 %v3483
      %v3905 = vpop.f32.mrb[0].mxu0
      %v3906 = vadd.f32 %v3681, %v3905
      %v3907 = vpop.f32.mrb[0].mxu0
      %3908 = vmatprep.mubr.f32.mxu0 0.0
      %3909 = vmatmul.mubr.f32.gmra.mrb[0].mxu0 %v3486
      %v3910 = vpop.f32.mrb[0].mxu0
      %v3911 = vadd.f32 %v3686, %v3910
      %v3912 = vpop.f32.mrb[0].mxu0
      %3913 = vmatprep.mubr.f32.mxu0 0.0
      %3914 = vmatmul.mubr.f32.gmra.mrb[0].mxu0 %v3489
      %v3915 = vpop.f32.mrb[0].mxu0
      %v3916 = vadd.f32 %v3691, %v3915
      %v3917 = vpop.f32.mrb[0].mxu0
      %3918 = vmatprep.mubr.f32.mxu0 0.0
      %3919 = vmatmul.mubr.f32.gmra.mrb[0].mxu0 %v3492
      %v3920 = vpop.f32.mrb[0].mxu0
      %v3921 = vadd.f32 %v3696, %v3920
      %v3922 = vpop.f32.mrb[0].mxu0
      %3923 = vmatprep.mubr.f32.mxu0 0.0
      %3924 = vmatmul.mubr.f32.gmra.mrb[0].mxu0 %v3495
      %v3925 = vpop.f32.mrb[0].mxu0
      %v3926 = vadd.f32 %v3701, %v3925
      %v3927 = vpop.f32.mrb[0].mxu0
      %3928 = vmatprep.mubr.f32.mxu0 0.0
      %3929 = vmatmul.mubr.f32.gmra.mrb[0].mxu0 %v3498
      %v3930 = vpop.f32.mrb[0].mxu0
      %v3931 = vadd.f32 %v3706, %v3930
      %v3932 = vpop.f32.mrb[0].mxu0
      %3933 = vmatprep.mubr.f32.mxu0 0.0
      %3934 = vmatmul.mubr.f32.gmra.mrb[0].mxu0 %v3501
      %v3935 = vpop.f32.mrb[0].mxu0
      %v3936 = vadd.f32 %v3711, %v3935
      %v3937 = vpop.f32.mrb[0].mxu0
      %3938 = vmatprep.mubr.f32.mxu0 0.0
      %3939 = vmatmul.mubr.f32.gmra.mrb[0].mxu0 %v3504
      %v3940 = vpop.f32.mrb[0].mxu0
      %v3941 = vadd.f32 %v3716, %v3940
      %v3942 = vpop.f32.mrb[0].mxu0
      %3943 = vmatprep.mubr.f32.mxu0 0.0
      %3944 = vmatmul.mubr.f32.gmra.mrb[0].mxu0 %v3507
      %v3945 = vpop.f32.mrb[0].mxu0
      %v3946 = vadd.f32 %v3721, %v3945
      %v3947 = vpop.f32.mrb[0].mxu0
      %3948 = vmatprep.mubr.f32.mxu0 0.0
      %3949 = vmatmul.mubr.f32.gmra.mrb[0].mxu0 %v3510
      %v3950 = vpop.f32.mrb[0].mxu0
      %v3951 = vadd.f32 %v3726, %v3950
      %v3952 = vpop.f32.mrb[0].mxu0
      %3953 = vmatprep.mubr.f32.mxu0 0.0
      %3954 = vmatmul.mubr.f32.gmra.mrb[0].mxu0 %v3513
      %v3955 = vpop.f32.mrb[0].mxu0
      %v3956 = vadd.f32 %v3731, %v3955
      %v3957 = vpop.f32.mrb[0].mxu0
      %3958 = vmatprep.mubr.f32.mxu0 0.0
      %3959 = vmatmul.mubr.f32.gmra.mrb[0].mxu0 %v3516
      %v3960 = vpop.f32.mrb[0].mxu0
      %v3961 = vadd.f32 %v3736, %v3960
      %v3962 = vpop.f32.mrb[0].mxu0
      %3963 = vmatprep.mubr.f32.mxu0 0.0
      %3964 = vmatmul.mubr.f32.gmra.mrb[0].mxu0 %v3519
      %v3965 = vpop.f32.mrb[0].mxu0
      %v3966 = vadd.f32 %v3741, %v3965
      %v3967 = vpop.f32.mrb[0].mxu0
      %3968 = vmatprep.mubr.f32.mxu0 0.0
      %3969 = vmatmul.mubr.f32.gmra.mrb[0].mxu0 %v3522
      %v3970 = vpop.f32.mrb[0].mxu0
      %v3971 = vadd.f32 %v3746, %v3970
      %v3972 = vpop.f32.mrb[0].mxu0
      %3973 = vdwg.mxu0
      %v3974 = vadd.f32 %v3065, %v3816
      %v3975 = vadd.f32 %v3070, %v3821
      %v3976 = vadd.f32 %v3075, %v3826
      %v3977 = vadd.f32 %v3080, %v3831
      %v3978 = vadd.f32 %v3085, %v3836
      %v3979 = vadd.f32 %v3090, %v3841
      %v3980 = vadd.f32 %v3095, %v3846
      %v3981 = vadd.f32 %v3100, %v3851
      %v3982 = vadd.f32 %v3105, %v3856
      %v3983 = vadd.f32 %v3110, %v3861
      %v3984 = vadd.f32 %v3115, %v3866
      %v3985 = vadd.f32 %v3120, %v3871
      %v3986 = vadd.f32 %v3125, %v3876
      %v3987 = vadd.f32 %v3130, %v3881
      %v3988 = vadd.f32 %v3135, %v3886
      %v3989 = vadd.f32 %v3140, %v3891
      %v3990 = vadd.f32 %v3145, %v3896
      %v3991 = vadd.f32 %v3150, %v3901
      %v3992 = vadd.f32 %v3155, %v3906
      %v3993 = vadd.f32 %v3160, %v3911
      %v3994 = vadd.f32 %v3165, %v3916
      %v3995 = vadd.f32 %v3170, %v3921
      %v3996 = vadd.f32 %v3175, %v3926
      %v3997 = vadd.f32 %v3180, %v3931
      %v3998 = vadd.f32 %v3185, %v3936
      %v3999 = vadd.f32 %v3190, %v3941
      %v4000 = vadd.f32 %v3195, %v3946
      %v4001 = vadd.f32 %v3200, %v3951
      %v4002 = vadd.f32 %v3205, %v3956
      %v4003 = vadd.f32 %v3210, %v3961
      %v4004 = vadd.f32 %v3215, %v3966
      %v4005 = vadd.f32 %v3220, %v3971
      %v4006 = vld [vmem:[%s4] sm:$0xff]
      %v4007 = vld [vmem:[%s4 + $0x8] sm:$0xff]
      %v4008 = vld [vmem:[%s4 + $0x10] sm:$0xff]
      %v4009 = vld [vmem:[%s4 + $0x18] sm:$0xff]
      %v4010 = vld [vmem:[%s4 + $0x20] sm:$0xff]
      %v4011 = vld [vmem:[%s4 + $0x28] sm:$0xff]
      %v4012 = vld [vmem:[%s4 + $0x30] sm:$0xff]
      %v4013 = vld [vmem:[%s4 + $0x38] sm:$0xff]
      %v4014 = vld [vmem:[%s4 + $0x40] sm:$0xff]
      %v4015 = vld [vmem:[%s4 + $0x48] sm:$0xff]
      %v4016 = vld [vmem:[%s4 + $0x50] sm:$0xff]
      %v4017 = vld [vmem:[%s4 + $0x58] sm:$0xff]
      %v4018 = vld [vmem:[%s4 + $0x60] sm:$0xff]
      %v4019 = vld [vmem:[%s4 + $0x68] sm:$0xff]
      %v4020 = vld [vmem:[%s4 + $0x70] sm:$0xff]
      %v4021 = vld [vmem:[%s4 + $0x78] sm:$0xff]
      %v4022 = vld [vmem:[%s4 + $0x80] sm:$0xff]
      %v4023 = vld [vmem:[%s4 + $0x88] sm:$0xff]
      %v4024 = vld [vmem:[%s4 + $0x90] sm:$0xff]
      %v4025 = vld [vmem:[%s4 + $0x98] sm:$0xff]
      %v4026 = vld [vmem:[%s4 + $0xa0] sm:$0xff]
      %v4027 = vld [vmem:[%s4 + $0xa8] sm:$0xff]
      %v4028 = vld [vmem:[%s4 + $0xb0] sm:$0xff]
      %v4029 = vld [vmem:[%s4 + $0xb8] sm:$0xff]
      %v4030 = vld [vmem:[%s4 + $0xc0] sm:$0xff]
      %v4031 = vld [vmem:[%s4 + $0xc8] sm:$0xff]
      %v4032 = vld [vmem:[%s4 + $0xd0] sm:$0xff]
      %v4033 = vld [vmem:[%s4 + $0xd8] sm:$0xff]
      %v4034 = vld [vmem:[%s4 + $0xe0] sm:$0xff]
      %v4035 = vld [vmem:[%s4 + $0xe8] sm:$0xff]
      %v4036 = vld [vmem:[%s4 + $0xf0] sm:$0xff]
      %v4037 = vld [vmem:[%s4 + $0xf8] sm:$0xff]
      %4039 = vset.pattern.permute.xlu0 0
      %4040 = vperm.xlu0 %4039, %v4006
      %v4041 = vpop.permute.xlu0 %4040
      %4044 = vset.pattern.permute.xlu0 0
      %4045 = vperm.xlu0 %4044, %v4007
      %v4046 = vpop.permute.xlu0 %4045
      %4049 = vset.pattern.permute.xlu0 0
      %4050 = vperm.xlu0 %4049, %v4008
      %v4051 = vpop.permute.xlu0 %4050
      %4054 = vset.pattern.permute.xlu0 0
      %4055 = vperm.xlu0 %4054, %v4009
      %v4056 = vpop.permute.xlu0 %4055
      %4059 = vset.pattern.permute.xlu0 0
      %4060 = vperm.xlu0 %4059, %v4010
      %v4061 = vpop.permute.xlu0 %4060
      %4064 = vset.pattern.permute.xlu0 0
      %4065 = vperm.xlu0 %4064, %v4011
      %v4066 = vpop.permute.xlu0 %4065
      %4069 = vset.pattern.permute.xlu0 0
      %4070 = vperm.xlu0 %4069, %v4012
      %v4071 = vpop.permute.xlu0 %4070
      %4074 = vset.pattern.permute.xlu0 0
      %4075 = vperm.xlu0 %4074, %v4013
      %v4076 = vpop.permute.xlu0 %4075
      %4079 = vset.pattern.permute.xlu0 0
      %4080 = vperm.xlu0 %4079, %v4014
      %v4081 = vpop.permute.xlu0 %4080
      %4084 = vset.pattern.permute.xlu0 0
      %4085 = vperm.xlu0 %4084, %v4015
      %v4086 = vpop.permute.xlu0 %4085
      %4089 = vset.pattern.permute.xlu0 0
      %4090 = vperm.xlu0 %4089, %v4016
      %v4091 = vpop.permute.xlu0 %4090
      %4094 = vset.pattern.permute.xlu0 0
      %4095 = vperm.xlu0 %4094, %v4017
      %v4096 = vpop.permute.xlu0 %4095
      %4099 = vset.pattern.permute.xlu0 0
      %4100 = vperm.xlu0 %4099, %v4018
      %v4101 = vpop.permute.xlu0 %4100
      %4104 = vset.pattern.permute.xlu0 0
      %4105 = vperm.xlu0 %4104, %v4019
      %v4106 = vpop.permute.xlu0 %4105
      %4109 = vset.pattern.permute.xlu0 0
      %4110 = vperm.xlu0 %4109, %v4020
      %v4111 = vpop.permute.xlu0 %4110
      %4114 = vset.pattern.permute.xlu0 0
      %4115 = vperm.xlu0 %4114, %v4021
      %v4116 = vpop.permute.xlu0 %4115
      %4119 = vset.pattern.permute.xlu0 0
      %4120 = vperm.xlu0 %4119, %v4022
      %v4121 = vpop.permute.xlu0 %4120
      %4124 = vset.pattern.permute.xlu0 0
      %4125 = vperm.xlu0 %4124, %v4023
      %v4126 = vpop.permute.xlu0 %4125
      %4129 = vset.pattern.permute.xlu0 0
      %4130 = vperm.xlu0 %4129, %v4024
      %v4131 = vpop.permute.xlu0 %4130
      %4134 = vset.pattern.permute.xlu0 0
      %4135 = vperm.xlu0 %4134, %v4025
      %v4136 = vpop.permute.xlu0 %4135
      %4139 = vset.pattern.permute.xlu0 0
      %4140 = vperm.xlu0 %4139, %v4026
      %v4141 = vpop.permute.xlu0 %4140
      %4144 = vset.pattern.permute.xlu0 0
      %4145 = vperm.xlu0 %4144, %v4027
      %v4146 = vpop.permute.xlu0 %4145
      %4149 = vset.pattern.permute.xlu0 0
      %4150 = vperm.xlu0 %4149, %v4028
      %v4151 = vpop.permute.xlu0 %4150
      %4154 = vset.pattern.permute.xlu0 0
      %4155 = vperm.xlu0 %4154, %v4029
      %v4156 = vpop.permute.xlu0 %4155
      %4159 = vset.pattern.permute.xlu0 0
      %4160 = vperm.xlu0 %4159, %v4030
      %v4161 = vpop.permute.xlu0 %4160
      %4164 = vset.pattern.permute.xlu0 0
      %4165 = vperm.xlu0 %4164, %v4031
      %v4166 = vpop.permute.xlu0 %4165
      %4169 = vset.pattern.permute.xlu0 0
      %4170 = vperm.xlu0 %4169, %v4032
      %v4171 = vpop.permute.xlu0 %4170
      %4174 = vset.pattern.permute.xlu0 0
      %4175 = vperm.xlu0 %4174, %v4033
      %v4176 = vpop.permute.xlu0 %4175
      %4179 = vset.pattern.permute.xlu0 0
      %4180 = vperm.xlu0 %4179, %v4034
      %v4181 = vpop.permute.xlu0 %4180
      %4184 = vset.pattern.permute.xlu0 0
      %4185 = vperm.xlu0 %4184, %v4035
      %v4186 = vpop.permute.xlu0 %4185
      %4189 = vset.pattern.permute.xlu0 0
      %4190 = vperm.xlu0 %4189, %v4036
      %v4191 = vpop.permute.xlu0 %4190
      %4194 = vset.pattern.permute.xlu0 0
      %4195 = vperm.xlu0 %4194, %v4037
      %v4196 = vpop.permute.xlu0 %4195
      %v4198 = vadd.f32 %v3974, %v4041
      %v4199 = vadd.f32 %v3975, %v4046
      %v4200 = vadd.f32 %v3976, %v4051
      %v4201 = vadd.f32 %v3977, %v4056
      %v4202 = vadd.f32 %v3978, %v4061
      %v4203 = vadd.f32 %v3979, %v4066
      %v4204 = vadd.f32 %v3980, %v4071
      %v4205 = vadd.f32 %v3981, %v4076
      %v4206 = vadd.f32 %v3982, %v4081
      %v4207 = vadd.f32 %v3983, %v4086
      %v4208 = vadd.f32 %v3984, %v4091
      %v4209 = vadd.f32 %v3985, %v4096
      %v4210 = vadd.f32 %v3986, %v4101
      %v4211 = vadd.f32 %v3987, %v4106
      %v4212 = vadd.f32 %v3988, %v4111
      %v4213 = vadd.f32 %v3989, %v4116
      %v4214 = vadd.f32 %v3990, %v4121
      %v4215 = vadd.f32 %v3991, %v4126
      %v4216 = vadd.f32 %v3992, %v4131
      %v4217 = vadd.f32 %v3993, %v4136
      %v4218 = vadd.f32 %v3994, %v4141
      %v4219 = vadd.f32 %v3995, %v4146
      %v4220 = vadd.f32 %v3996, %v4151
      %v4221 = vadd.f32 %v3997, %v4156
      %v4222 = vadd.f32 %v3998, %v4161
      %v4223 = vadd.f32 %v3999, %v4166
      %v4224 = vadd.f32 %v4000, %v4171
      %v4225 = vadd.f32 %v4001, %v4176
      %v4226 = vadd.f32 %v4002, %v4181
      %v4227 = vadd.f32 %v4003, %v4186
      %v4228 = vadd.f32 %v4004, %v4191
      %v4229 = vadd.f32 %v4005, %v4196
      %v4230 = vmul.f32 %v4198, 0.5
      %v4231 = vmul.f32 %v4199, 0.5
      %v4232 = vmul.f32 %v4200, 0.5
      %v4233 = vmul.f32 %v4201, 0.5
      %v4234 = vmul.f32 %v4202, 0.5
      %v4235 = vmul.f32 %v4203, 0.5
      %v4236 = vmul.f32 %v4204, 0.5
      %v4237 = vmul.f32 %v4205, 0.5
      %v4238 = vmul.f32 %v4206, 0.5
      %v4239 = vmul.f32 %v4207, 0.5
      %v4240 = vmul.f32 %v4208, 0.5
      %v4241 = vmul.f32 %v4209, 0.5
      %v4242 = vmul.f32 %v4210, 0.5
      %v4243 = vmul.f32 %v4211, 0.5
      %v4244 = vmul.f32 %v4212, 0.5
      %v4245 = vmul.f32 %v4213, 0.5
      %v4246 = vmul.f32 %v4214, 0.5
      %v4247 = vmul.f32 %v4215, 0.5
      %v4248 = vmul.f32 %v4216, 0.5
      %v4249 = vmul.f32 %v4217, 0.5
      %v4250 = vmul.f32 %v4218, 0.5
      %v4251 = vmul.f32 %v4219, 0.5
      %v4252 = vmul.f32 %v4220, 0.5
      %v4253 = vmul.f32 %v4221, 0.5
      %v4254 = vmul.f32 %v4222, 0.5
      %v4255 = vmul.f32 %v4223, 0.5
      %v4256 = vmul.f32 %v4224, 0.5
      %v4257 = vmul.f32 %v4225, 0.5
      %v4258 = vmul.f32 %v4226, 0.5
      %v4259 = vmul.f32 %v4227, 0.5
      %v4260 = vmul.f32 %v4228, 0.5
      %v4261 = vmul.f32 %v4229, 0.5
      %v4262 = vmul.f32 %v4198, 0.044715
      %v4263 = vmul.f32 %v4199, 0.044715
      %v4264 = vmul.f32 %v4200, 0.044715
      %v4265 = vmul.f32 %v4201, 0.044715
      %v4266 = vmul.f32 %v4202, 0.044715
      %v4267 = vmul.f32 %v4203, 0.044715
      %v4268 = vmul.f32 %v4204, 0.044715
      %v4269 = vmul.f32 %v4205, 0.044715
      %v4270 = vmul.f32 %v4206, 0.044715
      %v4271 = vmul.f32 %v4207, 0.044715
      %v4272 = vmul.f32 %v4208, 0.044715
      %v4273 = vmul.f32 %v4209, 0.044715
      %v4274 = vmul.f32 %v4210, 0.044715
      %v4275 = vmul.f32 %v4211, 0.044715
      %v4276 = vmul.f32 %v4212, 0.044715
      %v4277 = vmul.f32 %v4213, 0.044715
      %v4278 = vmul.f32 %v4214, 0.044715
      %v4279 = vmul.f32 %v4215, 0.044715
      %v4280 = vmul.f32 %v4216, 0.044715
      %v4281 = vmul.f32 %v4217, 0.044715
      %v4282 = vmul.f32 %v4218, 0.044715
      %v4283 = vmul.f32 %v4219, 0.044715
      %v4284 = vmul.f32 %v4220, 0.044715
      %v4285 = vmul.f32 %v4221, 0.044715
      %v4286 = vmul.f32 %v4222, 0.044715
      %v4287 = vmul.f32 %v4223, 0.044715
      %v4288 = vmul.f32 %v4224, 0.044715
      %v4289 = vmul.f32 %v4225, 0.044715
      %v4290 = vmul.f32 %v4226, 0.044715
      %v4291 = vmul.f32 %v4227, 0.044715
      %v4292 = vmul.f32 %v4228, 0.044715
      %v4293 = vmul.f32 %v4229, 0.044715
      %v4294 = vmul.f32 %v4262, %v4198
      %v4295 = vmul.f32 %v4263, %v4199
      %v4296 = vmul.f32 %v4264, %v4200
      %v4297 = vmul.f32 %v4265, %v4201
      %v4298 = vmul.f32 %v4266, %v4202
      %v4299 = vmul.f32 %v4267, %v4203
      %v4300 = vmul.f32 %v4268, %v4204
      %v4301 = vmul.f32 %v4269, %v4205
      %v4302 = vmul.f32 %v4270, %v4206
      %v4303 = vmul.f32 %v4271, %v4207
      %v4304 = vmul.f32 %v4272, %v4208
      %v4305 = vmul.f32 %v4273, %v4209
      %v4306 = vmul.f32 %v4274, %v4210
      %v4307 = vmul.f32 %v4275, %v4211
      %v4308 = vmul.f32 %v4276, %v4212
      %v4309 = vmul.f32 %v4277, %v4213
      %v4310 = vmul.f32 %v4278, %v4214
      %v4311 = vmul.f32 %v4279, %v4215
      %v4312 = vmul.f32 %v4280, %v4216
      %v4313 = vmul.f32 %v4281, %v4217
      %v4314 = vmul.f32 %v4282, %v4218
      %v4315 = vmul.f32 %v4283, %v4219
      %v4316 = vmul.f32 %v4284, %v4220
      %v4317 = vmul.f32 %v4285, %v4221
      %v4318 = vmul.f32 %v4286, %v4222
      %v4319 = vmul.f32 %v4287, %v4223
      %v4320 = vmul.f32 %v4288, %v4224
      %v4321 = vmul.f32 %v4289, %v4225
      %v4322 = vmul.f32 %v4290, %v4226
      %v4323 = vmul.f32 %v4291, %v4227
      %v4324 = vmul.f32 %v4292, %v4228
      %v4325 = vmul.f32 %v4293, %v4229
      %v4326 = vmul.f32 %v4294, %v4198
      %v4327 = vmul.f32 %v4295, %v4199
      %v4328 = vmul.f32 %v4296, %v4200
      %v4329 = vmul.f32 %v4297, %v4201
      %v4330 = vmul.f32 %v4298, %v4202
      %v4331 = vmul.f32 %v4299, %v4203
      %v4332 = vmul.f32 %v4300, %v4204
      %v4333 = vmul.f32 %v4301, %v4205
      %v4334 = vmul.f32 %v4302, %v4206
      %v4335 = vmul.f32 %v4303, %v4207
      %v4336 = vmul.f32 %v4304, %v4208
      %v4337 = vmul.f32 %v4305, %v4209
      %v4338 = vmul.f32 %v4306, %v4210
      %v4339 = vmul.f32 %v4307, %v4211
      %v4340 = vmul.f32 %v4308, %v4212
      %v4341 = vmul.f32 %v4309, %v4213
      %v4342 = vmul.f32 %v4310, %v4214
      %v4343 = vmul.f32 %v4311, %v4215
      %v4344 = vmul.f32 %v4312, %v4216
      %v4345 = vmul.f32 %v4313, %v4217
      %v4346 = vmul.f32 %v4314, %v4218
      %v4347 = vmul.f32 %v4315, %v4219
      %v4348 = vmul.f32 %v4316, %v4220
      %v4349 = vmul.f32 %v4317, %v4221
      %v4350 = vmul.f32 %v4318, %v4222
      %v4351 = vmul.f32 %v4319, %v4223
      %v4352 = vmul.f32 %v4320, %v4224
      %v4353 = vmul.f32 %v4321, %v4225
      %v4354 = vmul.f32 %v4322, %v4226
      %v4355 = vmul.f32 %v4323, %v4227
      %v4356 = vmul.f32 %v4324, %v4228
      %v4357 = vmul.f32 %v4325, %v4229
      %v4358 = vadd.f32 %v4198, %v4326
      %v4359 = vadd.f32 %v4199, %v4327
      %v4360 = vadd.f32 %v4200, %v4328
      %v4361 = vadd.f32 %v4201, %v4329
      %v4362 = vadd.f32 %v4202, %v4330
      %v4363 = vadd.f32 %v4203, %v4331
      %v4364 = vadd.f32 %v4204, %v4332
      %v4365 = vadd.f32 %v4205, %v4333
      %v4366 = vadd.f32 %v4206, %v4334
      %v4367 = vadd.f32 %v4207, %v4335
      %v4368 = vadd.f32 %v4208, %v4336
      %v4369 = vadd.f32 %v4209, %v4337
      %v4370 = vadd.f32 %v4210, %v4338
      %v4371 = vadd.f32 %v4211, %v4339
      %v4372 = vadd.f32 %v4212, %v4340
      %v4373 = vadd.f32 %v4213, %v4341
      %v4374 = vadd.f32 %v4214, %v4342
      %v4375 = vadd.f32 %v4215, %v4343
      %v4376 = vadd.f32 %v4216, %v4344
      %v4377 = vadd.f32 %v4217, %v4345
      %v4378 = vadd.f32 %v4218, %v4346
      %v4379 = vadd.f32 %v4219, %v4347
      %v4380 = vadd.f32 %v4220, %v4348
      %v4381 = vadd.f32 %v4221, %v4349
      %v4382 = vadd.f32 %v4222, %v4350
      %v4383 = vadd.f32 %v4223, %v4351
      %v4384 = vadd.f32 %v4224, %v4352
      %v4385 = vadd.f32 %v4225, %v4353
      %v4386 = vadd.f32 %v4226, %v4354
      %v4387 = vadd.f32 %v4227, %v4355
      %v4388 = vadd.f32 %v4228, %v4356
      %v4389 = vadd.f32 %v4229, %v4357
      %v4390 = vmul.f32 %v4358, 0.7978846
      %v4391 = vmul.f32 %v4359, 0.7978846
      %v4392 = vmul.f32 %v4360, 0.7978846
      %v4393 = vmul.f32 %v4361, 0.7978846
      %v4394 = vmul.f32 %v4362, 0.7978846
      %v4395 = vmul.f32 %v4363, 0.7978846
      %v4396 = vmul.f32 %v4364, 0.7978846
      %v4397 = vmul.f32 %v4365, 0.7978846
      %v4398 = vmul.f32 %v4366, 0.7978846
      %v4399 = vmul.f32 %v4367, 0.7978846
      %v4400 = vmul.f32 %v4368, 0.7978846
      %v4401 = vmul.f32 %v4369, 0.7978846
      %v4402 = vmul.f32 %v4370, 0.7978846
      %v4403 = vmul.f32 %v4371, 0.7978846
      %v4404 = vmul.f32 %v4372, 0.7978846
      %v4405 = vmul.f32 %v4373, 0.7978846
      %v4406 = vmul.f32 %v4374, 0.7978846
      %v4407 = vmul.f32 %v4375, 0.7978846
      %v4408 = vmul.f32 %v4376, 0.7978846
      %v4409 = vmul.f32 %v4377, 0.7978846
      %v4410 = vmul.f32 %v4378, 0.7978846
      %v4411 = vmul.f32 %v4379, 0.7978846
      %v4412 = vmul.f32 %v4380, 0.7978846
      %v4413 = vmul.f32 %v4381, 0.7978846
      %v4414 = vmul.f32 %v4382, 0.7978846
      %v4415 = vmul.f32 %v4383, 0.7978846
      %v4416 = vmul.f32 %v4384, 0.7978846
      %v4417 = vmul.f32 %v4385, 0.7978846
      %v4418 = vmul.f32 %v4386, 0.7978846
      %v4419 = vmul.f32 %v4387, 0.7978846
      %v4420 = vmul.f32 %v4388, 0.7978846
      %v4421 = vmul.f32 %v4389, 0.7978846
      %v4422 = vtanh.pop %v4390
      %v4423 = vtanh.pop %v4391
      %v4424 = vtanh.pop %v4392
      %v4425 = vtanh.pop %v4393
      %v4426 = vtanh.pop %v4394
      %v4427 = vtanh.pop %v4395
      %v4428 = vtanh.pop %v4396
      %v4429 = vtanh.pop %v4397
      %v4430 = vtanh.pop %v4398
      %v4431 = vtanh.pop %v4399
      %v4432 = vtanh.pop %v4400
      %v4433 = vtanh.pop %v4401
      %v4434 = vtanh.pop %v4402
      %v4435 = vtanh.pop %v4403
      %v4436 = vtanh.pop %v4404
      %v4437 = vtanh.pop %v4405
      %v4438 = vtanh.pop %v4406
      %v4439 = vtanh.pop %v4407
      %v4440 = vtanh.pop %v4408
      %v4441 = vtanh.pop %v4409
      %v4442 = vtanh.pop %v4410
      %v4443 = vtanh.pop %v4411
      %v4444 = vtanh.pop %v4412
      %v4445 = vtanh.pop %v4413
      %v4446 = vtanh.pop %v4414
      %v4447 = vtanh.pop %v4415
      %v4448 = vtanh.pop %v4416
      %v4449 = vtanh.pop %v4417
      %v4450 = vtanh.pop %v4418
      %v4451 = vtanh.pop %v4419
      %v4452 = vtanh.pop %v4420
      %v4453 = vtanh.pop %v4421
      %v4454 = vadd.f32 %v4422, 1.0
      %v4455 = vadd.f32 %v4423, 1.0
      %v4456 = vadd.f32 %v4424, 1.0
      %v4457 = vadd.f32 %v4425, 1.0
      %v4458 = vadd.f32 %v4426, 1.0
      %v4459 = vadd.f32 %v4427, 1.0
      %v4460 = vadd.f32 %v4428, 1.0
      %v4461 = vadd.f32 %v4429, 1.0
      %v4462 = vadd.f32 %v4430, 1.0
      %v4463 = vadd.f32 %v4431, 1.0
      %v4464 = vadd.f32 %v4432, 1.0
      %v4465 = vadd.f32 %v4433, 1.0
      %v4466 = vadd.f32 %v4434, 1.0
      %v4467 = vadd.f32 %v4435, 1.0
      %v4468 = vadd.f32 %v4436, 1.0
      %v4469 = vadd.f32 %v4437, 1.0
      %v4470 = vadd.f32 %v4438, 1.0
      %v4471 = vadd.f32 %v4439, 1.0
      %v4472 = vadd.f32 %v4440, 1.0
      %v4473 = vadd.f32 %v4441, 1.0
      %v4474 = vadd.f32 %v4442, 1.0
      %v4475 = vadd.f32 %v4443, 1.0
      %v4476 = vadd.f32 %v4444, 1.0
      %v4477 = vadd.f32 %v4445, 1.0
      %v4478 = vadd.f32 %v4446, 1.0
      %v4479 = vadd.f32 %v4447, 1.0
      %v4480 = vadd.f32 %v4448, 1.0
      %v4481 = vadd.f32 %v4449, 1.0
      %v4482 = vadd.f32 %v4450, 1.0
      %v4483 = vadd.f32 %v4451, 1.0
      %v4484 = vadd.f32 %v4452, 1.0
      %v4485 = vadd.f32 %v4453, 1.0
      %v4486 = vmul.f32 %v4230, %v4454
      %v4487 = vmul.f32 %v4231, %v4455
      %v4488 = vmul.f32 %v4232, %v4456
      %v4489 = vmul.f32 %v4233, %v4457
      %v4490 = vmul.f32 %v4234, %v4458
      %v4491 = vmul.f32 %v4235, %v4459
      %v4492 = vmul.f32 %v4236, %v4460
      %v4493 = vmul.f32 %v4237, %v4461
      %v4494 = vmul.f32 %v4238, %v4462
      %v4495 = vmul.f32 %v4239, %v4463
      %v4496 = vmul.f32 %v4240, %v4464
      %v4497 = vmul.f32 %v4241, %v4465
      %v4498 = vmul.f32 %v4242, %v4466
      %v4499 = vmul.f32 %v4243, %v4467
      %v4500 = vmul.f32 %v4244, %v4468
      %v4501 = vmul.f32 %v4245, %v4469
      %v4502 = vmul.f32 %v4246, %v4470
      %v4503 = vmul.f32 %v4247, %v4471
      %v4504 = vmul.f32 %v4248, %v4472
      %v4505 = vmul.f32 %v4249, %v4473
      %v4506 = vmul.f32 %v4250, %v4474
      %v4507 = vmul.f32 %v4251, %v4475
      %v4508 = vmul.f32 %v4252, %v4476
      %v4509 = vmul.f32 %v4253, %v4477
      %v4510 = vmul.f32 %v4254, %v4478
      %v4511 = vmul.f32 %v4255, %v4479
      %v4512 = vmul.f32 %v4256, %v4480
      %v4513 = vmul.f32 %v4257, %v4481
      %v4514 = vmul.f32 %v4258, %v4482
      %v4515 = vmul.f32 %v4259, %v4483
      %v4516 = vmul.f32 %v4260, %v4484
      %v4517 = vmul.f32 %v4261, %v4485
      %v4518 = vmax.f32 %v4486, %v4494
      %v4519 = vmax.f32 %v4487, %v4495
      %v4520 = vmax.f32 %v4488, %v4496
      %v4521 = vmax.f32 %v4489, %v4497
      %v4522 = vmax.f32 %v4490, %v4498
      %v4523 = vmax.f32 %v4491, %v4499
      %v4524 = vmax.f32 %v4492, %v4500
      %v4525 = vmax.f32 %v4493, %v4501
      %v4526 = vmax.f32 %v4502, %v4510
      %v4527 = vmax.f32 %v4503, %v4511
      %v4528 = vmax.f32 %v4504, %v4512
      %v4529 = vmax.f32 %v4505, %v4513
      %v4530 = vmax.f32 %v4506, %v4514
      %v4531 = vmax.f32 %v4507, %v4515
      %v4532 = vmax.f32 %v4508, %v4516
      %v4533 = vmax.f32 %v4509, %v4517
      %v4534 = vmax.f32 %v4518, %v4526
      %v4535 = vmax.f32 %v4519, %v4527
      %v4536 = vmax.f32 %v4520, %v4528
      %v4537 = vmax.f32 %v4521, %v4529
      %v4538 = vmax.f32 %v4522, %v4530
      %v4539 = vmax.f32 %v4523, %v4531
      %v4540 = vmax.f32 %v4524, %v4532
      %v4541 = vmax.f32 %v4525, %v4533
      %4550 = vrot.lane.b32.xlu0 %v4534, 120
      %v4551 = vpop.permute.xlu0 %4550
      %4552 = vrot.lane.b32.xlu0 %v4535, 120
      %v4553 = vpop.permute.xlu0 %4552
      %4554 = vrot.lane.b32.xlu0 %v4536, 120
      %v4555 = vpop.permute.xlu0 %4554
      %4556 = vrot.lane.b32.xlu0 %v4537, 120
      %v4557 = vpop.permute.xlu0 %4556
      %4558 = vrot.lane.b32.xlu0 %v4538, 120
      %v4559 = vpop.permute.xlu0 %4558
      %4560 = vrot.lane.b32.xlu0 %v4539, 120
      %v4561 = vpop.permute.xlu0 %4560
      %4562 = vrot.lane.b32.xlu0 %v4540, 120
      %v4563 = vpop.permute.xlu0 %4562
      %4564 = vrot.lane.b32.xlu0 %v4541, 120
      %v4565 = vpop.permute.xlu0 %4564
      %v4574 = vmax.f32 %v4534, %v4551
      %v4575 = vmax.f32 %v4535, %v4553
      %v4576 = vmax.f32 %v4536, %v4555
      %v4577 = vmax.f32 %v4537, %v4557
      %v4578 = vmax.f32 %v4538, %v4559
      %v4579 = vmax.f32 %v4539, %v4561
      %v4580 = vmax.f32 %v4540, %v4563
      %v4581 = vmax.f32 %v4541, %v4565
      %4590 = vrot.lane.b32.xlu0 %v4574, 112
      %v4591 = vpop.permute.xlu0 %4590
      %4592 = vrot.lane.b32.xlu0 %v4575, 112
      %v4593 = vpop.permute.xlu0 %4592
      %4594 = vrot.lane.b32.xlu0 %v4576, 112
      %v4595 = vpop.permute.xlu0 %4594
      %4596 = vrot.lane.b32.xlu0 %v4577, 112
      %v4597 = vpop.permute.xlu0 %4596
      %4598 = vrot.lane.b32.xlu0 %v4578, 112
      %v4599 = vpop.permute.xlu0 %4598
      %4600 = vrot.lane.b32.xlu0 %v4579, 112
      %v4601 = vpop.permute.xlu0 %4600
      %4602 = vrot.lane.b32.xlu0 %v4580, 112
      %v4603 = vpop.permute.xlu0 %4602
      %4604 = vrot.lane.b32.xlu0 %v4581, 112
      %v4605 = vpop.permute.xlu0 %4604
      %v4614 = vmax.f32 %v4574, %v4591
      %v4615 = vmax.f32 %v4575, %v4593
      %v4616 = vmax.f32 %v4576, %v4595
      %v4617 = vmax.f32 %v4577, %v4597
      %v4618 = vmax.f32 %v4578, %v4599
      %v4619 = vmax.f32 %v4579, %v4601
      %v4620 = vmax.f32 %v4580, %v4603
      %v4621 = vmax.f32 %v4581, %v4605
      %v4622 = vld [vmem:[%s5] sm:$0xff]
      %vm4623 = vcmask 64512
      %v4625 = vsel %vm4623, %v4614, 0
      %v4628 = vsel %vm4623, %v4615, 0
      %v4631 = vsel %vm4623, %v4616, 0
      %v4634 = vsel %vm4623, %v4617, 0
      %v4637 = vsel %vm4623, %v4618, 0
      %v4640 = vsel %vm4623, %v4619, 0
      %v4643 = vsel %vm4623, %v4620, 0
      %v4646 = vsel %vm4623, %v4621, 0
      %4648 = vmatprep.subr.mxu0 0.0
      %4649 = vmatpush1.msra.mxu0 %v4622
      %4650 = vmatprep.subr.mxu0 0.0
      %4651 = vmatpush1.msra.mxu0 0.0
      %4652 = vmatprep.subr.mxu0 0.0
      %4653 = vmatpush1.msra.mxu0 0.0
      %4654 = vmatprep.subr.mxu0 0.0
      %4655 = vmatpush1.msra.mxu0 0.0
      %4656 = vmatprep.subr.mxu0 0.0
      %4657 = vmatpush1.msra.mxu0 0.0
      %4658 = vmatprep.subr.mxu0 0.0
      %4659 = vmatpush1.msra.mxu0 0.0
      %4660 = vmatprep.subr.mxu0 0.0
      %4661 = vmatpush1.msra.mxu0 0.0
      %4662 = vmatprep.subr.mxu0 0.0
      %4663 = vmatpush1.msra.mxu0 0.0
      %4664 = vmatprep.subr.mxu0 0.0
      %4665 = vmatpush1.msra.mxu0 0.0
      %4666 = vmatprep.subr.mxu0 0.0
      %4667 = vmatpush1.msra.mxu0 0.0
      %4668 = vmatprep.subr.mxu0 0.0
      %4669 = vmatpush1.msra.mxu0 0.0
      %4670 = vmatprep.subr.mxu0 0.0
      %4671 = vmatpush1.msra.mxu0 0.0
      %4672 = vmatprep.subr.mxu0 0.0
      %4673 = vmatpush1.msra.mxu0 0.0
      %4674 = vmatprep.subr.mxu0 0.0
      %4675 = vmatpush1.msra.mxu0 0.0
      %4676 = vmatprep.subr.mxu0 0.0
      %4677 = vmatpush1.msra.mxu0 0.0
      %4678 = vmatprep.subr.mxu0 0.0
      %4679 = vmatpush1.msra.mxu0 0.0
      %4680 = vmatprep.subr.mxu0 0.0
      %4681 = vmatpush1.msra.mxu0 0.0
      %4682 = vmatprep.subr.mxu0 0.0
      %4683 = vmatpush1.msra.mxu0 0.0
      %4684 = vmatprep.subr.mxu0 0.0
      %4685 = vmatpush1.msra.mxu0 0.0
      %4686 = vmatprep.subr.mxu0 0.0
      %4687 = vmatpush1.msra.mxu0 0.0
      %4688 = vmatprep.subr.mxu0 0.0
      %4689 = vmatpush1.msra.mxu0 0.0
      %4690 = vmatprep.subr.mxu0 0.0
      %4691 = vmatpush1.msra.mxu0 0.0
      %4692 = vmatprep.subr.mxu0 0.0
      %4693 = vmatpush1.msra.mxu0 0.0
      %4694 = vmatprep.subr.mxu0 0.0
      %4695 = vmatpush1.msra.mxu0 0.0
      %4696 = vmatprep.subr.mxu0 0.0
      %4697 = vmatpush1.msra.mxu0 0.0
      %4698 = vmatprep.subr.mxu0 0.0
      %4699 = vmatpush1.msra.mxu0 0.0
      %4700 = vmatprep.subr.mxu0 0.0
      %4701 = vmatpush1.msra.mxu0 0.0
      %4702 = vmatprep.subr.mxu0 0.0
      %4703 = vmatpush1.msra.mxu0 0.0
      %4704 = vmatprep.subr.mxu0 0.0
      %4705 = vmatpush1.msra.mxu0 0.0
      %4706 = vmatprep.subr.mxu0 0.0
      %4707 = vmatpush1.msra.mxu0 0.0
      %4708 = vmatprep.subr.mxu0 0.0
      %4709 = vmatpush1.msra.mxu0 0.0
      %4710 = vmatprep.subr.mxu0 0.0
      %4711 = vmatpush1.msra.mxu0 0.0
      %4712 = vmatprep.mubr.f32.mxu0 0.0
      %4713 = vmatmul.mubr.f32.gmra.mrb[0].mxu0 %v4625
      %v4714 = vpop.f32.mrb[0].mxu0
      %v4715 = vadd.f32 0.0, %v4714
      %v4716 = vpop.f32.mrb[0].mxu0
      %4717 = vmatprep.mubr.f32.mxu0 0.0
      %4718 = vmatmul.mubr.f32.gmra.mrb[0].mxu0 %v4628
      %v4719 = vpop.f32.mrb[0].mxu0
      %v4720 = vadd.f32 0.0, %v4719
      %v4721 = vpop.f32.mrb[0].mxu0
      %4722 = vmatprep.mubr.f32.mxu0 0.0
      %4723 = vmatmul.mubr.f32.gmra.mrb[0].mxu0 %v4631
      %v4724 = vpop.f32.mrb[0].mxu0
      %v4725 = vadd.f32 0.0, %v4724
      %v4726 = vpop.f32.mrb[0].mxu0
      %4727 = vmatprep.mubr.f32.mxu0 0.0
      %4728 = vmatmul.mubr.f32.gmra.mrb[0].mxu0 %v4634
      %v4729 = vpop.f32.mrb[0].mxu0
      %v4730 = vadd.f32 0.0, %v4729
      %v4731 = vpop.f32.mrb[0].mxu0
      %4732 = vmatprep.mubr.f32.mxu0 0.0
      %4733 = vmatmul.mubr.f32.gmra.mrb[0].mxu0 %v4637
      %v4734 = vpop.f32.mrb[0].mxu0
      %v4735 = vadd.f32 0.0, %v4734
      %v4736 = vpop.f32.mrb[0].mxu0
      %4737 = vmatprep.mubr.f32.mxu0 0.0
      %4738 = vmatmul.mubr.f32.gmra.mrb[0].mxu0 %v4640
      %v4739 = vpop.f32.mrb[0].mxu0
      %v4740 = vadd.f32 0.0, %v4739
      %v4741 = vpop.f32.mrb[0].mxu0
      %4742 = vmatprep.mubr.f32.mxu0 0.0
      %4743 = vmatmul.mubr.f32.gmra.mrb[0].mxu0 %v4643
      %v4744 = vpop.f32.mrb[0].mxu0
      %v4745 = vadd.f32 0.0, %v4744
      %v4746 = vpop.f32.mrb[0].mxu0
      %4747 = vmatprep.mubr.f32.mxu0 0.0
      %4748 = vmatmul.mubr.f32.gmra.mrb[0].mxu0 %v4646
      %v4749 = vpop.f32.mrb[0].mxu0
      %v4750 = vadd.f32 0.0, %v4749
      %v4751 = vpop.f32.mrb[0].mxu0
      %4752 = vdwg.mxu0
      %v4753 = vld [vmem:[%s6] sm:$0xff]
      %v4754 = vld [vmem:[%s6 + $0x8] sm:$0xff]
      %v4755 = vld [vmem:[%s6 + $0x10] sm:$0xff]
      %v4756 = vld [vmem:[%s6 + $0x18] sm:$0xff]
      %v4757 = vld [vmem:[%s6 + $0x20] sm:$0xff]
      %v4758 = vld [vmem:[%s6 + $0x28] sm:$0xff]
      %v4759 = vld [vmem:[%s6 + $0x30] sm:$0xff]
      %v4760 = vld [vmem:[%s6 + $0x38] sm:$0xff]
      %v4761 = vld [vmem:[%s6 + $0x40] sm:$0xff]
      %v4762 = vld [vmem:[%s6 + $0x48] sm:$0xff]
      %v4763 = vld [vmem:[%s6 + $0x50] sm:$0xff]
      %v4764 = vld [vmem:[%s6 + $0x58] sm:$0xff]
      %vm4765 = vcmask 523264
      %v4767 = vsel %vm4765, %v4753, 0
      %v4770 = vsel %vm4765, %v4754, 0
      %v4773 = vsel %vm4765, %v4755, 0
      %v4776 = vsel %vm4765, %v4756, 0
      %v4779 = vsel %vm4765, %v4757, 0
      %v4782 = vsel %vm4765, %v4758, 0
      %v4785 = vsel %vm4765, %v4759, 0
      %v4788 = vsel %vm4765, %v4760, 0
      %v4791 = vsel %vm4765, %v4761, 0
      %v4794 = vsel %vm4765, %v4762, 0
      %v4797 = vsel %vm4765, %v4763, 0
      %v4800 = vsel %vm4765, %v4764, 0
      %4802 = vmatprep.subr.mxu0 0.0
      %4803 = vmatpush1.msra.mxu0 %v4715
      %4804 = vmatprep.subr.mxu0 0.0
      %4805 = vmatpush1.msra.mxu0 %v4720
      %4806 = vmatprep.subr.mxu0 0.0
      %4807 = vmatpush1.msra.mxu0 %v4725
      %4808 = vmatprep.subr.mxu0 0.0
      %4809 = vmatpush1.msra.mxu0 %v4730
      %4810 = vmatprep.subr.mxu0 0.0
      %4811 = vmatpush1.msra.mxu0 %v4735
      %4812 = vmatprep.subr.mxu0 0.0
      %4813 = vmatpush1.msra.mxu0 %v4740
      %4814 = vmatprep.subr.mxu0 0.0
      %4815 = vmatpush1.msra.mxu0 %v4745
      %4816 = vmatprep.subr.mxu0 0.0
      %4817 = vmatpush1.msra.mxu0 %v4750
      %4818 = vmatprep.subr.mxu0 0.0
      %4819 = vmatpush1.msra.mxu0 0.0
      %4820 = vmatprep.subr.mxu0 0.0
      %4821 = vmatpush1.msra.mxu0 0.0
      %4822 = vmatprep.subr.mxu0 0.0
      %4823 = vmatpush1.msra.mxu0 0.0
      %4824 = vmatprep.subr.mxu0 0.0
      %4825 = vmatpush1.msra.mxu0 0.0
      %4826 = vmatprep.subr.mxu0 0.0
      %4827 = vmatpush1.msra.mxu0 0.0
      %4828 = vmatprep.subr.mxu0 0.0
      %4829 = vmatpush1.msra.mxu0 0.0
      %4830 = vmatprep.subr.mxu0 0.0
      %4831 = vmatpush1.msra.mxu0 0.0
      %4832 = vmatprep.subr.mxu0 0.0
      %4833 = vmatpush1.msra.mxu0 0.0
      %4834 = vmatprep.subr.mxu0 0.0
      %4835 = vmatpush1.msra.mxu0 0.0
      %4836 = vmatprep.subr.mxu0 0.0
      %4837 = vmatpush1.msra.mxu0 0.0
      %4838 = vmatprep.subr.mxu0 0.0
      %4839 = vmatpush1.msra.mxu0 0.0
      %4840 = vmatprep.subr.mxu0 0.0
      %4841 = vmatpush1.msra.mxu0 0.0
      %4842 = vmatprep.subr.mxu0 0.0
      %4843 = vmatpush1.msra.mxu0 0.0
      %4844 = vmatprep.subr.mxu0 0.0
      %4845 = vmatpush1.msra.mxu0 0.0
      %4846 = vmatprep.subr.mxu0 0.0
      %4847 = vmatpush1.msra.mxu0 0.0
      %4848 = vmatprep.subr.mxu0 0.0
      %4849 = vmatpush1.msra.mxu0 0.0
      %4850 = vmatprep.subr.mxu0 0.0
      %4851 = vmatpush1.msra.mxu0 0.0
      %4852 = vmatprep.subr.mxu0 0.0
      %4853 = vmatpush1.msra.mxu0 0.0
      %4854 = vmatprep.subr.mxu0 0.0
      %4855 = vmatpush1.msra.mxu0 0.0
      %4856 = vmatprep.subr.mxu0 0.0
      %4857 = vmatpush1.msra.mxu0 0.0
      %4858 = vmatprep.subr.mxu0 0.0
      %4859 = vmatpush1.msra.mxu0 0.0
      %4860 = vmatprep.subr.mxu0 0.0
      %4861 = vmatpush1.msra.mxu0 0.0
      %4862 = vmatprep.subr.mxu0 0.0
      %4863 = vmatpush1.msra.mxu0 0.0
      %4864 = vmatprep.subr.mxu0 0.0
      %4865 = vmatpush1.msra.mxu0 0.0
      %4866 = vmatprep.mubr.f32.mxu0 0.0
      %4867 = vmatmul.mubr.f32.gmra.mrb[0].mxu0 %v4767
      %v4868 = vpop.f32.mrb[0].mxu0
      %v4869 = vadd.f32 0.0, %v4868
      %v4870 = vpop.f32.mrb[0].mxu0
      %4871 = vmatprep.mubr.f32.mxu0 0.0
      %4872 = vmatmul.mubr.f32.gmra.mrb[0].mxu0 %v4770
      %v4873 = vpop.f32.mrb[0].mxu0
      %v4874 = vadd.f32 0.0, %v4873
      %v4875 = vpop.f32.mrb[0].mxu0
      %4876 = vmatprep.mubr.f32.mxu0 0.0
      %4877 = vmatmul.mubr.f32.gmra.mrb[0].mxu0 %v4773
      %v4878 = vpop.f32.mrb[0].mxu0
      %v4879 = vadd.f32 0.0, %v4878
      %v4880 = vpop.f32.mrb[0].mxu0
      %4881 = vmatprep.mubr.f32.mxu0 0.0
      %4882 = vmatmul.mubr.f32.gmra.mrb[0].mxu0 %v4776
      %v4883 = vpop.f32.mrb[0].mxu0
      %v4884 = vadd.f32 0.0, %v4883
      %v4885 = vpop.f32.mrb[0].mxu0
      %4886 = vmatprep.mubr.f32.mxu0 0.0
      %4887 = vmatmul.mubr.f32.gmra.mrb[0].mxu0 %v4779
      %v4888 = vpop.f32.mrb[0].mxu0
      %v4889 = vadd.f32 0.0, %v4888
      %v4890 = vpop.f32.mrb[0].mxu0
      %4891 = vmatprep.mubr.f32.mxu0 0.0
      %4892 = vmatmul.mubr.f32.gmra.mrb[0].mxu0 %v4782
      %v4893 = vpop.f32.mrb[0].mxu0
      %v4894 = vadd.f32 0.0, %v4893
      %v4895 = vpop.f32.mrb[0].mxu0
      %4896 = vmatprep.mubr.f32.mxu0 0.0
      %4897 = vmatmul.mubr.f32.gmra.mrb[0].mxu0 %v4785
      %v4898 = vpop.f32.mrb[0].mxu0
      %v4899 = vadd.f32 0.0, %v4898
      %v4900 = vpop.f32.mrb[0].mxu0
      %4901 = vmatprep.mubr.f32.mxu0 0.0
      %4902 = vmatmul.mubr.f32.gmra.mrb[0].mxu0 %v4788
      %v4903 = vpop.f32.mrb[0].mxu0
      %v4904 = vadd.f32 0.0, %v4903
      %v4905 = vpop.f32.mrb[0].mxu0
      %4906 = vmatprep.mubr.f32.mxu0 0.0
      %4907 = vmatmul.mubr.f32.gmra.mrb[0].mxu0 %v4791
      %v4908 = vpop.f32.mrb[0].mxu0
      %v4909 = vadd.f32 0.0, %v4908
      %v4910 = vpop.f32.mrb[0].mxu0
      %4911 = vmatprep.mubr.f32.mxu0 0.0
      %4912 = vmatmul.mubr.f32.gmra.mrb[0].mxu0 %v4794
      %v4913 = vpop.f32.mrb[0].mxu0
      %v4914 = vadd.f32 0.0, %v4913
      %v4915 = vpop.f32.mrb[0].mxu0
      %4916 = vmatprep.mubr.f32.mxu0 0.0
      %4917 = vmatmul.mubr.f32.gmra.mrb[0].mxu0 %v4797
      %v4918 = vpop.f32.mrb[0].mxu0
      %v4919 = vadd.f32 0.0, %v4918
      %v4920 = vpop.f32.mrb[0].mxu0
      %4921 = vmatprep.mubr.f32.mxu0 0.0
      %4922 = vmatmul.mubr.f32.gmra.mrb[0].mxu0 %v4800
      %v4923 = vpop.f32.mrb[0].mxu0
      %v4924 = vadd.f32 0.0, %v4923
      %v4925 = vpop.f32.mrb[0].mxu0
      %4926 = vdwg.mxu0
      %v4927 = vld [vmem:[%s7] sm:$0xff]
      %v4928 = vld [vmem:[%s7 + $0x8] sm:$0xff]
      %v4929 = vld [vmem:[%s7 + $0x10] sm:$0xff]
      %v4930 = vld [vmem:[%s7 + $0x18] sm:$0xff]
      %s4931 = scalar_lea.vmem %s7, 32
      %v4932 = vld [vmem:[%s4931] sm:$0xff]
      %v4933 = vld [vmem:[%s4931 + $0x8] sm:$0xff]
      %v4934 = vld [vmem:[%s4931 + $0x10] sm:$0xff]
      %v4935 = vld [vmem:[%s4931 + $0x18] sm:$0xff]
      %4948 = vrot.lane.b32.xlu0 %v4869, 120
      %v4949 = vpop.permute.xlu0 %4948
      %4950 = vrot.lane.b32.xlu0 %v4874, 120
      %v4951 = vpop.permute.xlu0 %4950
      %4952 = vrot.lane.b32.xlu0 %v4879, 120
      %v4953 = vpop.permute.xlu0 %4952
      %4954 = vrot.lane.b32.xlu0 %v4884, 120
      %v4955 = vpop.permute.xlu0 %4954
      %4956 = vrot.lane.b32.xlu0 %v4889, 120
      %v4957 = vpop.permute.xlu0 %4956
      %4958 = vrot.lane.b32.xlu0 %v4894, 120
      %v4959 = vpop.permute.xlu0 %4958
      %4960 = vrot.lane.b32.xlu0 %v4899, 120
      %v4961 = vpop.permute.xlu0 %4960
      %4962 = vrot.lane.b32.xlu0 %v4904, 120
      %v4963 = vpop.permute.xlu0 %4962
      %4964 = vrot.lane.b32.xlu0 %v4909, 120
      %v4965 = vpop.permute.xlu0 %4964
      %4966 = vrot.lane.b32.xlu0 %v4914, 120
      %v4967 = vpop.permute.xlu0 %4966
      %4968 = vrot.lane.b32.xlu0 %v4919, 120
      %v4969 = vpop.permute.xlu0 %4968
      %4970 = vrot.lane.b32.xlu0 %v4924, 120
      %v4971 = vpop.permute.xlu0 %4970
      %vm4984 = vcmask 785408
      %v4986 = vsel %vm4984, %v4932, 0
      %v4989 = vsel %vm4984, %v4933, 0
      %v4992 = vsel %vm4984, %v4934, 0
      %v4995 = vsel %vm4984, %v4935, 0
      %4997 = vmatprep.subr.mxu0 0.0
      %4998 = vmatpush1.msra.mxu0 %v4949
      %4999 = vmatprep.subr.mxu0 0.0
      %5000 = vmatpush1.msra.mxu0 %v4951
      %5001 = vmatprep.subr.mxu0 0.0
      %5002 = vmatpush1.msra.mxu0 %v4953
      %5003 = vmatprep.subr.mxu0 0.0
      %5004 = vmatpush1.msra.mxu0 %v4955
      %5005 = vmatprep.subr.mxu0 0.0
      %5006 = vmatpush1.msra.mxu0 %v4957
      %5007 = vmatprep.subr.mxu0 0.0
      %5008 = vmatpush1.msra.mxu0 %v4959
      %5009 = vmatprep.subr.mxu0 0.0
      %5010 = vmatpush1.msra.mxu0 %v4961
      %5011 = vmatprep.subr.mxu0 0.0
      %5012 = vmatpush1.msra.mxu0 %v4963
      %5013 = vmatprep.subr.mxu0 0.0
      %5014 = vmatpush1.msra.mxu0 %v4965
      %5015 = vmatprep.subr.mxu0 0.0
      %5016 = vmatpush1.msra.mxu0 %v4967
      %5017 = vmatprep.subr.mxu0 0.0
      %5018 = vmatpush1.msra.mxu0 %v4969
      %5019 = vmatprep.subr.mxu0 0.0
      %5020 = vmatpush1.msra.mxu0 %v4971
      %5021 = vmatprep.subr.mxu0 0.0
      %5022 = vmatpush1.msra.mxu0 0.0
      %5023 = vmatprep.subr.mxu0 0.0
      %5024 = vmatpush1.msra.mxu0 0.0
      %5025 = vmatprep.subr.mxu0 0.0
      %5026 = vmatpush1.msra.mxu0 0.0
      %5027 = vmatprep.subr.mxu0 0.0
      %5028 = vmatpush1.msra.mxu0 0.0
      %5029 = vmatprep.subr.mxu0 0.0
      %5030 = vmatpush1.msra.mxu0 0.0
      %5031 = vmatprep.subr.mxu0 0.0
      %5032 = vmatpush1.msra.mxu0 0.0
      %5033 = vmatprep.subr.mxu0 0.0
      %5034 = vmatpush1.msra.mxu0 0.0
      %5035 = vmatprep.subr.mxu0 0.0
      %5036 = vmatpush1.msra.mxu0 0.0
      %5037 = vmatprep.subr.mxu0 0.0
      %5038 = vmatpush1.msra.mxu0 0.0
      %5039 = vmatprep.subr.mxu0 0.0
      %5040 = vmatpush1.msra.mxu0 0.0
      %5041 = vmatprep.subr.mxu0 0.0
      %5042 = vmatpush1.msra.mxu0 0.0
      %5043 = vmatprep.subr.mxu0 0.0
      %5044 = vmatpush1.msra.mxu0 0.0
      %5045 = vmatprep.subr.mxu0 0.0
      %5046 = vmatpush1.msra.mxu0 0.0
      %5047 = vmatprep.subr.mxu0 0.0
      %5048 = vmatpush1.msra.mxu0 0.0
      %5049 = vmatprep.subr.mxu0 0.0
      %5050 = vmatpush1.msra.mxu0 0.0
      %5051 = vmatprep.subr.mxu0 0.0
      %5052 = vmatpush1.msra.mxu0 0.0
      %5053 = vmatprep.subr.mxu0 0.0
      %5054 = vmatpush1.msra.mxu0 0.0
      %5055 = vmatprep.subr.mxu0 0.0
      %5056 = vmatpush1.msra.mxu0 0.0
      %5057 = vmatprep.subr.mxu0 0.0
      %5058 = vmatpush1.msra.mxu0 0.0
      %5059 = vmatprep.subr.mxu0 0.0
      %5060 = vmatpush1.msra.mxu0 0.0
      %5061 = vmatprep.mubr.f32.mxu0 0.0
      %5062 = vmatmul.mubr.f32.gmra.mrb[0].mxu0 %v4986
      %v5063 = vpop.f32.mrb[0].mxu0
      %v5064 = vadd.f32 0.0, %v5063
      %v5065 = vpop.f32.mrb[0].mxu0
      %5066 = vmatprep.mubr.f32.mxu0 0.0
      %5067 = vmatmul.mubr.f32.gmra.mrb[0].mxu0 %v4989
      %v5068 = vpop.f32.mrb[0].mxu0
      %v5069 = vadd.f32 0.0, %v5068
      %v5070 = vpop.f32.mrb[0].mxu0
      %5071 = vmatprep.mubr.f32.mxu0 0.0
      %5072 = vmatmul.mubr.f32.gmra.mrb[0].mxu0 %v4992
      %v5073 = vpop.f32.mrb[0].mxu0
      %v5074 = vadd.f32 0.0, %v5073
      %v5075 = vpop.f32.mrb[0].mxu0
      %5076 = vmatprep.mubr.f32.mxu0 0.0
      %5077 = vmatmul.mubr.f32.gmra.mrb[0].mxu0 %v4995
      %v5078 = vpop.f32.mrb[0].mxu0
      %v5079 = vadd.f32 0.0, %v5078
      %v5080 = vpop.f32.mrb[0].mxu0
      %5081 = vdwg.mxu0
      %v5083 = vsel %vm4984, %v4927, 0
      %v5086 = vsel %vm4984, %v4928, 0
      %v5089 = vsel %vm4984, %v4929, 0
      %v5092 = vsel %vm4984, %v4930, 0
      %5094 = vmatprep.subr.mxu0 0.0
      %5095 = vmatpush1.msra.mxu0 %v4869
      %5096 = vmatprep.subr.mxu0 0.0
      %5097 = vmatpush1.msra.mxu0 %v4874
      %5098 = vmatprep.subr.mxu0 0.0
      %5099 = vmatpush1.msra.mxu0 %v4879
      %5100 = vmatprep.subr.mxu0 0.0
      %5101 = vmatpush1.msra.mxu0 %v4884
      %5102 = vmatprep.subr.mxu0 0.0
      %5103 = vmatpush1.msra.mxu0 %v4889
      %5104 = vmatprep.subr.mxu0 0.0
      %5105 = vmatpush1.msra.mxu0 %v4894
      %5106 = vmatprep.subr.mxu0 0.0
      %5107 = vmatpush1.msra.mxu0 %v4899
      %5108 = vmatprep.subr.mxu0 0.0
      %5109 = vmatpush1.msra.mxu0 %v4904
      %5110 = vmatprep.subr.mxu0 0.0
      %5111 = vmatpush1.msra.mxu0 %v4909
      %5112 = vmatprep.subr.mxu0 0.0
      %5113 = vmatpush1.msra.mxu0 %v4914
      %5114 = vmatprep.subr.mxu0 0.0
      %5115 = vmatpush1.msra.mxu0 %v4919
      %5116 = vmatprep.subr.mxu0 0.0
      %5117 = vmatpush1.msra.mxu0 %v4924
      %5118 = vmatprep.subr.mxu0 0.0
      %5119 = vmatpush1.msra.mxu0 0.0
      %5120 = vmatprep.subr.mxu0 0.0
      %5121 = vmatpush1.msra.mxu0 0.0
      %5122 = vmatprep.subr.mxu0 0.0
      %5123 = vmatpush1.msra.mxu0 0.0
      %5124 = vmatprep.subr.mxu0 0.0
      %5125 = vmatpush1.msra.mxu0 0.0
      %5126 = vmatprep.subr.mxu0 0.0
      %5127 = vmatpush1.msra.mxu0 0.0
      %5128 = vmatprep.subr.mxu0 0.0
      %5129 = vmatpush1.msra.mxu0 0.0
      %5130 = vmatprep.subr.mxu0 0.0
      %5131 = vmatpush1.msra.mxu0 0.0
      %5132 = vmatprep.subr.mxu0 0.0
      %5133 = vmatpush1.msra.mxu0 0.0
      %5134 = vmatprep.subr.mxu0 0.0
      %5135 = vmatpush1.msra.mxu0 0.0
      %5136 = vmatprep.subr.mxu0 0.0
      %5137 = vmatpush1.msra.mxu0 0.0
      %5138 = vmatprep.subr.mxu0 0.0
      %5139 = vmatpush1.msra.mxu0 0.0
      %5140 = vmatprep.subr.mxu0 0.0
      %5141 = vmatpush1.msra.mxu0 0.0
      %5142 = vmatprep.subr.mxu0 0.0
      %5143 = vmatpush1.msra.mxu0 0.0
      %5144 = vmatprep.subr.mxu0 0.0
      %5145 = vmatpush1.msra.mxu0 0.0
      %5146 = vmatprep.subr.mxu0 0.0
      %5147 = vmatpush1.msra.mxu0 0.0
      %5148 = vmatprep.subr.mxu0 0.0
      %5149 = vmatpush1.msra.mxu0 0.0
      %5150 = vmatprep.subr.mxu0 0.0
      %5151 = vmatpush1.msra.mxu0 0.0
      %5152 = vmatprep.subr.mxu0 0.0
      %5153 = vmatpush1.msra.mxu0 0.0
      %5154 = vmatprep.subr.mxu0 0.0
      %5155 = vmatpush1.msra.mxu0 0.0
      %5156 = vmatprep.subr.mxu0 0.0
      %5157 = vmatpush1.msra.mxu0 0.0
      %5158 = vmatprep.mubr.f32.mxu0 0.0
      %5159 = vmatmul.mubr.f32.gmra.mrb[0].mxu0 %v5083
      %v5160 = vpop.f32.mrb[0].mxu0
      %v5161 = vadd.f32 %v5064, %v5160
      %v5162 = vpop.f32.mrb[0].mxu0
      %5163 = vmatprep.mubr.f32.mxu0 0.0
      %5164 = vmatmul.mubr.f32.gmra.mrb[0].mxu0 %v5086
      %v5165 = vpop.f32.mrb[0].mxu0
      %v5166 = vadd.f32 %v5069, %v5165
      %v5167 = vpop.f32.mrb[0].mxu0
      %5168 = vmatprep.mubr.f32.mxu0 0.0
      %5169 = vmatmul.mubr.f32.gmra.mrb[0].mxu0 %v5089
      %v5170 = vpop.f32.mrb[0].mxu0
      %v5171 = vadd.f32 %v5074, %v5170
      %v5172 = vpop.f32.mrb[0].mxu0
      %5173 = vmatprep.mubr.f32.mxu0 0.0
      %5174 = vmatmul.mubr.f32.gmra.mrb[0].mxu0 %v5092
      %v5175 = vpop.f32.mrb[0].mxu0
      %v5176 = vadd.f32 %v5079, %v5175
      %v5177 = vpop.f32.mrb[0].mxu0
      %5178 = vdwg.mxu0
      %s5179 = scalar_lea.vmem %s7, 64
      %v5180 = vld [vmem:[%s5179] sm:$0xff]
      %v5181 = vld [vmem:[%s5179 + $0x8] sm:$0xff]
      %v5182 = vld [vmem:[%s5179 + $0x10] sm:$0xff]
      %v5183 = vld [vmem:[%s5179 + $0x18] sm:$0xff]
      %5184 = vrot.lane.b32.xlu0 %v4869, 112
      %v5185 = vpop.permute.xlu0 %5184
      %5186 = vrot.lane.b32.xlu0 %v4874, 112
      %v5187 = vpop.permute.xlu0 %5186
      %5188 = vrot.lane.b32.xlu0 %v4879, 112
      %v5189 = vpop.permute.xlu0 %5188
      %5190 = vrot.lane.b32.xlu0 %v4884, 112
      %v5191 = vpop.permute.xlu0 %5190
      %5192 = vrot.lane.b32.xlu0 %v4889, 112
      %v5193 = vpop.permute.xlu0 %5192
      %5194 = vrot.lane.b32.xlu0 %v4894, 112
      %v5195 = vpop.permute.xlu0 %5194
      %5196 = vrot.lane.b32.xlu0 %v4899, 112
      %v5197 = vpop.permute.xlu0 %5196
      %5198 = vrot.lane.b32.xlu0 %v4904, 112
      %v5199 = vpop.permute.xlu0 %5198
      %5200 = vrot.lane.b32.xlu0 %v4909, 112
      %v5201 = vpop.permute.xlu0 %5200
      %5202 = vrot.lane.b32.xlu0 %v4914, 112
      %v5203 = vpop.permute.xlu0 %5202
      %5204 = vrot.lane.b32.xlu0 %v4919, 112
      %v5205 = vpop.permute.xlu0 %5204
      %5206 = vrot.lane.b32.xlu0 %v4924, 112
      %v5207 = vpop.permute.xlu0 %5206
      %v5221 = vsel %vm4984, %v5180, 0
      %v5224 = vsel %vm4984, %v5181, 0
      %v5227 = vsel %vm4984, %v5182, 0
      %v5230 = vsel %vm4984, %v5183, 0
      %5232 = vmatprep.subr.mxu0 0.0
      %5233 = vmatpush1.msra.mxu0 %v5185
      %5234 = vmatprep.subr.mxu0 0.0
      %5235 = vmatpush1.msra.mxu0 %v5187
      %5236 = vmatprep.subr.mxu0 0.0
      %5237 = vmatpush1.msra.mxu0 %v5189
      %5238 = vmatprep.subr.mxu0 0.0
      %5239 = vmatpush1.msra.mxu0 %v5191
      %5240 = vmatprep.subr.mxu0 0.0
      %5241 = vmatpush1.msra.mxu0 %v5193
      %5242 = vmatprep.subr.mxu0 0.0
      %5243 = vmatpush1.msra.mxu0 %v5195
      %5244 = vmatprep.subr.mxu0 0.0
      %5245 = vmatpush1.msra.mxu0 %v5197
      %5246 = vmatprep.subr.mxu0 0.0
      %5247 = vmatpush1.msra.mxu0 %v5199
      %5248 = vmatprep.subr.mxu0 0.0
      %5249 = vmatpush1.msra.mxu0 %v5201
      %5250 = vmatprep.subr.mxu0 0.0
      %5251 = vmatpush1.msra.mxu0 %v5203
      %5252 = vmatprep.subr.mxu0 0.0
      %5253 = vmatpush1.msra.mxu0 %v5205
      %5254 = vmatprep.subr.mxu0 0.0
      %5255 = vmatpush1.msra.mxu0 %v5207
      %5256 = vmatprep.subr.mxu0 0.0
      %5257 = vmatpush1.msra.mxu0 0.0
      %5258 = vmatprep.subr.mxu0 0.0
      %5259 = vmatpush1.msra.mxu0 0.0
      %5260 = vmatprep.subr.mxu0 0.0
      %5261 = vmatpush1.msra.mxu0 0.0
      %5262 = vmatprep.subr.mxu0 0.0
      %5263 = vmatpush1.msra.mxu0 0.0
      %5264 = vmatprep.subr.mxu0 0.0
      %5265 = vmatpush1.msra.mxu0 0.0
      %5266 = vmatprep.subr.mxu0 0.0
      %5267 = vmatpush1.msra.mxu0 0.0
      %5268 = vmatprep.subr.mxu0 0.0
      %5269 = vmatpush1.msra.mxu0 0.0
      %5270 = vmatprep.subr.mxu0 0.0
      %5271 = vmatpush1.msra.mxu0 0.0
      %5272 = vmatprep.subr.mxu0 0.0
      %5273 = vmatpush1.msra.mxu0 0.0
      %5274 = vmatprep.subr.mxu0 0.0
      %5275 = vmatpush1.msra.mxu0 0.0
      %5276 = vmatprep.subr.mxu0 0.0
      %5277 = vmatpush1.msra.mxu0 0.0
      %5278 = vmatprep.subr.mxu0 0.0
      %5279 = vmatpush1.msra.mxu0 0.0
      %5280 = vmatprep.subr.mxu0 0.0
      %5281 = vmatpush1.msra.mxu0 0.0
      %5282 = vmatprep.subr.mxu0 0.0
      %5283 = vmatpush1.msra.mxu0 0.0
      %5284 = vmatprep.subr.mxu0 0.0
      %5285 = vmatpush1.msra.mxu0 0.0
      %5286 = vmatprep.subr.mxu0 0.0
      %5287 = vmatpush1.msra.mxu0 0.0
      %5288 = vmatprep.subr.mxu0 0.0
      %5289 = vmatpush1.msra.mxu0 0.0
      %5290 = vmatprep.subr.mxu0 0.0
      %5291 = vmatpush1.msra.mxu0 0.0
      %5292 = vmatprep.subr.mxu0 0.0
      %5293 = vmatpush1.msra.mxu0 0.0
      %5294 = vmatprep.subr.mxu0 0.0
      %5295 = vmatpush1.msra.mxu0 0.0
      %5296 = vmatprep.mubr.f32.mxu0 0.0
      %5297 = vmatmul.mubr.f32.gmra.mrb[0].mxu0 %v5221
      %v5298 = vpop.f32.mrb[0].mxu0
      %v5299 = vadd.f32 0.0, %v5298
      %v5300 = vpop.f32.mrb[0].mxu0
      %5301 = vmatprep.mubr.f32.mxu0 0.0
      %5302 = vmatmul.mubr.f32.gmra.mrb[0].mxu0 %v5224
      %v5303 = vpop.f32.mrb[0].mxu0
      %v5304 = vadd.f32 0.0, %v5303
      %v5305 = vpop.f32.mrb[0].mxu0
      %5306 = vmatprep.mubr.f32.mxu0 0.0
      %5307 = vmatmul.mubr.f32.gmra.mrb[0].mxu0 %v5227
      %v5308 = vpop.f32.mrb[0].mxu0
      %v5309 = vadd.f32 0.0, %v5308
      %v5310 = vpop.f32.mrb[0].mxu0
      %5311 = vmatprep.mubr.f32.mxu0 0.0
      %5312 = vmatmul.mubr.f32.gmra.mrb[0].mxu0 %v5230
      %v5313 = vpop.f32.mrb[0].mxu0
      %v5314 = vadd.f32 0.0, %v5313
      %v5315 = vpop.f32.mrb[0].mxu0
      %5316 = vdwg.mxu0
      %v5317 = vadd.f32 %v5161, %v5299
      %v5318 = vadd.f32 %v5166, %v5304
      %v5319 = vadd.f32 %v5171, %v5309
      %v5320 = vadd.f32 %v5176, %v5314
      %v5321 = vld [vmem:[%s8] sm:$0xff]
      %v5322 = vld [vmem:[%s8 + $0x8] sm:$0xff]
      %v5323 = vld [vmem:[%s8 + $0x10] sm:$0xff]
      %v5324 = vld [vmem:[%s8 + $0x18] sm:$0xff]
      %5326 = vset.pattern.permute.xlu0 0
      %5327 = vperm.xlu0 %5326, %v5321
      %v5328 = vpop.permute.xlu0 %5327
      %5331 = vset.pattern.permute.xlu0 0
      %5332 = vperm.xlu0 %5331, %v5322
      %v5333 = vpop.permute.xlu0 %5332
      %5336 = vset.pattern.permute.xlu0 0
      %5337 = vperm.xlu0 %5336, %v5323
      %v5338 = vpop.permute.xlu0 %5337
      %5341 = vset.pattern.permute.xlu0 0
      %5342 = vperm.xlu0 %5341, %v5324
      %v5343 = vpop.permute.xlu0 %5342
      %v5345 = vadd.f32 %v5317, %v5328
      %v5346 = vadd.f32 %v5318, %v5333
      %v5347 = vadd.f32 %v5319, %v5338
      %v5348 = vadd.f32 %v5320, %v5343
      %v5349 = vmul.f32 %v5345, 0.5
      %v5350 = vmul.f32 %v5346, 0.5
      %v5351 = vmul.f32 %v5347, 0.5
      %v5352 = vmul.f32 %v5348, 0.5
      %v5353 = vmul.f32 %v5345, 0.044715
      %v5354 = vmul.f32 %v5346, 0.044715
      %v5355 = vmul.f32 %v5347, 0.044715
      %v5356 = vmul.f32 %v5348, 0.044715
      %v5357 = vmul.f32 %v5353, %v5345
      %v5358 = vmul.f32 %v5354, %v5346
      %v5359 = vmul.f32 %v5355, %v5347
      %v5360 = vmul.f32 %v5356, %v5348
      %v5361 = vmul.f32 %v5357, %v5345
      %v5362 = vmul.f32 %v5358, %v5346
      %v5363 = vmul.f32 %v5359, %v5347
      %v5364 = vmul.f32 %v5360, %v5348
      %v5365 = vadd.f32 %v5345, %v5361
      %v5366 = vadd.f32 %v5346, %v5362
      %v5367 = vadd.f32 %v5347, %v5363
      %v5368 = vadd.f32 %v5348, %v5364
      %v5369 = vmul.f32 %v5365, 0.7978846
      %v5370 = vmul.f32 %v5366, 0.7978846
      %v5371 = vmul.f32 %v5367, 0.7978846
      %v5372 = vmul.f32 %v5368, 0.7978846
      %v5373 = vtanh.pop %v5369
      %v5374 = vtanh.pop %v5370
      %v5375 = vtanh.pop %v5371
      %v5376 = vtanh.pop %v5372
      %v5377 = vadd.f32 %v5373, 1.0
      %v5378 = vadd.f32 %v5374, 1.0
      %v5379 = vadd.f32 %v5375, 1.0
      %v5380 = vadd.f32 %v5376, 1.0
      %v5381 = vmul.f32 %v5349, %v5377
      %v5382 = vmul.f32 %v5350, %v5378
      %v5383 = vmul.f32 %v5351, %v5379
      %v5384 = vmul.f32 %v5352, %v5380
      %v5385 = vld [vmem:[%s9] sm:$0xff]
      %v5386 = vld [vmem:[%s9 + $0x8] sm:$0xff]
      %s5387 = scalar_lea.vmem %s9, 16
      %v5388 = vld [vmem:[%s5387] sm:$0xff]
      %v5389 = vld [vmem:[%s5387 + $0x8] sm:$0xff]
      %5394 = vrot.lane.b32.xlu0 %v5381, 127
      %v5395 = vpop.permute.xlu0 %5394
      %5396 = vrot.lane.b32.xlu0 %v5382, 127
      %v5397 = vpop.permute.xlu0 %5396
      %5398 = vrot.lane.b32.xlu0 %v5383, 127
      %v5399 = vpop.permute.xlu0 %5398
      %5400 = vrot.lane.b32.xlu0 %v5384, 127
      %v5401 = vpop.permute.xlu0 %5400
      %v5407 = vsel %vm2130, %v5388, 0
      %v5410 = vsel %vm2130, %v5389, 0
      %5412 = vmatprep.subr.mxu0 0.0
      %5413 = vmatpush1.msra.mxu0 %v5395
      %5414 = vmatprep.subr.mxu0 0.0
      %5415 = vmatpush1.msra.mxu0 %v5397
      %5416 = vmatprep.subr.mxu0 0.0
      %5417 = vmatpush1.msra.mxu0 %v5399
      %5418 = vmatprep.subr.mxu0 0.0
      %5419 = vmatpush1.msra.mxu0 %v5401
      %5420 = vmatprep.subr.mxu0 0.0
      %5421 = vmatpush1.msra.mxu0 0.0
      %5422 = vmatprep.subr.mxu0 0.0
      %5423 = vmatpush1.msra.mxu0 0.0
      %5424 = vmatprep.subr.mxu0 0.0
      %5425 = vmatpush1.msra.mxu0 0.0
      %5426 = vmatprep.subr.mxu0 0.0
      %5427 = vmatpush1.msra.mxu0 0.0
      %5428 = vmatprep.subr.mxu0 0.0
      %5429 = vmatpush1.msra.mxu0 0.0
      %5430 = vmatprep.subr.mxu0 0.0
      %5431 = vmatpush1.msra.mxu0 0.0
      %5432 = vmatprep.subr.mxu0 0.0
      %5433 = vmatpush1.msra.mxu0 0.0
      %5434 = vmatprep.subr.mxu0 0.0
      %5435 = vmatpush1.msra.mxu0 0.0
      %5436 = vmatprep.subr.mxu0 0.0
      %5437 = vmatpush1.msra.mxu0 0.0
      %5438 = vmatprep.subr.mxu0 0.0
      %5439 = vmatpush1.msra.mxu0 0.0
      %5440 = vmatprep.subr.mxu0 0.0
      %5441 = vmatpush1.msra.mxu0 0.0
      %5442 = vmatprep.subr.mxu0 0.0
      %5443 = vmatpush1.msra.mxu0 0.0
      %5444 = vmatprep.subr.mxu0 0.0
      %5445 = vmatpush1.msra.mxu0 0.0
      %5446 = vmatprep.subr.mxu0 0.0
      %5447 = vmatpush1.msra.mxu0 0.0
      %5448 = vmatprep.subr.mxu0 0.0
      %5449 = vmatpush1.msra.mxu0 0.0
      %5450 = vmatprep.subr.mxu0 0.0
      %5451 = vmatpush1.msra.mxu0 0.0
      %5452 = vmatprep.subr.mxu0 0.0
      %5453 = vmatpush1.msra.mxu0 0.0
      %5454 = vmatprep.subr.mxu0 0.0
      %5455 = vmatpush1.msra.mxu0 0.0
      %5456 = vmatprep.subr.mxu0 0.0
      %5457 = vmatpush1.msra.mxu0 0.0
      %5458 = vmatprep.subr.mxu0 0.0
      %5459 = vmatpush1.msra.mxu0 0.0
      %5460 = vmatprep.subr.mxu0 0.0
      %5461 = vmatpush1.msra.mxu0 0.0
      %5462 = vmatprep.subr.mxu0 0.0
      %5463 = vmatpush1.msra.mxu0 0.0
      %5464 = vmatprep.subr.mxu0 0.0
      %5465 = vmatpush1.msra.mxu0 0.0
      %5466 = vmatprep.subr.mxu0 0.0
      %5467 = vmatpush1.msra.mxu0 0.0
      %5468 = vmatprep.subr.mxu0 0.0
      %5469 = vmatpush1.msra.mxu0 0.0
      %5470 = vmatprep.subr.mxu0 0.0
      %5471 = vmatpush1.msra.mxu0 0.0
      %5472 = vmatprep.subr.mxu0 0.0
      %5473 = vmatpush1.msra.mxu0 0.0
      %5474 = vmatprep.subr.mxu0 0.0
      %5475 = vmatpush1.msra.mxu0 0.0
      %5476 = vmatprep.mubr.f32.mxu0 0.0
      %5477 = vmatmul.mubr.f32.gmra.mrb[0].mxu0 %v5407
      %v5478 = vpop.f32.mrb[0].mxu0
      %v5479 = vadd.f32 0.0, %v5478
      %v5480 = vpop.f32.mrb[0].mxu0
      %5481 = vmatprep.mubr.f32.mxu0 0.0
      %5482 = vmatmul.mubr.f32.gmra.mrb[0].mxu0 %v5410
      %v5483 = vpop.f32.mrb[0].mxu0
      %v5484 = vadd.f32 0.0, %v5483
      %v5485 = vpop.f32.mrb[0].mxu0
      %5486 = vdwg.mxu0
      %v5488 = vsel %vm2130, %v5385, 0
      %v5491 = vsel %vm2130, %v5386, 0
      %5493 = vmatprep.subr.mxu0 0.0
      %5494 = vmatpush1.msra.mxu0 %v5381
      %5495 = vmatprep.subr.mxu0 0.0
      %5496 = vmatpush1.msra.mxu0 %v5382
      %5497 = vmatprep.subr.mxu0 0.0
      %5498 = vmatpush1.msra.mxu0 %v5383
      %5499 = vmatprep.subr.mxu0 0.0
      %5500 = vmatpush1.msra.mxu0 %v5384
      %5501 = vmatprep.subr.mxu0 0.0
      %5502 = vmatpush1.msra.mxu0 0.0
      %5503 = vmatprep.subr.mxu0 0.0
      %5504 = vmatpush1.msra.mxu0 0.0
      %5505 = vmatprep.subr.mxu0 0.0
      %5506 = vmatpush1.msra.mxu0 0.0
      %5507 = vmatprep.subr.mxu0 0.0
      %5508 = vmatpush1.msra.mxu0 0.0
      %5509 = vmatprep.subr.mxu0 0.0
      %5510 = vmatpush1.msra.mxu0 0.0
      %5511 = vmatprep.subr.mxu0 0.0
      %5512 = vmatpush1.msra.mxu0 0.0
      %5513 = vmatprep.subr.mxu0 0.0
      %5514 = vmatpush1.msra.mxu0 0.0
      %5515 = vmatprep.subr.mxu0 0.0
      %5516 = vmatpush1.msra.mxu0 0.0
      %5517 = vmatprep.subr.mxu0 0.0
      %5518 = vmatpush1.msra.mxu0 0.0
      %5519 = vmatprep.subr.mxu0 0.0
      %5520 = vmatpush1.msra.mxu0 0.0
      %5521 = vmatprep.subr.mxu0 0.0
      %5522 = vmatpush1.msra.mxu0 0.0
      %5523 = vmatprep.subr.mxu0 0.0
      %5524 = vmatpush1.msra.mxu0 0.0
      %5525 = vmatprep.subr.mxu0 0.0
      %5526 = vmatpush1.msra.mxu0 0.0
      %5527 = vmatprep.subr.mxu0 0.0
      %5528 = vmatpush1.msra.mxu0 0.0
      %5529 = vmatprep.subr.mxu0 0.0
      %5530 = vmatpush1.msra.mxu0 0.0
      %5531 = vmatprep.subr.mxu0 0.0
      %5532 = vmatpush1.msra.mxu0 0.0
      %5533 = vmatprep.subr.mxu0 0.0
      %5534 = vmatpush1.msra.mxu0 0.0
      %5535 = vmatprep.subr.mxu0 0.0
      %5536 = vmatpush1.msra.mxu0 0.0
      %5537 = vmatprep.subr.mxu0 0.0
      %5538 = vmatpush1.msra.mxu0 0.0
      %5539 = vmatprep.subr.mxu0 0.0
      %5540 = vmatpush1.msra.mxu0 0.0
      %5541 = vmatprep.subr.mxu0 0.0
      %5542 = vmatpush1.msra.mxu0 0.0
      %5543 = vmatprep.subr.mxu0 0.0
      %5544 = vmatpush1.msra.mxu0 0.0
      %5545 = vmatprep.subr.mxu0 0.0
      %5546 = vmatpush1.msra.mxu0 0.0
      %5547 = vmatprep.subr.mxu0 0.0
      %5548 = vmatpush1.msra.mxu0 0.0
      %5549 = vmatprep.subr.mxu0 0.0
      %5550 = vmatpush1.msra.mxu0 0.0
      %5551 = vmatprep.subr.mxu0 0.0
      %5552 = vmatpush1.msra.mxu0 0.0
      %5553 = vmatprep.subr.mxu0 0.0
      %5554 = vmatpush1.msra.mxu0 0.0
      %5555 = vmatprep.subr.mxu0 0.0
      %5556 = vmatpush1.msra.mxu0 0.0
      %5557 = vmatprep.mubr.f32.mxu0 0.0
      %5558 = vmatmul.mubr.f32.gmra.mrb[0].mxu0 %v5488
      %v5559 = vpop.f32.mrb[0].mxu0
      %v5560 = vadd.f32 %v5479, %v5559
      %v5561 = vpop.f32.mrb[0].mxu0
      %5562 = vmatprep.mubr.f32.mxu0 0.0
      %5563 = vmatmul.mubr.f32.gmra.mrb[0].mxu0 %v5491
      %v5564 = vpop.f32.mrb[0].mxu0
      %v5565 = vadd.f32 %v5484, %v5564
      %v5566 = vpop.f32.mrb[0].mxu0
      %5567 = vdwg.mxu0
      %s5568 = scalar_lea.vmem %s9, 32
      %v5569 = vld [vmem:[%s5568] sm:$0xff]
      %v5570 = vld [vmem:[%s5568 + $0x8] sm:$0xff]
      %5571 = vrot.lane.b32.xlu0 %v5381, 126
      %v5572 = vpop.permute.xlu0 %5571
      %5573 = vrot.lane.b32.xlu0 %v5382, 126
      %v5574 = vpop.permute.xlu0 %5573
      %5575 = vrot.lane.b32.xlu0 %v5383, 126
      %v5576 = vpop.permute.xlu0 %5575
      %5577 = vrot.lane.b32.xlu0 %v5384, 126
      %v5578 = vpop.permute.xlu0 %5577
      %v5584 = vsel %vm2130, %v5569, 0
      %v5587 = vsel %vm2130, %v5570, 0
      %5589 = vmatprep.subr.mxu0 0.0
      %5590 = vmatpush1.msra.mxu0 %v5572
      %5591 = vmatprep.subr.mxu0 0.0
      %5592 = vmatpush1.msra.mxu0 %v5574
      %5593 = vmatprep.subr.mxu0 0.0
      %5594 = vmatpush1.msra.mxu0 %v5576
      %5595 = vmatprep.subr.mxu0 0.0
      %5596 = vmatpush1.msra.mxu0 %v5578
      %5597 = vmatprep.subr.mxu0 0.0
      %5598 = vmatpush1.msra.mxu0 0.0
      %5599 = vmatprep.subr.mxu0 0.0
      %5600 = vmatpush1.msra.mxu0 0.0
      %5601 = vmatprep.subr.mxu0 0.0
      %5602 = vmatpush1.msra.mxu0 0.0
      %5603 = vmatprep.subr.mxu0 0.0
      %5604 = vmatpush1.msra.mxu0 0.0
      %5605 = vmatprep.subr.mxu0 0.0
      %5606 = vmatpush1.msra.mxu0 0.0
      %5607 = vmatprep.subr.mxu0 0.0
      %5608 = vmatpush1.msra.mxu0 0.0
      %5609 = vmatprep.subr.mxu0 0.0
      %5610 = vmatpush1.msra.mxu0 0.0
      %5611 = vmatprep.subr.mxu0 0.0
      %5612 = vmatpush1.msra.mxu0 0.0
      %5613 = vmatprep.subr.mxu0 0.0
      %5614 = vmatpush1.msra.mxu0 0.0
      %5615 = vmatprep.subr.mxu0 0.0
      %5616 = vmatpush1.msra.mxu0 0.0
      %5617 = vmatprep.subr.mxu0 0.0
      %5618 = vmatpush1.msra.mxu0 0.0
      %5619 = vmatprep.subr.mxu0 0.0
      %5620 = vmatpush1.msra.mxu0 0.0
      %5621 = vmatprep.subr.mxu0 0.0
      %5622 = vmatpush1.msra.mxu0 0.0
      %5623 = vmatprep.subr.mxu0 0.0
      %5624 = vmatpush1.msra.mxu0 0.0
      %5625 = vmatprep.subr.mxu0 0.0
      %5626 = vmatpush1.msra.mxu0 0.0
      %5627 = vmatprep.subr.mxu0 0.0
      %5628 = vmatpush1.msra.mxu0 0.0
      %5629 = vmatprep.subr.mxu0 0.0
      %5630 = vmatpush1.msra.mxu0 0.0
      %5631 = vmatprep.subr.mxu0 0.0
      %5632 = vmatpush1.msra.mxu0 0.0
      %5633 = vmatprep.subr.mxu0 0.0
      %5634 = vmatpush1.msra.mxu0 0.0
      %5635 = vmatprep.subr.mxu0 0.0
      %5636 = vmatpush1.msra.mxu0 0.0
      %5637 = vmatprep.subr.mxu0 0.0
      %5638 = vmatpush1.msra.mxu0 0.0
      %5639 = vmatprep.subr.mxu0 0.0
      %5640 = vmatpush1.msra.mxu0 0.0
      %5641 = vmatprep.subr.mxu0 0.0
      %5642 = vmatpush1.msra.mxu0 0.0
      %5643 = vmatprep.subr.mxu0 0.0
      %5644 = vmatpush1.msra.mxu0 0.0
      %5645 = vmatprep.subr.mxu0 0.0
      %5646 = vmatpush1.msra.mxu0 0.0
      %5647 = vmatprep.subr.mxu0 0.0
      %5648 = vmatpush1.msra.mxu0 0.0
      %5649 = vmatprep.subr.mxu0 0.0
      %5650 = vmatpush1.msra.mxu0 0.0
      %5651 = vmatprep.subr.mxu0 0.0
      %5652 = vmatpush1.msra.mxu0 0.0
      %5653 = vmatprep.mubr.f32.mxu0 0.0
      %5654 = vmatmul.mubr.f32.gmra.mrb[0].mxu0 %v5584
      %v5655 = vpop.f32.mrb[0].mxu0
      %v5656 = vadd.f32 0.0, %v5655
      %v5657 = vpop.f32.mrb[0].mxu0
      %5658 = vmatprep.mubr.f32.mxu0 0.0
      %5659 = vmatmul.mubr.f32.gmra.mrb[0].mxu0 %v5587
      %v5660 = vpop.f32.mrb[0].mxu0
      %v5661 = vadd.f32 0.0, %v5660
      %v5662 = vpop.f32.mrb[0].mxu0
      %5663 = vdwg.mxu0
      %v5664 = vadd.f32 %v5560, %v5656
      %v5665 = vadd.f32 %v5565, %v5661
      %s5666 = scalar_lea.vmem %s9, 48
      %v5667 = vld [vmem:[%s5666] sm:$0xff]
      %v5668 = vld [vmem:[%s5666 + $0x8] sm:$0xff]
      %5669 = vrot.lane.b32.xlu0 %v5381, 125
      %v5670 = vpop.permute.xlu0 %5669
      %5671 = vrot.lane.b32.xlu0 %v5382, 125
      %v5672 = vpop.permute.xlu0 %5671
      %5673 = vrot.lane.b32.xlu0 %v5383, 125
      %v5674 = vpop.permute.xlu0 %5673
      %5675 = vrot.lane.b32.xlu0 %v5384, 125
      %v5676 = vpop.permute.xlu0 %5675
      %v5682 = vsel %vm2130, %v5667, 0
      %v5685 = vsel %vm2130, %v5668, 0
      %5687 = vmatprep.subr.mxu0 0.0
      %5688 = vmatpush1.msra.mxu0 %v5670
      %5689 = vmatprep.subr.mxu0 0.0
      %5690 = vmatpush1.msra.mxu0 %v5672
      %5691 = vmatprep.subr.mxu0 0.0
      %5692 = vmatpush1.msra.mxu0 %v5674
      %5693 = vmatprep.subr.mxu0 0.0
      %5694 = vmatpush1.msra.mxu0 %v5676
      %5695 = vmatprep.subr.mxu0 0.0
      %5696 = vmatpush1.msra.mxu0 0.0
      %5697 = vmatprep.subr.mxu0 0.0
      %5698 = vmatpush1.msra.mxu0 0.0
      %5699 = vmatprep.subr.mxu0 0.0
      %5700 = vmatpush1.msra.mxu0 0.0
      %5701 = vmatprep.subr.mxu0 0.0
      %5702 = vmatpush1.msra.mxu0 0.0
      %5703 = vmatprep.subr.mxu0 0.0
      %5704 = vmatpush1.msra.mxu0 0.0
      %5705 = vmatprep.subr.mxu0 0.0
      %5706 = vmatpush1.msra.mxu0 0.0
      %5707 = vmatprep.subr.mxu0 0.0
      %5708 = vmatpush1.msra.mxu0 0.0
      %5709 = vmatprep.subr.mxu0 0.0
      %5710 = vmatpush1.msra.mxu0 0.0
      %5711 = vmatprep.subr.mxu0 0.0
      %5712 = vmatpush1.msra.mxu0 0.0
      %5713 = vmatprep.subr.mxu0 0.0
      %5714 = vmatpush1.msra.mxu0 0.0
      %5715 = vmatprep.subr.mxu0 0.0
      %5716 = vmatpush1.msra.mxu0 0.0
      %5717 = vmatprep.subr.mxu0 0.0
      %5718 = vmatpush1.msra.mxu0 0.0
      %5719 = vmatprep.subr.mxu0 0.0
      %5720 = vmatpush1.msra.mxu0 0.0
      %5721 = vmatprep.subr.mxu0 0.0
      %5722 = vmatpush1.msra.mxu0 0.0
      %5723 = vmatprep.subr.mxu0 0.0
      %5724 = vmatpush1.msra.mxu0 0.0
      %5725 = vmatprep.subr.mxu0 0.0
      %5726 = vmatpush1.msra.mxu0 0.0
      %5727 = vmatprep.subr.mxu0 0.0
      %5728 = vmatpush1.msra.mxu0 0.0
      %5729 = vmatprep.subr.mxu0 0.0
      %5730 = vmatpush1.msra.mxu0 0.0
      %5731 = vmatprep.subr.mxu0 0.0
      %5732 = vmatpush1.msra.mxu0 0.0
      %5733 = vmatprep.subr.mxu0 0.0
      %5734 = vmatpush1.msra.mxu0 0.0
      %5735 = vmatprep.subr.mxu0 0.0
      %5736 = vmatpush1.msra.mxu0 0.0
      %5737 = vmatprep.subr.mxu0 0.0
      %5738 = vmatpush1.msra.mxu0 0.0
      %5739 = vmatprep.subr.mxu0 0.0
      %5740 = vmatpush1.msra.mxu0 0.0
      %5741 = vmatprep.subr.mxu0 0.0
      %5742 = vmatpush1.msra.mxu0 0.0
      %5743 = vmatprep.subr.mxu0 0.0
      %5744 = vmatpush1.msra.mxu0 0.0
      %5745 = vmatprep.subr.mxu0 0.0
      %5746 = vmatpush1.msra.mxu0 0.0
      %5747 = vmatprep.subr.mxu0 0.0
      %5748 = vmatpush1.msra.mxu0 0.0
      %5749 = vmatprep.subr.mxu0 0.0
      %5750 = vmatpush1.msra.mxu0 0.0
      %5751 = vmatprep.mubr.f32.mxu0 0.0
      %5752 = vmatmul.mubr.f32.gmra.mrb[0].mxu0 %v5682
      %v5753 = vpop.f32.mrb[0].mxu0
      %v5754 = vadd.f32 0.0, %v5753
      %v5755 = vpop.f32.mrb[0].mxu0
      %5756 = vmatprep.mubr.f32.mxu0 0.0
      %5757 = vmatmul.mubr.f32.gmra.mrb[0].mxu0 %v5685
      %v5758 = vpop.f32.mrb[0].mxu0
      %v5759 = vadd.f32 0.0, %v5758
      %v5760 = vpop.f32.mrb[0].mxu0
      %5761 = vdwg.mxu0
      %v5762 = vadd.f32 %v5664, %v5754
      %v5763 = vadd.f32 %v5665, %v5759
      %v5764 = vld [vmem:[%s10] sm:$0xff]
      %v5765 = vld [vmem:[%s10 + $0x8] sm:$0xff]
      %v5766 = vadd.f32 %v5762, %v5764
      %v5767 = vadd.f32 %v5763, %v5765
      %v5768 = vmul.f32 %v5766, 0.5
      %v5769 = vmul.f32 %v5767, 0.5
      %v5770 = vmul.f32 %v5766, 0.044715
      %v5771 = vmul.f32 %v5767, 0.044715
      %v5772 = vmul.f32 %v5770, %v5766
      %v5773 = vmul.f32 %v5771, %v5767
      %v5774 = vmul.f32 %v5772, %v5766
      %v5775 = vmul.f32 %v5773, %v5767
      %v5776 = vadd.f32 %v5766, %v5774
      %v5777 = vadd.f32 %v5767, %v5775
      %v5778 = vmul.f32 %v5776, 0.7978846
      %v5779 = vmul.f32 %v5777, 0.7978846
      %v5780 = vtanh.pop %v5778
      %v5781 = vtanh.pop %v5779
      %v5782 = vadd.f32 %v5780, 1.0
      %v5783 = vadd.f32 %v5781, 1.0
      %v5784 = vmul.f32 %v5768, %v5782
      %v5785 = vmul.f32 %v5769, %v5783
      %v5786 = vld [vmem:[%s11] sm:$0xff]
      %v5787 = vld [vmem:[%s11 + $0x8] sm:$0xff]
      %v5788 = vld [vmem:[%s12] sm:$0xff]
      %v5789 = vld [vmem:[%s12 + $0x8] sm:$0xff]
      %vm5790 = vcmask 130048
      %v5792 = vsel %vm5790, %v5786, 0
      %v5795 = vsel %vm5790, %v5787, 0
      %5797 = vmatprep.subr.mxu0 0.0
      %5798 = vmatpush1.msra.mxu0 %v5784
      %5799 = vmatprep.subr.mxu0 0.0
      %5800 = vmatpush1.msra.mxu0 %v5785
      %5801 = vmatprep.subr.mxu0 0.0
      %5802 = vmatpush1.msra.mxu0 0.0
      %5803 = vmatprep.subr.mxu0 0.0
      %5804 = vmatpush1.msra.mxu0 0.0
      %5805 = vmatprep.subr.mxu0 0.0
      %5806 = vmatpush1.msra.mxu0 0.0
      %5807 = vmatprep.subr.mxu0 0.0
      %5808 = vmatpush1.msra.mxu0 0.0
      %5809 = vmatprep.subr.mxu0 0.0
      %5810 = vmatpush1.msra.mxu0 0.0
      %5811 = vmatprep.subr.mxu0 0.0
      %5812 = vmatpush1.msra.mxu0 0.0
      %5813 = vmatprep.subr.mxu0 0.0
      %5814 = vmatpush1.msra.mxu0 0.0
      %5815 = vmatprep.subr.mxu0 0.0
      %5816 = vmatpush1.msra.mxu0 0.0
      %5817 = vmatprep.subr.mxu0 0.0
      %5818 = vmatpush1.msra.mxu0 0.0
      %5819 = vmatprep.subr.mxu0 0.0
      %5820 = vmatpush1.msra.mxu0 0.0
      %5821 = vmatprep.subr.mxu0 0.0
      %5822 = vmatpush1.msra.mxu0 0.0
      %5823 = vmatprep.subr.mxu0 0.0
      %5824 = vmatpush1.msra.mxu0 0.0
      %5825 = vmatprep.subr.mxu0 0.0
      %5826 = vmatpush1.msra.mxu0 0.0
      %5827 = vmatprep.subr.mxu0 0.0
      %5828 = vmatpush1.msra.mxu0 0.0
      %5829 = vmatprep.subr.mxu0 0.0
      %5830 = vmatpush1.msra.mxu0 0.0
      %5831 = vmatprep.subr.mxu0 0.0
      %5832 = vmatpush1.msra.mxu0 0.0
      %5833 = vmatprep.subr.mxu0 0.0
      %5834 = vmatpush1.msra.mxu0 0.0
      %5835 = vmatprep.subr.mxu0 0.0
      %5836 = vmatpush1.msra.mxu0 0.0
      %5837 = vmatprep.subr.mxu0 0.0
      %5838 = vmatpush1.msra.mxu0 0.0
      %5839 = vmatprep.subr.mxu0 0.0
      %5840 = vmatpush1.msra.mxu0 0.0
      %5841 = vmatprep.subr.mxu0 0.0
      %5842 = vmatpush1.msra.mxu0 0.0
      %5843 = vmatprep.subr.mxu0 0.0
      %5844 = vmatpush1.msra.mxu0 0.0
      %5845 = vmatprep.subr.mxu0 0.0
      %5846 = vmatpush1.msra.mxu0 0.0
      %5847 = vmatprep.subr.mxu0 0.0
      %5848 = vmatpush1.msra.mxu0 0.0
      %5849 = vmatprep.subr.mxu0 0.0
      %5850 = vmatpush1.msra.mxu0 0.0
      %5851 = vmatprep.subr.mxu0 0.0
      %5852 = vmatpush1.msra.mxu0 0.0
      %5853 = vmatprep.subr.mxu0 0.0
      %5854 = vmatpush1.msra.mxu0 0.0
      %5855 = vmatprep.subr.mxu0 0.0
      %5856 = vmatpush1.msra.mxu0 0.0
      %5857 = vmatprep.subr.mxu0 0.0
      %5858 = vmatpush1.msra.mxu0 0.0
      %5859 = vmatprep.subr.mxu0 0.0
      %5860 = vmatpush1.msra.mxu0 0.0
      %5861 = vmatprep.mubr.f32.mxu0 0.0
      %5862 = vmatmul.mubr.f32.gmra.mrb[0].mxu0 %v5792
      %v5863 = vpop.f32.mrb[0].mxu0
      %v5864 = vadd.f32 %v5788, %v5863
      %v5865 = vpop.f32.mrb[0].mxu0
      %5866 = vmatprep.mubr.f32.mxu0 0.0
      %5867 = vmatmul.mubr.f32.gmra.mrb[0].mxu0 %v5795
      %v5868 = vpop.f32.mrb[0].mxu0
      %v5869 = vadd.f32 %v5789, %v5868
      %v5870 = vpop.f32.mrb[0].mxu0
      %5871 = vdwg.mxu0
      %v5872 = vmul.f32 %v5864, 0.5
      %v5873 = vmul.f32 %v5869, 0.5
      %v5874 = vmul.f32 %v5864, 0.044715
      %v5875 = vmul.f32 %v5869, 0.044715
      %v5876 = vmul.f32 %v5874, %v5864
      %v5877 = vmul.f32 %v5875, %v5869
      %v5878 = vmul.f32 %v5876, %v5864
      %v5879 = vmul.f32 %v5877, %v5869
      %v5880 = vadd.f32 %v5864, %v5878
      %v5881 = vadd.f32 %v5869, %v5879
      %v5882 = vmul.f32 %v5880, 0.7978846
      %v5883 = vmul.f32 %v5881, 0.7978846
      %v5884 = vtanh.pop %v5882
      %v5885 = vtanh.pop %v5883
      %v5886 = vadd.f32 %v5884, 1.0
      %v5887 = vadd.f32 %v5885, 1.0
      %v5888 = vmul.f32 %v5872, %v5886
      %v5889 = vmul.f32 %v5873, %v5887
      %v5890 = vadd.f32 %v5784, %v5888
      %v5891 = vadd.f32 %v5785, %v5889
      %v5892 = vld [vmem:[%s13] sm:$0x3]
      %v5893 = vld [vmem:[%s14] sm:$0x3]
      %v5895 = vsel %vm5790, %v5892, 0
      %5897 = vmatprep.subr.mxu0 0.0
      %5898 = vmatpush1.msra.mxu0 %v5890
      %5899 = vmatprep.subr.mxu0 0.0
      %5900 = vmatpush1.msra.mxu0 %v5891
      %5901 = vmatprep.subr.mxu0 0.0
      %5902 = vmatpush1.msra.mxu0 0.0
      %5903 = vmatprep.subr.mxu0 0.0
      %5904 = vmatpush1.msra.mxu0 0.0
      %5905 = vmatprep.subr.mxu0 0.0
      %5906 = vmatpush1.msra.mxu0 0.0
      %5907 = vmatprep.subr.mxu0 0.0
      %5908 = vmatpush1.msra.mxu0 0.0
      %5909 = vmatprep.subr.mxu0 0.0
      %5910 = vmatpush1.msra.mxu0 0.0
      %5911 = vmatprep.subr.mxu0 0.0
      %5912 = vmatpush1.msra.mxu0 0.0
      %5913 = vmatprep.subr.mxu0 0.0
      %5914 = vmatpush1.msra.mxu0 0.0
      %5915 = vmatprep.subr.mxu0 0.0
      %5916 = vmatpush1.msra.mxu0 0.0
      %5917 = vmatprep.subr.mxu0 0.0
      %5918 = vmatpush1.msra.mxu0 0.0
      %5919 = vmatprep.subr.mxu0 0.0
      %5920 = vmatpush1.msra.mxu0 0.0
      %5921 = vmatprep.subr.mxu0 0.0
      %5922 = vmatpush1.msra.mxu0 0.0
      %5923 = vmatprep.subr.mxu0 0.0
      %5924 = vmatpush1.msra.mxu0 0.0
      %5925 = vmatprep.subr.mxu0 0.0
      %5926 = vmatpush1.msra.mxu0 0.0
      %5927 = vmatprep.subr.mxu0 0.0
      %5928 = vmatpush1.msra.mxu0 0.0
      %5929 = vmatprep.subr.mxu0 0.0
      %5930 = vmatpush1.msra.mxu0 0.0
      %5931 = vmatprep.subr.mxu0 0.0
      %5932 = vmatpush1.msra.mxu0 0.0
      %5933 = vmatprep.subr.mxu0 0.0
      %5934 = vmatpush1.msra.mxu0 0.0
      %5935 = vmatprep.subr.mxu0 0.0
      %5936 = vmatpush1.msra.mxu0 0.0
      %5937 = vmatprep.subr.mxu0 0.0
      %5938 = vmatpush1.msra.mxu0 0.0
      %5939 = vmatprep.subr.mxu0 0.0
      %5940 = vmatpush1.msra.mxu0 0.0
      %5941 = vmatprep.subr.mxu0 0.0
      %5942 = vmatpush1.msra.mxu0 0.0
      %5943 = vmatprep.subr.mxu0 0.0
      %5944 = vmatpush1.msra.mxu0 0.0
      %5945 = vmatprep.subr.mxu0 0.0
      %5946 = vmatpush1.msra.mxu0 0.0
      %5947 = vmatprep.subr.mxu0 0.0
      %5948 = vmatpush1.msra.mxu0 0.0
      %5949 = vmatprep.subr.mxu0 0.0
      %5950 = vmatpush1.msra.mxu0 0.0
      %5951 = vmatprep.subr.mxu0 0.0
      %5952 = vmatpush1.msra.mxu0 0.0
      %5953 = vmatprep.subr.mxu0 0.0
      %5954 = vmatpush1.msra.mxu0 0.0
      %5955 = vmatprep.subr.mxu0 0.0
      %5956 = vmatpush1.msra.mxu0 0.0
      %5957 = vmatprep.subr.mxu0 0.0
      %5958 = vmatpush1.msra.mxu0 0.0
      %5959 = vmatprep.subr.mxu0 0.0
      %5960 = vmatpush1.msra.mxu0 0.0
      %5961 = vmatprep.mubr.f32.mxu0 0.0
      %5962 = vmatmul.mubr.f32.gmra.mrb[0].mxu0 %v5895
      %v5963 = vpop.f32.mrb[0].mxu0
      %v5964 = vadd.f32 %v5893, %v5963
      %v5965 = vpop.f32.mrb[0].mxu0
      %5966 = vdwg.mxu0
      %v5967 = vtanh.pop %v5964
      %vm5968 = vcmask 1024
      %5969 = vst.msk [vmem:[%s492] sm:$0x3] %vm5968, %v5967
      %p5970 = scmp.lt.s32.totalorder %s26, 1
      %s5971 = scalar_select %p5970, %s26, 1
      %s5972 = smul.addr %s5971, 2
      %s5973 = scalar_lea.vmem %s15, %s5972
      // Predicated region
      $region81: #{tinycnn_forward.1} parent=79 // pred_check
        %p5974 = pneg %p364
      $region82: #{tinycnn_forward.1} parent=79 // pred_check_branch
        %5976 = sbr.rel (%p5974) target = $region84
      $region83: #{tinycnn_forward.1} parent=79 // pred_region
        _
      $region84: #{tinycnn_forward.1} parent=79 // pred_fallthru
        _
    $region80: #{tinycnn_forward.1} parent=5 // pred_fallthru
      _
    %p5977 = scmp.le.s32.totalorder 2, %s21
    // Predicated region
    $region85: #{tinycnn_forward.1} parent=5 // pred_check
      %p5978 = pneg %p5977
    $region86: #{tinycnn_forward.1} parent=5 // pred_check_branch
      %5980 = sbr.rel (%p5978) target = $region88
    $region87: #{tinycnn_forward.1} parent=5 // pred_region
      %s5981 = ssub.s32 %s21, 2
      // Predicated region
      $region89: #{tinycnn_forward.1} parent=87 // pred_check
        %p5982 = pneg %p370
      $region90: #{tinycnn_forward.1} parent=87 // pred_check_branch
        %5984 = sbr.rel (%p5982) target = $region92
      $region91: #{tinycnn_forward.1} parent=87 // pred_region
        %p5985 = scmp.lt.s32.totalorder %s27, 1
        %s5986 = scalar_select %p5985, %s27, 1
        %s5987 = smul.addr %s5986, 2
        %s5988 = scalar_lea.vmem %s15, %s5987
      $region92: #{tinycnn_forward.1} parent=87 // pred_fallthru
        _
    $region88: #{tinycnn_forward.1} parent=5 // pred_fallthru
      _
  $region6: #{tinycnn_forward.1} parent=0 // loop_footer
    %s25 = sadd.s32 1, %s21
  $region7: #{tinycnn_forward.1} parent=0 // loop_footer_branch
    %20 = sbr.rel target = $region3
  $region8: #{tinycnn_forward.1} parent=0 // loop_exit
    _

</llo_original>
